<compile_context>
chip_gen: v6e
topology: v6e:2x2x1
jax: 0.10.0
libtpu: 0.0.40
codegen_flags: <defaults>
</compile_context>

<pallas_src>
import jax
import jax.numpy as jnp
import numpy as np
from jax.experimental import pallas as pl
from jax.experimental.pallas import tpu as pltpu


def _gelu_exact(v):
    # PyTorch nn.GELU() is the exact erf-GELU. Mosaic has no erf primitive, so use
    # Abramowitz-Stegun 7.1.26 (|err| < 1.5e-7, i.e. f32-exact) built from exp/mul/add.
    z = v * np.float32(0.7071067811865476)
    az = jnp.abs(z)
    t = 1.0 / (1.0 + np.float32(0.3275911) * az)
    poly = ((((np.float32(1.061405429) * t + np.float32(-1.453152027)) * t
              + np.float32(1.421413741)) * t + np.float32(-0.284496736)) * t
            + np.float32(0.254829592)) * t
    erf_abs = 1.0 - poly * jnp.exp(-az * az)
    erf = jnp.where(z < 0, -erf_abs, erf_abs)
    return 0.5 * v * (1.0 + erf)


def drfd_kernel(xpp_ref, onehot_ref, w1_ref, b1_ref, wx_ref, bx_ref,
                wcf_ref, wxf_ref, wmf_ref, ball_ref,
                o_ref, rep_ref, hp_ref):
    Hp, Wp, Cin = xpp_ref.shape           # H+4, round_up(W+4, 8), Cin
    H2, W2, Cout = hp_ref.shape           # H+2, W+2, Cout
    Ho, Wo = (H2 - 2) // 2, (W2 - 2) // 2

    # ---- 1) channel replication for the grouped conv (one small MXU matmul) ----
    # rep[..., co] = xpp[..., co // ratio].  Wp is a multiple of 8, so both reshapes
    # are layout-preserving (no sublane repack).
    rep = jnp.dot(xpp_ref[...].reshape(Hp * Wp, Cin), onehot_ref[...],
                  preferred_element_type=jnp.float32)
    rep_ref[...] = rep.reshape(Hp, Wp, Cout)

    # ---- 2) grouped 3x3 conv (stride 1, pad 1) --------------------------------
    # Evaluated directly over the *padded* output domain (H+2, W+2) with 9
    # contiguous-tap VPU MACs; the 1-px border is zeroed with an iota-generated
    # mask -> a single fully aligned store of the zero-padded conv output (no
    # misaligned interior stores, no full-buffer zero fills, no mask DMA).
    acc = jnp.zeros((H2, W2, Cout), jnp.float32)
    for kh in range(3):
        for kw in range(3):
            k = kh * 3 + kw
            acc = acc + rep_ref[kh:kh + H2, kw:kw + W2, :] * w1_ref[k:k + 1, :]
    row = jax.lax.broadcasted_iota(jnp.int32, (H2, W2, 1), 0)
    col = jax.lax.broadcasted_iota(jnp.int32, (H2, W2, 1), 1)
    interior = (row > 0) & (row < H2 - 1) & (col > 0) & (col < W2 - 1)
    hp_ref[...] = jnp.where(interior, acc + b1_ref[...], 0.0)

    # ---- 3) deinterleave the padded conv output into even/odd planes ----------
    # 4 stride-2 reads total; every depthwise tap / maxpool operand below is a
    # contiguous slice of these planes.
    pee = hp_ref[pl.ds(0, Ho + 1, stride=2), pl.ds(0, Wo + 1, stride=2), :]
    poe = hp_ref[pl.ds(1, Ho + 1, stride=2), pl.ds(0, Wo + 1, stride=2), :]
    peo = hp_ref[pl.ds(0, Ho + 1, stride=2), pl.ds(1, Wo + 1, stride=2), :]
    poo = hp_ref[pl.ds(1, Ho + 1, stride=2), pl.ds(1, Wo + 1, stride=2), :]
    planes = ((pee, peo), (poe, poo))     # [row parity][col parity]

    # ---- 4) branch x: depthwise 3x3 conv, stride 2, pad 1 -> GELU -------------
    # tap (kh, kw) == planes[kh%2][kw%2][kh//2 : kh//2+Ho, kw//2 : kw//2+Wo]
    dacc = jnp.zeros((Ho, Wo, Cout), jnp.float32)
    for kh in range(3):
        for kw in range(3):
            k = kh * 3 + kw
            tap = planes[kh % 2][kw % 2][kh // 2:kh // 2 + Ho,
                                         kw // 2:kw // 2 + Wo, :]
            dacc = dacc + tap * wx_ref[k:k + 1, :]
    xg = _gelu_exact(dacc + bx_ref[...])

    # ---- 5) branch m: 2x2 / stride-2 max-pool ----------------------------------
    mb = jnp.maximum(jnp.maximum(poo[0:Ho, 0:Wo, :], peo[1:Ho + 1, 0:Wo, :]),
                     jnp.maximum(poe[0:Ho, 1:Wo + 1, :], pee[1:Ho + 1, 1:Wo + 1, :]))

    # ---- 6) branch c (Cut): space-to-depth of the original input ---------------
    # x[i, j] = xpp[i + 2, j + 2] (input was pre-padded in the wrapper, so these are
    # plain stride-2 reads; no padded-scratch writes are involved).
    c00 = xpp_ref[pl.ds(2, Ho, stride=2), pl.ds(2, Wo, stride=2), :]  # x[0::2, 0::2]
    c10 = xpp_ref[pl.ds(3, Ho, stride=2), pl.ds(2, Wo, stride=2), :]  # x[1::2, 0::2]
    c01 = xpp_ref[pl.ds(2, Ho, stride=2), pl.ds(3, Wo, stride=2), :]  # x[0::2, 1::2]
    c11 = xpp_ref[pl.ds(3, Ho, stride=2), pl.ds(3, Wo, stride=2), :]  # x[1::2, 1::2]
    s2d = jnp.concatenate([c00, c10, c01, c11], axis=-1)             # (Ho, Wo, 4*Cin)

    # ---- 7) fused epilogue ------------------------------------------------------
    # Cut 1x1 conv, the three BatchNorms and the fusion 1x1 conv are folded
    # (wrapper-side) into three matmuls + one bias; output channels are padded to a
    # multiple of 128 so the store is lane-dense.
    out = (jnp.dot(s2d.reshape(Ho * Wo, 4 * Cin), wcf_ref[...],
                   preferred_element_type=jnp.float32)
           + jnp.dot(xg.reshape(Ho * Wo, Cout), wxf_ref[...],
                     preferred_element_type=jnp.float32)
           + jnp.dot(mb.reshape(Ho * Wo, Cout), wmf_ref[...],
                     preferred_element_type=jnp.float32)
           + ball_ref[...])
    o_ref[...] = out.astype(o_ref.dtype)


def drfd_forward(x_nchw, params):
    """Pallas DRFD forward. x_nchw: (N, Cin, H, W) -> (N, Cout, H//2, W//2)."""
    N, Cin, H, W = x_nchw.shape
    Cout = params['b_conv'].shape[0]
    assert H % 2 == 0 and W % 2 == 0 and Cout % Cin == 0
    Ho, Wo = H // 2, W // 2
    ratio = Cout // Cin
    eps = 1e-5
    f32 = jnp.float32
    Cp = ((Cout + 127) // 128) * 128      # lane-dense fused-output channel width
    Wp = ((W + 4 + 7) // 8) * 8           # sublane-aligned padded image width

    # NHWC + zero-pad (2 on top/left/bottom, right up to Wp) done in XLA so the
    # kernel never writes pad pixels.
    x = jnp.transpose(x_nchw, (0, 2, 3, 1)).astype(f32)
    xpp = jnp.pad(x, ((0, 0), (2, 2), (2, Wp - W - 2), (0, 0)))

    # ---- parameter folding (plain-JAX glue) ---------------------------------
    onehot = (jnp.arange(Cin)[:, None] ==
              (jnp.arange(Cout) // ratio)[None, :]).astype(f32)      # (Cin, Cout)
    w1 = jnp.transpose(params['w_conv'][:, 0], (1, 2, 0)).reshape(9, Cout)
    b1 = params['b_conv'].reshape(1, Cout)
    wx = jnp.transpose(params['w_convx'][:, 0], (1, 2, 0)).reshape(9, Cout)
    bx = params['b_convx'].reshape(1, Cout)

    def bn_fold(g, b, m, v):
        s = g / jnp.sqrt(v + eps)
        return s, b - m * s

    sc, oc = bn_fold(*params['bn_c'])
    sx, ox = bn_fold(*params['bn_x'])
    sm, om = bn_fold(*params['bn_m'])

    WF = params['w_fuse'][:, :, 0, 0].T                              # (3*Cout, Cout)
    WFc, WFx, WFm = WF[:Cout], WF[Cout:2 * Cout], WF[2 * Cout:]
    WC = params['w_cut'][:, :, 0, 0].T                               # (4*Cin, Cout)

    # out = s2d @ Wcf + gelu(conv_x) @ Wxf + maxpool @ Wmf + b_all
    Wcf = (WC * sc[None, :]) @ WFc                                   # (4*Cin, Cout)
    Wxf = sx[:, None] * WFx                                          # (Cout, Cout)
    Wmf = sm[:, None] * WFm                                          # (Cout, Cout)
    b_all = (params['b_fuse']
             + (params['b_cut'] * sc + oc) @ WFc
             + ox @ WFx + om @ WFm)                                  # (Cout,)

    pad_c = ((0, 0), (0, Cp - Cout))
    Wcf = jnp.pad(Wcf, pad_c)
    Wxf = jnp.pad(Wxf, pad_c)
    Wmf = jnp.pad(Wmf, pad_c)
    b_all = jnp.pad(b_all, (0, Cp - Cout)).reshape(1, Cp)

    param_arrays = [onehot, w1, b1, wx, bx, Wcf, Wxf, Wmf, b_all]
    param_arrays = [p.astype(f32) for p in param_arrays]

    in_specs = [pl.BlockSpec((None, H + 4, Wp, Cin), lambda n: (n, 0, 0, 0))]
    in_specs += [pl.BlockSpec(p.shape, lambda n: (0, 0)) for p in param_arrays]

    out = pl.pallas_call(
        drfd_kernel,
        out_shape=jax.ShapeDtypeStruct((N, Ho * Wo, Cp), f32),
        grid=(N,),
        in_specs=in_specs,
        out_specs=pl.BlockSpec((None, Ho * Wo, Cp), lambda n: (n, 0, 0)),
        scratch_shapes=[pltpu.VMEM((H + 4, Wp, Cout), f32),       # replicated input
                        pltpu.VMEM((H + 2, W + 2, Cout), f32)],   # padded conv out
        compiler_params=pltpu.CompilerParams(
            dimension_semantics=("parallel",),          # batch elems are independent
            vmem_limit_bytes=48 * 1024 * 1024),         # > 32 MiB scoped default
    )(xpp, *param_arrays)

    out = out[:, :, :Cout].reshape(N, Ho, Wo, Cout)
    return jnp.transpose(out, (0, 3, 1, 2))             # NCHW


# ---------------------------- plain-JAX reference -----------------------------
def drfd_reference(x, p):
    eps = 1e-5

    def conv(x, w, b, stride, pad, groups):
        y = jax.lax.conv_general_dilated(
            x, w, (stride, stride), [(pad, pad), (pad, pad)],
            dimension_numbers=('NCHW', 'OIHW', 'NCHW'),
            feature_group_count=groups,
            precision=jax.lax.Precision.HIGHEST)
        return y + b[None, :, None, None]

    def bn(x, g, b, m, v):
        return ((x - m[None, :, None, None]) /
                jnp.sqrt(v[None, :, None, None] + eps)
                * g[None, :, None, None] + b[None, :, None, None])

    Cin = x.shape[1]
    c = x
    h = conv(x, p['w_conv'], p['b_conv'], 1, 1, Cin)
    m = h
    x0 = c[:, :, 0::2, 0::2]; x1 = c[:, :, 1::2, 0::2]
    x2 = c[:, :, 0::2, 1::2]; x3 = c[:, :, 1::2, 1::2]
    cc = jnp.concatenate([x0, x1, x2, x3], axis=1)
    cc = bn(conv(cc, p['w_cut'], p['b_cut'], 1, 0, 1), *p['bn_c'])
    Cout = p['b_conv'].shape[0]
    hx = conv(h, p['w_convx'], p['b_convx'], 2, 1, Cout)
    hx = bn(jax.nn.gelu(hx, approximate=False), *p['bn_x'])
    mm = jax.lax.reduce_window(m, -jnp.inf, jax.lax.max,
                               (1, 1, 2, 2), (1, 1, 2, 2), 'VALID')
    mm = bn(mm, *p['bn_m'])
    out = jnp.concatenate([cc, hx, mm], axis=1)
    return conv(out, p['w_fuse'], p['b_fuse'], 1, 0, 1)


if __name__ == "__main__":
    f32 = jnp.float32
    N, Cin, H, W = 2, 4, 16, 16
    Cout = 8                       # must be a multiple of Cin (grouped conv)

    key = jax.random.PRNGKey(0)
    ks = jax.random.split(key, 21)
    params = {
        'w_conv':  jax.random.normal(ks[0], (Cout, 1, 3, 3), f32) * 0.2,
        'b_conv':  jax.random.normal(ks[1], (Cout,), f32) * 0.1,
        'w_convx': jax.random.normal(ks[2], (Cout, 1, 3, 3), f32) * 0.2,
        'b_convx': jax.random.normal(ks[3], (Cout,), f32) * 0.1,
        'w_cut':   jax.random.normal(ks[4], (Cout, 4 * Cin, 1, 1), f32) * 0.2,
        'b_cut':   jax.random.normal(ks[5], (Cout,), f32) * 0.1,
        'w_fuse':  jax.random.normal(ks[6], (Cout, 3 * Cout, 1, 1), f32) * 0.2,
        'b_fuse':  jax.random.normal(ks[7], (Cout,), f32) * 0.1,
        'bn_c': (1.0 + 0.1 * jax.random.normal(ks[8], (Cout,), f32),
                 0.1 * jax.random.normal(ks[9], (Cout,), f32),
                 0.1 * jax.random.normal(ks[10], (Cout,), f32),
                 0.5 + jax.random.uniform(ks[11], (Cout,), f32)),
        'bn_x': (1.0 + 0.1 * jax.random.normal(ks[12], (Cout,), f32),
                 0.1 * jax.random.normal(ks[13], (Cout,), f32),
                 0.1 * jax.random.normal(ks[14], (Cout,), f32),
                 0.5 + jax.random.uniform(ks[15], (Cout,), f32)),
        'bn_m': (1.0 + 0.1 * jax.random.normal(ks[16], (Cout,), f32),
                 0.1 * jax.random.normal(ks[17], (Cout,), f32),
                 0.1 * jax.random.normal(ks[18], (Cout,), f32),
                 0.5 + jax.random.uniform(ks[19], (Cout,), f32)),
    }
    x = jax.random.normal(ks[20], (N, Cin, H, W), f32)

    out = jax.block_until_ready(drfd_forward(x, params))
    assert out.shape == (N, Cout, H // 2, W // 2)

    ref = drfd_reference(x, params)
    np.testing.assert_allclose(np.asarray(out), np.asarray(ref),
                               rtol=5e-2, atol=2e-2)
    print("KERNEL_OK")
</pallas_src>

<mosaic_0001>
module attributes {stable_mosaic.version = 11 : i64} {
  func.func @drfd_kernel(%arg0: i32, %arg1: memref<1x20x24x4xf32, #tpu.memory_space<vmem>>, %arg2: memref<4x8xf32, #tpu.memory_space<vmem>>, %arg3: memref<9x8xf32, #tpu.memory_space<vmem>>, %arg4: memref<1x8xf32, #tpu.memory_space<vmem>>, %arg5: memref<9x8xf32, #tpu.memory_space<vmem>>, %arg6: memref<1x8xf32, #tpu.memory_space<vmem>>, %arg7: memref<16x128xf32, #tpu.memory_space<vmem>>, %arg8: memref<8x128xf32, #tpu.memory_space<vmem>>, %arg9: memref<8x128xf32, #tpu.memory_space<vmem>>, %arg10: memref<1x128xf32, #tpu.memory_space<vmem>>, %arg11: memref<1x64x128xf32, #tpu.memory_space<vmem>>, %arg12: memref<20x24x8xf32, #tpu.memory_space<vmem>>, %arg13: memref<18x18x8xf32, #tpu.memory_space<vmem>>) attributes {dimension_semantics = [#tpu.dimension_semantics<parallel>], iteration_bounds = array<i64: 2>, scalar_prefetch = 0 : i64, scratch_operands = 2 : i64, tpu.core_type = #tpu.core_type<tc>, window_params = [{transform_indices = @transform_0, window_bounds = array<i64: 1, 20, 24, 4>}, {pipeline_mode = #tpu.pipeline_mode<synchronous>, transform_indices = @transform_1, window_bounds = array<i64: 4, 8>}, {pipeline_mode = #tpu.pipeline_mode<synchronous>, transform_indices = @transform_2, window_bounds = array<i64: 9, 8>}, {pipeline_mode = #tpu.pipeline_mode<synchronous>, transform_indices = @transform_3, window_bounds = array<i64: 1, 8>}, {pipeline_mode = #tpu.pipeline_mode<synchronous>, transform_indices = @transform_4, window_bounds = array<i64: 9, 8>}, {pipeline_mode = #tpu.pipeline_mode<synchronous>, transform_indices = @transform_5, window_bounds = array<i64: 1, 8>}, {pipeline_mode = #tpu.pipeline_mode<synchronous>, transform_indices = @transform_6, window_bounds = array<i64: 16, 128>}, {pipeline_mode = #tpu.pipeline_mode<synchronous>, transform_indices = @transform_7, window_bounds = array<i64: 8, 128>}, {pipeline_mode = #tpu.pipeline_mode<synchronous>, transform_indices = @transform_8, window_bounds = array<i64: 8, 128>}, {pipeline_mode = #tpu.pipeline_mode<synchronous>, transform_indices = @transform_9, window_bounds = array<i64: 1, 128>}, {transform_indices = @transform_10, window_bounds = array<i64: 1, 64, 128>}]} {
    %c0 = arith.constant 0 : index
    %c0_0 = arith.constant 0 : index
    %c0_1 = arith.constant 0 : index
    %c0_2 = arith.constant 0 : index
    %0 = vector.load %arg1[%c0, %c0_0, %c0_1, %c0_2] : memref<1x20x24x4xf32, #tpu.memory_space<vmem>>, vector<1x20x24x4xf32>
    %1 = vector.shape_cast %0 : vector<1x20x24x4xf32> to vector<20x24x4xf32>
    %2 = vector.shape_cast %1 : vector<20x24x4xf32> to vector<480x4xf32>
    %c0_3 = arith.constant 0 : index
    %c0_4 = arith.constant 0 : index
    %3 = vector.load %arg2[%c0_3, %c0_4] : memref<4x8xf32, #tpu.memory_space<vmem>>, vector<4x8xf32>
    %cst = arith.constant dense<0.000000e+00> : vector<480x8xf32>
    %4 = tpu.matmul %2, %3, %cst {dimension_numbers = #tpu.dot_dimension_numbers<[1], [0], [0], [1], [0, 0, 1, 1], [], []>} : vector<480x4xf32>, vector<4x8xf32>, vector<480x8xf32> -> vector<480x8xf32>
    %5 = vector.shape_cast %4 : vector<480x8xf32> to vector<20x24x8xf32>
    %c0_5 = arith.constant 0 : index
    %c0_6 = arith.constant 0 : index
    %c0_7 = arith.constant 0 : index
    %6 = vector.load %arg12[%c0_5, %c0_6, %c0_7] : memref<20x24x8xf32, #tpu.memory_space<vmem>>, vector<20x24x8xf32>
    tpu.vector_store %arg12[%c0_5, %c0_6, %c0_7], %5 {strides = array<i32>} : memref<20x24x8xf32, #tpu.memory_space<vmem>>, vector<20x24x8xf32>,
    %cst_8 = arith.constant 0.000000e+00 : f32
    %7 = vector.broadcast %cst_8 : f32 to vector<18x18x8xf32>
    %c0_9 = arith.constant 0 : index
    %c0_10 = arith.constant 0 : index
    %c0_11 = arith.constant 0 : index
    %8 = vector.load %arg12[%c0_9, %c0_10, %c0_11] : memref<20x24x8xf32, #tpu.memory_space<vmem>>, vector<18x18x8xf32>
    %c0_12 = arith.constant 0 : index
    %c0_13 = arith.constant 0 : index
    %9 = vector.load %arg3[%c0_12, %c0_13] : memref<9x8xf32, #tpu.memory_space<vmem>>, vector<1x8xf32>
    %10 = vector.shape_cast %9 : vector<1x8xf32> to vector<1x1x8xf32>
    %11 = vector.broadcast %10 : vector<1x1x8xf32> to vector<18x18x8xf32>
    %12 = arith.mulf %8, %11 : vector<18x18x8xf32>
    %13 = arith.addf %7, %12 : vector<18x18x8xf32>
    %c0_14 = arith.constant 0 : index
    %c1 = arith.constant 1 : index
    %c0_15 = arith.constant 0 : index
    %14 = vector.load %arg12[%c0_14, %c1, %c0_15] : memref<20x24x8xf32, #tpu.memory_space<vmem>>, vector<18x18x8xf32>
    %c1_16 = arith.constant 1 : index
    %c0_17 = arith.constant 0 : index
    %15 = vector.load %arg3[%c1_16, %c0_17] : memref<9x8xf32, #tpu.memory_space<vmem>>, vector<1x8xf32>
    %16 = vector.shape_cast %15 : vector<1x8xf32> to vector<1x1x8xf32>
    %17 = vector.broadcast %16 : vector<1x1x8xf32> to vector<18x18x8xf32>
    %18 = arith.mulf %14, %17 : vector<18x18x8xf32>
    %19 = arith.addf %13, %18 : vector<18x18x8xf32>
    %c0_18 = arith.constant 0 : index
    %c2 = arith.constant 2 : index
    %c0_19 = arith.constant 0 : index
    %20 = vector.load %arg12[%c0_18, %c2, %c0_19] : memref<20x24x8xf32, #tpu.memory_space<vmem>>, vector<18x18x8xf32>
    %c2_20 = arith.constant 2 : index
    %c0_21 = arith.constant 0 : index
    %21 = vector.load %arg3[%c2_20, %c0_21] : memref<9x8xf32, #tpu.memory_space<vmem>>, vector<1x8xf32>
    %22 = vector.shape_cast %21 : vector<1x8xf32> to vector<1x1x8xf32>
    %23 = vector.broadcast %22 : vector<1x1x8xf32> to vector<18x18x8xf32>
    %24 = arith.mulf %20, %23 : vector<18x18x8xf32>
    %25 = arith.addf %19, %24 : vector<18x18x8xf32>
    %c1_22 = arith.constant 1 : index
    %c0_23 = arith.constant 0 : index
    %c0_24 = arith.constant 0 : index
    %26 = vector.load %arg12[%c1_22, %c0_23, %c0_24] : memref<20x24x8xf32, #tpu.memory_space<vmem>>, vector<18x18x8xf32>
    %c3 = arith.constant 3 : index
    %c0_25 = arith.constant 0 : index
    %27 = vector.load %arg3[%c3, %c0_25] : memref<9x8xf32, #tpu.memory_space<vmem>>, vector<1x8xf32>
    %28 = vector.shape_cast %27 : vector<1x8xf32> to vector<1x1x8xf32>
    %29 = vector.broadcast %28 : vector<1x1x8xf32> to vector<18x18x8xf32>
    %30 = arith.mulf %26, %29 : vector<18x18x8xf32>
    %31 = arith.addf %25, %30 : vector<18x18x8xf32>
    %c1_26 = arith.constant 1 : index
    %c1_27 = arith.constant 1 : index
    %c0_28 = arith.constant 0 : index
    %32 = vector.load %arg12[%c1_26, %c1_27, %c0_28] : memref<20x24x8xf32, #tpu.memory_space<vmem>>, vector<18x18x8xf32>
    %c4 = arith.constant 4 : index
    %c0_29 = arith.constant 0 : index
    %33 = vector.load %arg3[%c4, %c0_29] : memref<9x8xf32, #tpu.memory_space<vmem>>, vector<1x8xf32>
    %34 = vector.shape_cast %33 : vector<1x8xf32> to vector<1x1x8xf32>
    %35 = vector.broadcast %34 : vector<1x1x8xf32> to vector<18x18x8xf32>
    %36 = arith.mulf %32, %35 : vector<18x18x8xf32>
    %37 = arith.addf %31, %36 : vector<18x18x8xf32>
    %c1_30 = arith.constant 1 : index
    %c2_31 = arith.constant 2 : index
    %c0_32 = arith.constant 0 : index
    %38 = vector.load %arg12[%c1_30, %c2_31, %c0_32] : memref<20x24x8xf32, #tpu.memory_space<vmem>>, vector<18x18x8xf32>
    %c5 = arith.constant 5 : index
    %c0_33 = arith.constant 0 : index
    %39 = vector.load %arg3[%c5, %c0_33] : memref<9x8xf32, #tpu.memory_space<vmem>>, vector<1x8xf32>
    %40 = vector.shape_cast %39 : vector<1x8xf32> to vector<1x1x8xf32>
    %41 = vector.broadcast %40 : vector<1x1x8xf32> to vector<18x18x8xf32>
    %42 = arith.mulf %38, %41 : vector<18x18x8xf32>
    %43 = arith.addf %37, %42 : vector<18x18x8xf32>
    %c2_34 = arith.constant 2 : index
    %c0_35 = arith.constant 0 : index
    %c0_36 = arith.constant 0 : index
    %44 = vector.load %arg12[%c2_34, %c0_35, %c0_36] : memref<20x24x8xf32, #tpu.memory_space<vmem>>, vector<18x18x8xf32>
    %c6 = arith.constant 6 : index
    %c0_37 = arith.constant 0 : index
    %45 = vector.load %arg3[%c6, %c0_37] : memref<9x8xf32, #tpu.memory_space<vmem>>, vector<1x8xf32>
    %46 = vector.shape_cast %45 : vector<1x8xf32> to vector<1x1x8xf32>
    %47 = vector.broadcast %46 : vector<1x1x8xf32> to vector<18x18x8xf32>
    %48 = arith.mulf %44, %47 : vector<18x18x8xf32>
    %49 = arith.addf %43, %48 : vector<18x18x8xf32>
    %c2_38 = arith.constant 2 : index
    %c1_39 = arith.constant 1 : index
    %c0_40 = arith.constant 0 : index
    %50 = vector.load %arg12[%c2_38, %c1_39, %c0_40] : memref<20x24x8xf32, #tpu.memory_space<vmem>>, vector<18x18x8xf32>
    %c7 = arith.constant 7 : index
    %c0_41 = arith.constant 0 : index
    %51 = vector.load %arg3[%c7, %c0_41] : memref<9x8xf32, #tpu.memory_space<vmem>>, vector<1x8xf32>
    %52 = vector.shape_cast %51 : vector<1x8xf32> to vector<1x1x8xf32>
    %53 = vector.broadcast %52 : vector<1x1x8xf32> to vector<18x18x8xf32>
    %54 = arith.mulf %50, %53 : vector<18x18x8xf32>
    %55 = arith.addf %49, %54 : vector<18x18x8xf32>
    %c2_42 = arith.constant 2 : index
    %c2_43 = arith.constant 2 : index
    %c0_44 = arith.constant 0 : index
    %56 = vector.load %arg12[%c2_42, %c2_43, %c0_44] : memref<20x24x8xf32, #tpu.memory_space<vmem>>, vector<18x18x8xf32>
    %c8 = arith.constant 8 : index
    %c0_45 = arith.constant 0 : index
    %57 = vector.load %arg3[%c8, %c0_45] : memref<9x8xf32, #tpu.memory_space<vmem>>, vector<1x8xf32>
    %58 = vector.shape_cast %57 : vector<1x8xf32> to vector<1x1x8xf32>
    %59 = vector.broadcast %58 : vector<1x1x8xf32> to vector<18x18x8xf32>
    %60 = arith.mulf %56, %59 : vector<18x18x8xf32>
    %61 = arith.addf %55, %60 : vector<18x18x8xf32>
    %62 = tpu.iota {dimensions = array<i32: 0>} : vector<18x18x1xi32>
    %63 = tpu.iota {dimensions = array<i32: 1>} : vector<18x18x1xi32>
    %c0_i32 = arith.constant 0 : i32
    %64 = vector.broadcast %c0_i32 : i32 to vector<18x18x1xi32>
    %65 = arith.cmpi sgt, %62, %64 : vector<18x18x1xi32>
    %c17_i32 = arith.constant 17 : i32
    %66 = vector.broadcast %c17_i32 : i32 to vector<18x18x1xi32>
    %67 = arith.cmpi slt, %62, %66 : vector<18x18x1xi32>
    %68 = arith.andi %65, %67 : vector<18x18x1xi1>
    %c0_i32_46 = arith.constant 0 : i32
    %69 = vector.broadcast %c0_i32_46 : i32 to vector<18x18x1xi32>
    %70 = arith.cmpi sgt, %63, %69 : vector<18x18x1xi32>
    %71 = arith.andi %68, %70 : vector<18x18x1xi1>
    %c17_i32_47 = arith.constant 17 : i32
    %72 = vector.broadcast %c17_i32_47 : i32 to vector<18x18x1xi32>
    %73 = arith.cmpi slt, %63, %72 : vector<18x18x1xi32>
    %74 = arith.andi %71, %73 : vector<18x18x1xi1>
    %c0_48 = arith.constant 0 : index
    %c0_49 = arith.constant 0 : index
    %75 = vector.load %arg4[%c0_48, %c0_49] : memref<1x8xf32, #tpu.memory_space<vmem>>, vector<1x8xf32>
    %76 = vector.shape_cast %75 : vector<1x8xf32> to vector<1x1x8xf32>
    %77 = vector.broadcast %76 : vector<1x1x8xf32> to vector<18x18x8xf32>
    %78 = arith.addf %61, %77 : vector<18x18x8xf32>
    %cst_50 = arith.constant 0.000000e+00 : f32
    %79 = vector.shape_cast %74 : vector<18x18x1xi1> to vector<18x18x1xi1>
    %80 = vector.broadcast %79 : vector<18x18x1xi1> to vector<18x18x8xi1>
    %81 = vector.broadcast %cst_50 : f32 to vector<18x18x8xf32>
    %82 = arith.select %80, %78, %81 : vector<18x18x8xi1>, vector<18x18x8xf32>
    %c0_51 = arith.constant 0 : index
    %c0_52 = arith.constant 0 : index
    %c0_53 = arith.constant 0 : index
    %83 = vector.load %arg13[%c0_51, %c0_52, %c0_53] : memref<18x18x8xf32, #tpu.memory_space<vmem>>, vector<18x18x8xf32>
    tpu.vector_store %arg13[%c0_51, %c0_52, %c0_53], %82 {strides = array<i32>} : memref<18x18x8xf32, #tpu.memory_space<vmem>>, vector<18x18x8xf32>,
    %c0_54 = arith.constant 0 : index
    %c0_55 = arith.constant 0 : index
    %c0_56 = arith.constant 0 : index
    %84 = tpu.strided_load %arg13[%c0_54, %c0_55, %c0_56] {strides = array<i32: 2, 2, 1>} : memref<18x18x8xf32, #tpu.memory_space<vmem>>, vector<9x9x8xf32>
    %c1_57 = arith.constant 1 : index
    %c0_58 = arith.constant 0 : index
    %c0_59 = arith.constant 0 : index
    %85 = tpu.strided_load %arg13[%c1_57, %c0_58, %c0_59] {strides = array<i32: 2, 2, 1>} : memref<18x18x8xf32, #tpu.memory_space<vmem>>, vector<9x9x8xf32>
    %c0_60 = arith.constant 0 : index
    %c1_61 = arith.constant 1 : index
    %c0_62 = arith.constant 0 : index
    %86 = tpu.strided_load %arg13[%c0_60, %c1_61, %c0_62] {strides = array<i32: 2, 2, 1>} : memref<18x18x8xf32, #tpu.memory_space<vmem>>, vector<9x9x8xf32>
    %c1_63 = arith.constant 1 : index
    %c1_64 = arith.constant 1 : index
    %c0_65 = arith.constant 0 : index
    %87 = tpu.strided_load %arg13[%c1_63, %c1_64, %c0_65] {strides = array<i32: 2, 2, 1>} : memref<18x18x8xf32, #tpu.memory_space<vmem>>, vector<9x9x8xf32>
    %cst_66 = arith.constant 0.000000e+00 : f32
    %88 = vector.broadcast %cst_66 : f32 to vector<8x8x8xf32>
    %89 = vector.extract_strided_slice %84 {offsets = [0, 0, 0], sizes = [8, 8, 8], strides = [1, 1, 1]} : vector<9x9x8xf32> to vector<8x8x8xf32>
    %c0_67 = arith.constant 0 : index
    %c0_68 = arith.constant 0 : index
    %90 = vector.load %arg5[%c0_67, %c0_68] : memref<9x8xf32, #tpu.memory_space<vmem>>, vector<1x8xf32>
    %91 = vector.shape_cast %90 : vector<1x8xf32> to vector<1x1x8xf32>
    %92 = vector.broadcast %91 : vector<1x1x8xf32> to vector<8x8x8xf32>
    %93 = arith.mulf %89, %92 : vector<8x8x8xf32>
    %94 = arith.addf %88, %93 : vector<8x8x8xf32>
    %95 = vector.extract_strided_slice %86 {offsets = [0, 0, 0], sizes = [8, 8, 8], strides = [1, 1, 1]} : vector<9x9x8xf32> to vector<8x8x8xf32>
    %c1_69 = arith.constant 1 : index
    %c0_70 = arith.constant 0 : index
    %96 = vector.load %arg5[%c1_69, %c0_70] : memref<9x8xf32, #tpu.memory_space<vmem>>, vector<1x8xf32>
    %97 = vector.shape_cast %96 : vector<1x8xf32> to vector<1x1x8xf32>
    %98 = vector.broadcast %97 : vector<1x1x8xf32> to vector<8x8x8xf32>
    %99 = arith.mulf %95, %98 : vector<8x8x8xf32>
    %100 = arith.addf %94, %99 : vector<8x8x8xf32>
    %101 = vector.extract_strided_slice %84 {offsets = [0, 1, 0], sizes = [8, 8, 8], strides = [1, 1, 1]} : vector<9x9x8xf32> to vector<8x8x8xf32>
    %c2_71 = arith.constant 2 : index
    %c0_72 = arith.constant 0 : index
    %102 = vector.load %arg5[%c2_71, %c0_72] : memref<9x8xf32, #tpu.memory_space<vmem>>, vector<1x8xf32>
    %103 = vector.shape_cast %102 : vector<1x8xf32> to vector<1x1x8xf32>
    %104 = vector.broadcast %103 : vector<1x1x8xf32> to vector<8x8x8xf32>
    %105 = arith.mulf %101, %104 : vector<8x8x8xf32>
    %106 = arith.addf %100, %105 : vector<8x8x8xf32>
    %107 = vector.extract_strided_slice %85 {offsets = [0, 0, 0], sizes = [8, 8, 8], strides = [1, 1, 1]} : vector<9x9x8xf32> to vector<8x8x8xf32>
    %c3_73 = arith.constant 3 : index
    %c0_74 = arith.constant 0 : index
    %108 = vector.load %arg5[%c3_73, %c0_74] : memref<9x8xf32, #tpu.memory_space<vmem>>, vector<1x8xf32>
    %109 = vector.shape_cast %108 : vector<1x8xf32> to vector<1x1x8xf32>
    %110 = vector.broadcast %109 : vector<1x1x8xf32> to vector<8x8x8xf32>
    %111 = arith.mulf %107, %110 : vector<8x8x8xf32>
    %112 = arith.addf %106, %111 : vector<8x8x8xf32>
    %113 = vector.extract_strided_slice %87 {offsets = [0, 0, 0], sizes = [8, 8, 8], strides = [1, 1, 1]} : vector<9x9x8xf32> to vector<8x8x8xf32>
    %c4_75 = arith.constant 4 : index
    %c0_76 = arith.constant 0 : index
    %114 = vector.load %arg5[%c4_75, %c0_76] : memref<9x8xf32, #tpu.memory_space<vmem>>, vector<1x8xf32>
    %115 = vector.shape_cast %114 : vector<1x8xf32> to vector<1x1x8xf32>
    %116 = vector.broadcast %115 : vector<1x1x8xf32> to vector<8x8x8xf32>
    %117 = arith.mulf %113, %116 : vector<8x8x8xf32>
    %118 = arith.addf %112, %117 : vector<8x8x8xf32>
    %119 = vector.extract_strided_slice %85 {offsets = [0, 1, 0], sizes = [8, 8, 8], strides = [1, 1, 1]} : vector<9x9x8xf32> to vector<8x8x8xf32>
    %c5_77 = arith.constant 5 : index
    %c0_78 = arith.constant 0 : index
    %120 = vector.load %arg5[%c5_77, %c0_78] : memref<9x8xf32, #tpu.memory_space<vmem>>, vector<1x8xf32>
    %121 = vector.shape_cast %120 : vector<1x8xf32> to vector<1x1x8xf32>
    %122 = vector.broadcast %121 : vector<1x1x8xf32> to vector<8x8x8xf32>
    %123 = arith.mulf %119, %122 : vector<8x8x8xf32>
    %124 = arith.addf %118, %123 : vector<8x8x8xf32>
    %125 = vector.extract_strided_slice %84 {offsets = [1, 0, 0], sizes = [8, 8, 8], strides = [1, 1, 1]} : vector<9x9x8xf32> to vector<8x8x8xf32>
    %c6_79 = arith.constant 6 : index
    %c0_80 = arith.constant 0 : index
    %126 = vector.load %arg5[%c6_79, %c0_80] : memref<9x8xf32, #tpu.memory_space<vmem>>, vector<1x8xf32>
    %127 = vector.shape_cast %126 : vector<1x8xf32> to vector<1x1x8xf32>
    %128 = vector.broadcast %127 : vector<1x1x8xf32> to vector<8x8x8xf32>
    %129 = arith.mulf %125, %128 : vector<8x8x8xf32>
    %130 = arith.addf %124, %129 : vector<8x8x8xf32>
    %131 = vector.extract_strided_slice %86 {offsets = [1, 0, 0], sizes = [8, 8, 8], strides = [1, 1, 1]} : vector<9x9x8xf32> to vector<8x8x8xf32>
    %c7_81 = arith.constant 7 : index
    %c0_82 = arith.constant 0 : index
    %132 = vector.load %arg5[%c7_81, %c0_82] : memref<9x8xf32, #tpu.memory_space<vmem>>, vector<1x8xf32>
    %133 = vector.shape_cast %132 : vector<1x8xf32> to vector<1x1x8xf32>
    %134 = vector.broadcast %133 : vector<1x1x8xf32> to vector<8x8x8xf32>
    %135 = arith.mulf %131, %134 : vector<8x8x8xf32>
    %136 = arith.addf %130, %135 : vector<8x8x8xf32>
    %137 = vector.extract_strided_slice %84 {offsets = [1, 1, 0], sizes = [8, 8, 8], strides = [1, 1, 1]} : vector<9x9x8xf32> to vector<8x8x8xf32>
    %c8_83 = arith.constant 8 : index
    %c0_84 = arith.constant 0 : index
    %138 = vector.load %arg5[%c8_83, %c0_84] : memref<9x8xf32, #tpu.memory_space<vmem>>, vector<1x8xf32>
    %139 = vector.shape_cast %138 : vector<1x8xf32> to vector<1x1x8xf32>
    %140 = vector.broadcast %139 : vector<1x1x8xf32> to vector<8x8x8xf32>
    %141 = arith.mulf %137, %140 : vector<8x8x8xf32>
    %142 = arith.addf %136, %141 : vector<8x8x8xf32>
    %c0_85 = arith.constant 0 : index
    %c0_86 = arith.constant 0 : index
    %143 = vector.load %arg6[%c0_85, %c0_86] : memref<1x8xf32, #tpu.memory_space<vmem>>, vector<1x8xf32>
    %144 = vector.shape_cast %143 : vector<1x8xf32> to vector<1x1x8xf32>
    %145 = vector.broadcast %144 : vector<1x1x8xf32> to vector<8x8x8xf32>
    %146 = arith.addf %142, %145 : vector<8x8x8xf32>
    %cst_87 = arith.constant 0.707106769 : f32
    %147 = vector.broadcast %cst_87 : f32 to vector<8x8x8xf32>
    %148 = arith.mulf %146, %147 : vector<8x8x8xf32>
    %149 = math.absf %148 : vector<8x8x8xf32>
    %cst_88 = arith.constant 0.327591091 : f32
    %150 = vector.broadcast %cst_88 : f32 to vector<8x8x8xf32>
    %151 = arith.mulf %150, %149 : vector<8x8x8xf32>
    %cst_89 = arith.constant 1.000000e+00 : f32
    %152 = vector.broadcast %cst_89 : f32 to vector<8x8x8xf32>
    %153 = arith.addf %152, %151 : vector<8x8x8xf32>
    %cst_90 = arith.constant 1.000000e+00 : f32
    %154 = vector.broadcast %cst_90 : f32 to vector<8x8x8xf32>
    %155 = arith.divf %154, %153 : vector<8x8x8xf32>
    %cst_91 = arith.constant 1.06140542 : f32
    %156 = vector.broadcast %cst_91 : f32 to vector<8x8x8xf32>
    %157 = arith.mulf %156, %155 : vector<8x8x8xf32>
    %cst_92 = arith.constant -1.45315206 : f32
    %158 = vector.broadcast %cst_92 : f32 to vector<8x8x8xf32>
    %159 = arith.addf %157, %158 : vector<8x8x8xf32>
    %160 = arith.mulf %159, %155 : vector<8x8x8xf32>
    %cst_93 = arith.constant 1.42141378 : f32
    %161 = vector.broadcast %cst_93 : f32 to vector<8x8x8xf32>
    %162 = arith.addf %160, %161 : vector<8x8x8xf32>
    %163 = arith.mulf %162, %155 : vector<8x8x8xf32>
    %cst_94 = arith.constant -0.284496725 : f32
    %164 = vector.broadcast %cst_94 : f32 to vector<8x8x8xf32>
    %165 = arith.addf %163, %164 : vector<8x8x8xf32>
    %166 = arith.mulf %165, %155 : vector<8x8x8xf32>
    %cst_95 = arith.constant 0.254829586 : f32
    %167 = vector.broadcast %cst_95 : f32 to vector<8x8x8xf32>
    %168 = arith.addf %166, %167 : vector<8x8x8xf32>
    %169 = arith.mulf %168, %155 : vector<8x8x8xf32>
    %cst_96 = arith.constant 0.000000e+00 : f32
    %170 = vector.broadcast %cst_96 : f32 to vector<8x8x8xf32>
    %171 = arith.subf %170, %149 : vector<8x8x8xf32>
    %172 = arith.mulf %171, %149 : vector<8x8x8xf32>
    %173 = math.exp %172 : vector<8x8x8xf32>
    %174 = arith.mulf %169, %173 : vector<8x8x8xf32>
    %cst_97 = arith.constant 1.000000e+00 : f32
    %175 = vector.broadcast %cst_97 : f32 to vector<8x8x8xf32>
    %176 = arith.subf %175, %174 : vector<8x8x8xf32>
    %cst_98 = arith.constant 0.000000e+00 : f32
    %177 = vector.broadcast %cst_98 : f32 to vector<8x8x8xf32>
    %178 = arith.cmpf olt, %148, %177 : vector<8x8x8xf32>
    %cst_99 = arith.constant 0.000000e+00 : f32
    %179 = vector.broadcast %cst_99 : f32 to vector<8x8x8xf32>
    %180 = arith.subf %179, %176 : vector<8x8x8xf32>
    %181 = arith.select %178, %180, %176 : vector<8x8x8xi1>, vector<8x8x8xf32>
    %cst_100 = arith.constant 5.000000e-01 : f32
    %182 = vector.broadcast %cst_100 : f32 to vector<8x8x8xf32>
    %183 = arith.mulf %182, %146 : vector<8x8x8xf32>
    %cst_101 = arith.constant 1.000000e+00 : f32
    %184 = vector.broadcast %cst_101 : f32 to vector<8x8x8xf32>
    %185 = arith.addf %184, %181 : vector<8x8x8xf32>
    %186 = arith.mulf %183, %185 : vector<8x8x8xf32>
    %187 = vector.extract_strided_slice %87 {offsets = [0, 0, 0], sizes = [8, 8, 8], strides = [1, 1, 1]} : vector<9x9x8xf32> to vector<8x8x8xf32>
    %188 = vector.extract_strided_slice %86 {offsets = [1, 0, 0], sizes = [8, 8, 8], strides = [1, 1, 1]} : vector<9x9x8xf32> to vector<8x8x8xf32>
    %189 = arith.maximumf %187, %188 : vector<8x8x8xf32>
    %190 = vector.extract_strided_slice %85 {offsets = [0, 1, 0], sizes = [8, 8, 8], strides = [1, 1, 1]} : vector<9x9x8xf32> to vector<8x8x8xf32>
    %191 = vector.extract_strided_slice %84 {offsets = [1, 1, 0], sizes = [8, 8, 8], strides = [1, 1, 1]} : vector<9x9x8xf32> to vector<8x8x8xf32>
    %192 = arith.maximumf %190, %191 : vector<8x8x8xf32>
    %193 = arith.maximumf %189, %192 : vector<8x8x8xf32>
    %c0_102 = arith.constant 0 : index
    %c2_103 = arith.constant 2 : index
    %c2_104 = arith.constant 2 : index
    %c0_105 = arith.constant 0 : index
    %194 = tpu.strided_load %arg1[%c0_102, %c2_103, %c2_104, %c0_105] {strides = array<i32: 1, 2, 2, 1>} : memref<1x20x24x4xf32, #tpu.memory_space<vmem>>, vector<1x8x8x4xf32>
    %195 = vector.shape_cast %194 : vector<1x8x8x4xf32> to vector<8x8x4xf32>
    %c0_106 = arith.constant 0 : index
    %c3_107 = arith.constant 3 : index
    %c2_108 = arith.constant 2 : index
    %c0_109 = arith.constant 0 : index
    %196 = tpu.strided_load %arg1[%c0_106, %c3_107, %c2_108, %c0_109] {strides = array<i32: 1, 2, 2, 1>} : memref<1x20x24x4xf32, #tpu.memory_space<vmem>>, vector<1x8x8x4xf32>
    %197 = vector.shape_cast %196 : vector<1x8x8x4xf32> to vector<8x8x4xf32>
    %c0_110 = arith.constant 0 : index
    %c2_111 = arith.constant 2 : index
    %c3_112 = arith.constant 3 : index
    %c0_113 = arith.constant 0 : index
    %198 = tpu.strided_load %arg1[%c0_110, %c2_111, %c3_112, %c0_113] {strides = array<i32: 1, 2, 2, 1>} : memref<1x20x24x4xf32, #tpu.memory_space<vmem>>, vector<1x8x8x4xf32>
    %199 = vector.shape_cast %198 : vector<1x8x8x4xf32> to vector<8x8x4xf32>
    %c0_114 = arith.constant 0 : index
    %c3_115 = arith.constant 3 : index
    %c3_116 = arith.constant 3 : index
    %c0_117 = arith.constant 0 : index
    %200 = tpu.strided_load %arg1[%c0_114, %c3_115, %c3_116, %c0_117] {strides = array<i32: 1, 2, 2, 1>} : memref<1x20x24x4xf32, #tpu.memory_space<vmem>>, vector<1x8x8x4xf32>
    %201 = vector.shape_cast %200 : vector<1x8x8x4xf32> to vector<8x8x4xf32>
    %202 = tpu.concatenate %195, %197, %199, %201 in 2 : vector<8x8x4xf32>, vector<8x8x4xf32>, vector<8x8x4xf32>, vector<8x8x4xf32> -> vector<8x8x16xf32>
    %203 = vector.shape_cast %202 : vector<8x8x16xf32> to vector<64x16xf32>
    %c0_118 = arith.constant 0 : index
    %c0_119 = arith.constant 0 : index
    %204 = vector.load %arg7[%c0_118, %c0_119] : memref<16x128xf32, #tpu.memory_space<vmem>>, vector<16x128xf32>
    %cst_120 = arith.constant dense<0.000000e+00> : vector<64x128xf32>
    %205 = tpu.matmul %203, %204, %cst_120 {dimension_numbers = #tpu.dot_dimension_numbers<[1], [0], [0], [1], [0, 0, 1, 1], [], []>} : vector<64x16xf32>, vector<16x128xf32>, vector<64x128xf32> -> vector<64x128xf32>
    %206 = vector.shape_cast %186 : vector<8x8x8xf32> to vector<64x8xf32>
    %c0_121 = arith.constant 0 : index
    %c0_122 = arith.constant 0 : index
    %207 = vector.load %arg8[%c0_121, %c0_122] : memref<8x128xf32, #tpu.memory_space<vmem>>, vector<8x128xf32>
    %cst_123 = arith.constant dense<0.000000e+00> : vector<64x128xf32>
    %208 = tpu.matmul %206, %207, %cst_123 {dimension_numbers = #tpu.dot_dimension_numbers<[1], [0], [0], [1], [0, 0, 1, 1], [], []>} : vector<64x8xf32>, vector<8x128xf32>, vector<64x128xf32> -> vector<64x128xf32>
    %209 = arith.addf %205, %208 : vector<64x128xf32>
    %210 = vector.shape_cast %193 : vector<8x8x8xf32> to vector<64x8xf32>
    %c0_124 = arith.constant 0 : index
    %c0_125 = arith.constant 0 : index
    %211 = vector.load %arg9[%c0_124, %c0_125] : memref<8x128xf32, #tpu.memory_space<vmem>>, vector<8x128xf32>
    %cst_126 = arith.constant dense<0.000000e+00> : vector<64x128xf32>
    %212 = tpu.matmul %210, %211, %cst_126 {dimension_numbers = #tpu.dot_dimension_numbers<[1], [0], [0], [1], [0, 0, 1, 1], [], []>} : vector<64x8xf32>, vector<8x128xf32>, vector<64x128xf32> -> vector<64x128xf32>
    %213 = arith.addf %209, %212 : vector<64x128xf32>
    %c0_127 = arith.constant 0 : index
    %c0_128 = arith.constant 0 : index
    %214 = vector.load %arg10[%c0_127, %c0_128] : memref<1x128xf32, #tpu.memory_space<vmem>>, vector<1x128xf32>
    %215 = vector.broadcast %214 : vector<1x128xf32> to vector<64x128xf32>
    %216 = arith.addf %213, %215 : vector<64x128xf32>
    %c0_129 = arith.constant 0 : index
    %c0_130 = arith.constant 0 : index
    %c0_131 = arith.constant 0 : index
    %217 = vector.load %arg11[%c0_129, %c0_130, %c0_131] : memref<1x64x128xf32, #tpu.memory_space<vmem>>, vector<1x64x128xf32>
    %218 = vector.shape_cast %217 : vector<1x64x128xf32> to vector<64x128xf32>
    %219 = vector.shape_cast %216 : vector<64x128xf32> to vector<1x64x128xf32>
    tpu.vector_store %arg11[%c0_129, %c0_130, %c0_131], %219 {strides = array<i32>} : memref<1x64x128xf32, #tpu.memory_space<vmem>>, vector<1x64x128xf32>,
    return
  }
  func.func @transform_0(%arg0: i32) -> (i32, i32, i32, i32) {
    %c0_i32 = arith.constant 0 : i32
    %c0_i32_0 = arith.constant 0 : i32
    %c0_i32_1 = arith.constant 0 : i32
    %c0_i32_2 = arith.constant 0 : i32
    return %arg0, %c0_i32, %c0_i32_0, %c0_i32_1 : i32, i32, i32, i32
  }
  func.func @transform_1(%arg0: i32) -> (i32, i32) {
    %c0_i32 = arith.constant 0 : i32
    %c0_i32_0 = arith.constant 0 : i32
    %c0_i32_1 = arith.constant 0 : i32
    return %c0_i32, %c0_i32_0 : i32, i32
  }
  func.func @transform_2(%arg0: i32) -> (i32, i32) {
    %c0_i32 = arith.constant 0 : i32
    %c0_i32_0 = arith.constant 0 : i32
    %c0_i32_1 = arith.constant 0 : i32
    return %c0_i32, %c0_i32_0 : i32, i32
  }
  func.func @transform_3(%arg0: i32) -> (i32, i32) {
    %c0_i32 = arith.constant 0 : i32
    %c0_i32_0 = arith.constant 0 : i32
    %c0_i32_1 = arith.constant 0 : i32
    return %c0_i32, %c0_i32_0 : i32, i32
  }
  func.func @transform_4(%arg0: i32) -> (i32, i32) {
    %c0_i32 = arith.constant 0 : i32
    %c0_i32_0 = arith.constant 0 : i32
    %c0_i32_1 = arith.constant 0 : i32
    return %c0_i32, %c0_i32_0 : i32, i32
  }
  func.func @transform_5(%arg0: i32) -> (i32, i32) {
    %c0_i32 = arith.constant 0 : i32
    %c0_i32_0 = arith.constant 0 : i32
    %c0_i32_1 = arith.constant 0 : i32
    return %c0_i32, %c0_i32_0 : i32, i32
  }
  func.func @transform_6(%arg0: i32) -> (i32, i32) {
    %c0_i32 = arith.constant 0 : i32
    %c0_i32_0 = arith.constant 0 : i32
    %c0_i32_1 = arith.constant 0 : i32
    return %c0_i32, %c0_i32_0 : i32, i32
  }
  func.func @transform_7(%arg0: i32) -> (i32, i32) {
    %c0_i32 = arith.constant 0 : i32
    %c0_i32_0 = arith.constant 0 : i32
    %c0_i32_1 = arith.constant 0 : i32
    return %c0_i32, %c0_i32_0 : i32, i32
  }
  func.func @transform_8(%arg0: i32) -> (i32, i32) {
    %c0_i32 = arith.constant 0 : i32
    %c0_i32_0 = arith.constant 0 : i32
    %c0_i32_1 = arith.constant 0 : i32
    return %c0_i32, %c0_i32_0 : i32, i32
  }
  func.func @transform_9(%arg0: i32) -> (i32, i32) {
    %c0_i32 = arith.constant 0 : i32
    %c0_i32_0 = arith.constant 0 : i32
    %c0_i32_1 = arith.constant 0 : i32
    return %c0_i32, %c0_i32_0 : i32, i32
  }
  func.func @transform_10(%arg0: i32) -> (i32, i32, i32) {
    %c0_i32 = arith.constant 0 : i32
    %c0_i32_0 = arith.constant 0 : i32
    %c0_i32_1 = arith.constant 0 : i32
    return %arg0, %c0_i32, %c0_i32_0 : i32, i32, i32
  }
}

</mosaic_0001>

<llo_original>
// kernel: tpu_custom_call.1
$region0: #{tpu_custom_call.1}
  #allocation0 [shape = 'u32[]', space=smem, size = 0x4, offset = 0x4, fixed_abs, tag = 'smem constant byte address 0x4 - core index']
  #allocation1 [shape = 'u32[144,128]{1,0:T(1,128)}', space=vmem, size = 0x12000, scoped, tag = 'internal scratch']
  #allocation2 [shape = 'f32[20,24,8]{2,1,0:T(8,128)}', space=vmem, size = 0x3c000, scoped, tag = 'scratch operand']
  #allocation3 [shape = 'f32[18,18,8]{2,1,0:T(8,128)}', space=vmem, size = 0x36000, scoped, tag = 'scratch operand']
  %s0 = inlined_call_operand.vmem [shape: f32[2,20,24,4], index: 0, kind: input, shape index: {}]
  %s1 = inlined_call_operand.vmem [shape: f32[4,8], index: 1, kind: input, shape index: {}]
  %s2 = inlined_call_operand.vmem [shape: f32[9,8], index: 2, kind: input, shape index: {}]
  %s3 = inlined_call_operand.vmem [shape: f32[1,8], index: 3, kind: input, shape index: {}]
  %s4 = inlined_call_operand.vmem [shape: f32[9,8], index: 4, kind: input, shape index: {}]
  %s5 = inlined_call_operand.vmem [shape: f32[1,8], index: 5, kind: input, shape index: {}]
  %s6 = inlined_call_operand.vmem [shape: f32[16,128], index: 6, kind: input, shape index: {}]
  %s7 = inlined_call_operand.vmem [shape: f32[8,128], index: 7, kind: input, shape index: {}]
  %s8 = inlined_call_operand.vmem [shape: f32[8,128], index: 8, kind: input, shape index: {}]
  %s9 = inlined_call_operand.vmem [shape: f32[1,128], index: 9, kind: input, shape index: {}]
  %s10 = inlined_call_operand.hbm [shape: f32[2,64,128], index: 10, kind: output, shape index: {}]
  %s11 = sld [smem:[#allocation0]]
  $region73: #{tpu_custom_call.1} parent=0
    _
  %s13 = ssub.s32 1, %s11
  %s14 = scalar_select 0, %s13, %s11
  $region1: #{tpu_custom_call.1} parent=0
    #allocation4 [shape = 'u8[65536]{0}', space=vmem, size = 0x10000, scoped, tag = 'output window, operand 0']
    #allocation5 [shape = 's32[2]{0}', space=sflag, size = 0x8, scoped, tag = 'scoped memory for tpu_custom_call.1']
    %15 = vsyncpa [#allocation5], 0
    %s16 = scalar_lea.sflag [#allocation5], 1
    %17 = vsyncpa %s16, 0
    loop: start=0, step=1, limit=4
    $region2: #{tpu_custom_call.1} parent=1 // loop_pre_header
      _
    $region3: #{tpu_custom_call.1} parent=1 // loop_header
      %s19 = sphi 0, %s23
      %p20 = scmp.ge.s32.totalorder %s19, 4
      %s29 = sphi 0, %s31
      %s32 = sphi 0, %s29
      %s33 = sphi 0, %s32
      %s49 = sphi 0, %s33
      %s53 = sphi 0, %s53
      %s55 = sphi 0, %s53
      %s56 = sphi 0, %s55
      %s70 = sphi 0, %s56
      %s74 = sphi 0, %s74
      %s76 = sphi 0, %s74
      %s77 = sphi 0, %s76
      %s91 = sphi 0, %s77
      %s95 = sphi 0, %s95
      %s97 = sphi 0, %s95
      %s98 = sphi 0, %s97
      %s112 = sphi 0, %s98
      %s116 = sphi 0, %s116
      %s118 = sphi 0, %s116
      %s119 = sphi 0, %s118
      %s133 = sphi 0, %s119
      %s137 = sphi 0, %s137
      %s139 = sphi 0, %s137
      %s140 = sphi 0, %s139
      %s154 = sphi 0, %s140
      %s158 = sphi 0, %s158
      %s160 = sphi 0, %s158
      %s161 = sphi 0, %s160
      %s175 = sphi 0, %s161
      %s179 = sphi 0, %s179
      %s181 = sphi 0, %s179
      %s182 = sphi 0, %s181
      %s196 = sphi 0, %s182
      %s200 = sphi 0, %s200
      %s202 = sphi 0, %s200
      %s203 = sphi 0, %s202
      %s217 = sphi 0, %s203
      %s221 = sphi 0, %s221
      %s223 = sphi 0, %s221
      %s224 = sphi 0, %s223
      %s238 = sphi 0, %s224
      %s244 = sphi 0, %s246
      %s247 = sphi 0, %s244
      %s248 = sphi 0, %s247
      %s264 = sphi 0, %s248
    $region4: #{tpu_custom_call.1} parent=1 // loop_header_branch
      %22 = sbr.rel (%p20) target = $region8
    $region5: #{tpu_custom_call.1} parent=1 // loop_body
      %s24 = ssub.s32 %s19, 1
      %s25 = ssub.s32 %s19, 2
      %s26 = sadd.s32 %s19, 1
      %s27 = ssub.s32 %s19, %s26
      %p28 = scmp.eq.s32.totalorder %s27, 0
      %s30 = sadd.s32 %s29, 1
      %s31 = scalar_select %p28, %s29, %s30
      %p34 = pneg %p28
      %p35 = scmp.eq.s32.totalorder %s19, 1
      %p36 = por %p34, %p35
      %p37 = scmp.ne.s32.totalorder %s29, %s32
      %p38 = scmp.eq.s32.totalorder %s19, 0
      %p39 = por %p37, %p38
      %p40 = scmp.ne.s32.totalorder %s29, %s32
      %p41 = scmp.eq.s32.totalorder %s24, 1
      %p42 = por %p40, %p41
      %p43 = scmp.ne.s32.totalorder %s32, %s33
      %p44 = scmp.eq.s32.totalorder %s24, 0
      %p45 = por %p43, %p44
      %p46 = scmp.ne.s32.totalorder %s32, %s33
      %p47 = scmp.eq.s32.totalorder %s25, 1
      %p48 = por %p46, %p47
      %p50 = scmp.ne.s32.totalorder %s33, %s49
      %p51 = scmp.eq.s32.totalorder %s25, 0
      %p52 = por %p50, %p51
      %s54 = sadd.s32 %s53, 1
      %p57 = scmp.eq.s32.totalorder %s19, 1
      %p58 = scmp.ne.s32.totalorder %s53, %s55
      %p59 = scmp.eq.s32.totalorder %s19, 0
      %p60 = por %p58, %p59
      %p61 = scmp.ne.s32.totalorder %s53, %s55
      %p62 = scmp.eq.s32.totalorder %s24, 1
      %p63 = por %p61, %p62
      %p64 = scmp.ne.s32.totalorder %s55, %s56
      %p65 = scmp.eq.s32.totalorder %s24, 0
      %p66 = por %p64, %p65
      %p67 = scmp.ne.s32.totalorder %s55, %s56
      %p68 = scmp.eq.s32.totalorder %s25, 1
      %p69 = por %p67, %p68
      %p71 = scmp.ne.s32.totalorder %s56, %s70
      %p72 = scmp.eq.s32.totalorder %s25, 0
      %p73 = por %p71, %p72
      %s75 = sadd.s32 %s74, 1
      %p78 = scmp.eq.s32.totalorder %s19, 1
      %p79 = scmp.ne.s32.totalorder %s74, %s76
      %p80 = scmp.eq.s32.totalorder %s19, 0
      %p81 = por %p79, %p80
      %p82 = scmp.ne.s32.totalorder %s74, %s76
      %p83 = scmp.eq.s32.totalorder %s24, 1
      %p84 = por %p82, %p83
      %p85 = scmp.ne.s32.totalorder %s76, %s77
      %p86 = scmp.eq.s32.totalorder %s24, 0
      %p87 = por %p85, %p86
      %p88 = scmp.ne.s32.totalorder %s76, %s77
      %p89 = scmp.eq.s32.totalorder %s25, 1
      %p90 = por %p88, %p89
      %p92 = scmp.ne.s32.totalorder %s77, %s91
      %p93 = scmp.eq.s32.totalorder %s25, 0
      %p94 = por %p92, %p93
      %s96 = sadd.s32 %s95, 1
      %p99 = scmp.eq.s32.totalorder %s19, 1
      %p100 = scmp.ne.s32.totalorder %s95, %s97
      %p101 = scmp.eq.s32.totalorder %s19, 0
      %p102 = por %p100, %p101
      %p103 = scmp.ne.s32.totalorder %s95, %s97
      %p104 = scmp.eq.s32.totalorder %s24, 1
      %p105 = por %p103, %p104
      %p106 = scmp.ne.s32.totalorder %s97, %s98
      %p107 = scmp.eq.s32.totalorder %s24, 0
      %p108 = por %p106, %p107
      %p109 = scmp.ne.s32.totalorder %s97, %s98
      %p110 = scmp.eq.s32.totalorder %s25, 1
      %p111 = por %p109, %p110
      %p113 = scmp.ne.s32.totalorder %s98, %s112
      %p114 = scmp.eq.s32.totalorder %s25, 0
      %p115 = por %p113, %p114
      %s117 = sadd.s32 %s116, 1
      %p120 = scmp.eq.s32.totalorder %s19, 1
      %p121 = scmp.ne.s32.totalorder %s116, %s118
      %p122 = scmp.eq.s32.totalorder %s19, 0
      %p123 = por %p121, %p122
      %p124 = scmp.ne.s32.totalorder %s116, %s118
      %p125 = scmp.eq.s32.totalorder %s24, 1
      %p126 = por %p124, %p125
      %p127 = scmp.ne.s32.totalorder %s118, %s119
      %p128 = scmp.eq.s32.totalorder %s24, 0
      %p129 = por %p127, %p128
      %p130 = scmp.ne.s32.totalorder %s118, %s119
      %p131 = scmp.eq.s32.totalorder %s25, 1
      %p132 = por %p130, %p131
      %p134 = scmp.ne.s32.totalorder %s119, %s133
      %p135 = scmp.eq.s32.totalorder %s25, 0
      %p136 = por %p134, %p135
      %s138 = sadd.s32 %s137, 1
      %p141 = scmp.eq.s32.totalorder %s19, 1
      %p142 = scmp.ne.s32.totalorder %s137, %s139
      %p143 = scmp.eq.s32.totalorder %s19, 0
      %p144 = por %p142, %p143
      %p145 = scmp.ne.s32.totalorder %s137, %s139
      %p146 = scmp.eq.s32.totalorder %s24, 1
      %p147 = por %p145, %p146
      %p148 = scmp.ne.s32.totalorder %s139, %s140
      %p149 = scmp.eq.s32.totalorder %s24, 0
      %p150 = por %p148, %p149
      %p151 = scmp.ne.s32.totalorder %s139, %s140
      %p152 = scmp.eq.s32.totalorder %s25, 1
      %p153 = por %p151, %p152
      %p155 = scmp.ne.s32.totalorder %s140, %s154
      %p156 = scmp.eq.s32.totalorder %s25, 0
      %p157 = por %p155, %p156
      %s159 = sadd.s32 %s158, 1
      %p162 = scmp.eq.s32.totalorder %s19, 1
      %p163 = scmp.ne.s32.totalorder %s158, %s160
      %p164 = scmp.eq.s32.totalorder %s19, 0
      %p165 = por %p163, %p164
      %p166 = scmp.ne.s32.totalorder %s158, %s160
      %p167 = scmp.eq.s32.totalorder %s24, 1
      %p168 = por %p166, %p167
      %p169 = scmp.ne.s32.totalorder %s160, %s161
      %p170 = scmp.eq.s32.totalorder %s24, 0
      %p171 = por %p169, %p170
      %p172 = scmp.ne.s32.totalorder %s160, %s161
      %p173 = scmp.eq.s32.totalorder %s25, 1
      %p174 = por %p172, %p173
      %p176 = scmp.ne.s32.totalorder %s161, %s175
      %p177 = scmp.eq.s32.totalorder %s25, 0
      %p178 = por %p176, %p177
      %s180 = sadd.s32 %s179, 1
      %p183 = scmp.eq.s32.totalorder %s19, 1
      %p184 = scmp.ne.s32.totalorder %s179, %s181
      %p185 = scmp.eq.s32.totalorder %s19, 0
      %p186 = por %p184, %p185
      %p187 = scmp.ne.s32.totalorder %s179, %s181
      %p188 = scmp.eq.s32.totalorder %s24, 1
      %p189 = por %p187, %p188
      %p190 = scmp.ne.s32.totalorder %s181, %s182
      %p191 = scmp.eq.s32.totalorder %s24, 0
      %p192 = por %p190, %p191
      %p193 = scmp.ne.s32.totalorder %s181, %s182
      %p194 = scmp.eq.s32.totalorder %s25, 1
      %p195 = por %p193, %p194
      %p197 = scmp.ne.s32.totalorder %s182, %s196
      %p198 = scmp.eq.s32.totalorder %s25, 0
      %p199 = por %p197, %p198
      %s201 = sadd.s32 %s200, 1
      %p204 = scmp.eq.s32.totalorder %s19, 1
      %p205 = scmp.ne.s32.totalorder %s200, %s202
      %p206 = scmp.eq.s32.totalorder %s19, 0
      %p207 = por %p205, %p206
      %p208 = scmp.ne.s32.totalorder %s200, %s202
      %p209 = scmp.eq.s32.totalorder %s24, 1
      %p210 = por %p208, %p209
      %p211 = scmp.ne.s32.totalorder %s202, %s203
      %p212 = scmp.eq.s32.totalorder %s24, 0
      %p213 = por %p211, %p212
      %p214 = scmp.ne.s32.totalorder %s202, %s203
      %p215 = scmp.eq.s32.totalorder %s25, 1
      %p216 = por %p214, %p215
      %p218 = scmp.ne.s32.totalorder %s203, %s217
      %p219 = scmp.eq.s32.totalorder %s25, 0
      %p220 = por %p218, %p219
      %s222 = sadd.s32 %s221, 1
      %p225 = scmp.eq.s32.totalorder %s19, 1
      %p226 = scmp.ne.s32.totalorder %s221, %s223
      %p227 = scmp.eq.s32.totalorder %s19, 0
      %p228 = por %p226, %p227
      %p229 = scmp.ne.s32.totalorder %s221, %s223
      %p230 = scmp.eq.s32.totalorder %s24, 1
      %p231 = por %p229, %p230
      %p232 = scmp.ne.s32.totalorder %s223, %s224
      %p233 = scmp.eq.s32.totalorder %s24, 0
      %p234 = por %p232, %p233
      %p235 = scmp.ne.s32.totalorder %s223, %s224
      %p236 = scmp.eq.s32.totalorder %s25, 1
      %p237 = por %p235, %p236
      %p239 = scmp.ne.s32.totalorder %s224, %s238
      %p240 = scmp.eq.s32.totalorder %s25, 0
      %p241 = por %p239, %p240
      %s242 = ssub.s32 %s19, %s26
      %p243 = scmp.eq.s32.totalorder %s242, 0
      %s245 = sadd.s32 %s244, 1
      %s246 = scalar_select %p243, %s244, %s245
      %p249 = pneg %p243
      %p250 = scmp.eq.s32.totalorder %s19, 1
      %p251 = por %p249, %p250
      %p252 = scmp.ne.s32.totalorder %s244, %s247
      %p253 = scmp.eq.s32.totalorder %s19, 0
      %p254 = por %p252, %p253
      %p255 = scmp.ne.s32.totalorder %s244, %s247
      %p256 = scmp.eq.s32.totalorder %s24, 1
      %p257 = por %p255, %p256
      %p258 = scmp.ne.s32.totalorder %s247, %s248
      %p259 = scmp.eq.s32.totalorder %s24, 0
      %p260 = por %p258, %p259
      %p261 = scmp.ne.s32.totalorder %s247, %s248
      %p262 = scmp.eq.s32.totalorder %s25, 1
      %p263 = por %p261, %p262
      %p265 = scmp.ne.s32.totalorder %s248, %s264
      %p266 = scmp.eq.s32.totalorder %s25, 0
      %p267 = por %p265, %p266
      %p268 = scmp.le.s32.totalorder 1, %s19
      %p269 = scmp.lt.s32.totalorder %s19, 3
      %p270 = pnand %p268, %p269
      %p271 = pneg %p270
      // Predicated region
      $region9: #{tpu_custom_call.1} parent=5 // pred_check
        _
      $region10: #{tpu_custom_call.1} parent=5 // pred_check_branch
        %273 = sbr.rel (%p270) target = $region12
      $region11: #{tpu_custom_call.1} parent=5 // pred_region
        %s274 = ssub.s32 %s19, 1
        // Predicated region
        $region13: #{tpu_custom_call.1} parent=11 // pred_check
          %p275 = pneg %p66
        $region14: #{tpu_custom_call.1} parent=11 // pred_check_branch
          %277 = sbr.rel (%p275) target = $region16
        $region15: #{tpu_custom_call.1} parent=11 // pred_region
          _
        $region16: #{tpu_custom_call.1} parent=11 // pred_fallthru
          _
        // Predicated region
        $region17: #{tpu_custom_call.1} parent=11 // pred_check
          %p278 = pneg %p87
        $region18: #{tpu_custom_call.1} parent=11 // pred_check_branch
          %280 = sbr.rel (%p278) target = $region20
        $region19: #{tpu_custom_call.1} parent=11 // pred_region
          _
        $region20: #{tpu_custom_call.1} parent=11 // pred_fallthru
          _
        // Predicated region
        $region21: #{tpu_custom_call.1} parent=11 // pred_check
          %p281 = pneg %p108
        $region22: #{tpu_custom_call.1} parent=11 // pred_check_branch
          %283 = sbr.rel (%p281) target = $region24
        $region23: #{tpu_custom_call.1} parent=11 // pred_region
          _
        $region24: #{tpu_custom_call.1} parent=11 // pred_fallthru
          _
        // Predicated region
        $region25: #{tpu_custom_call.1} parent=11 // pred_check
          %p284 = pneg %p129
        $region26: #{tpu_custom_call.1} parent=11 // pred_check_branch
          %286 = sbr.rel (%p284) target = $region28
        $region27: #{tpu_custom_call.1} parent=11 // pred_region
          _
        $region28: #{tpu_custom_call.1} parent=11 // pred_fallthru
          _
        // Predicated region
        $region29: #{tpu_custom_call.1} parent=11 // pred_check
          %p287 = pneg %p150
        $region30: #{tpu_custom_call.1} parent=11 // pred_check_branch
          %289 = sbr.rel (%p287) target = $region32
        $region31: #{tpu_custom_call.1} parent=11 // pred_region
          _
        $region32: #{tpu_custom_call.1} parent=11 // pred_fallthru
          _
        // Predicated region
        $region33: #{tpu_custom_call.1} parent=11 // pred_check
          %p290 = pneg %p171
        $region34: #{tpu_custom_call.1} parent=11 // pred_check_branch
          %292 = sbr.rel (%p290) target = $region36
        $region35: #{tpu_custom_call.1} parent=11 // pred_region
          _
        $region36: #{tpu_custom_call.1} parent=11 // pred_fallthru
          _
        // Predicated region
        $region37: #{tpu_custom_call.1} parent=11 // pred_check
          %p293 = pneg %p192
        $region38: #{tpu_custom_call.1} parent=11 // pred_check_branch
          %295 = sbr.rel (%p293) target = $region40
        $region39: #{tpu_custom_call.1} parent=11 // pred_region
          _
        $region40: #{tpu_custom_call.1} parent=11 // pred_fallthru
          _
        // Predicated region
        $region41: #{tpu_custom_call.1} parent=11 // pred_check
          %p296 = pneg %p213
        $region42: #{tpu_custom_call.1} parent=11 // pred_check_branch
          %298 = sbr.rel (%p296) target = $region44
        $region43: #{tpu_custom_call.1} parent=11 // pred_region
          _
        $region44: #{tpu_custom_call.1} parent=11 // pred_fallthru
          _
        // Predicated region
        $region45: #{tpu_custom_call.1} parent=11 // pred_check
          %p299 = pneg %p234
        $region46: #{tpu_custom_call.1} parent=11 // pred_check_branch
          %301 = sbr.rel (%p299) target = $region48
        $region47: #{tpu_custom_call.1} parent=11 // pred_region
          _
        $region48: #{tpu_custom_call.1} parent=11 // pred_fallthru
          _
      $region12: #{tpu_custom_call.1} parent=5 // pred_fallthru
        _
      %p302 = scmp.lt.s32.totalorder %s19, 2
      // Predicated region
      $region49: #{tpu_custom_call.1} parent=5 // pred_check
        %p303 = pneg %p302
      $region50: #{tpu_custom_call.1} parent=5 // pred_check_branch
        %305 = sbr.rel (%p303) target = $region52
      $region51: #{tpu_custom_call.1} parent=5 // pred_region
        // Predicated region
        $region53: #{tpu_custom_call.1} parent=51 // pred_check
          %p306 = pneg %p39
        $region54: #{tpu_custom_call.1} parent=51 // pred_check_branch
          %308 = sbr.rel (%p306) target = $region56
        $region55: #{tpu_custom_call.1} parent=51 // pred_region
          %p309 = scmp.lt.s32.totalorder %s19, 1
          %s310 = scalar_select %p309, %s19, 1
          %s311 = smul.addr %s310, 60
          %s312 = smul.addr %s311, 8
          %s313 = scalar_lea.vmem %s0, %s312
        $region56: #{tpu_custom_call.1} parent=51 // pred_fallthru
          _
      $region52: #{tpu_custom_call.1} parent=5 // pred_fallthru
        _
      %p314 = scmp.le.s32.totalorder 1, %s19
      %p315 = scmp.lt.s32.totalorder %s19, 3
      %p316 = pnand %p314, %p315
      %p317 = pneg %p316
      // Predicated region
      $region57: #{tpu_custom_call.1} parent=5 // pred_check
        _
      $region58: #{tpu_custom_call.1} parent=5 // pred_check_branch
        %319 = sbr.rel (%p316) target = $region60
      $region59: #{tpu_custom_call.1} parent=5 // pred_region
        %s320 = ssub.s32 %s19, 1
        %p321 = scmp.lt.s32.totalorder %s24, 1
        %s322 = scalar_select %p321, %s24, 1
        %s323 = smul.addr %s322, 60
        %s324 = smul.addr %s323, 8
        %s325 = scalar_lea.vmem %s0, %s324
        %p326 = pneg %p45
        %p327 = pneg %p42
        %p328 = pneg %p66
        %p329 = pneg %p63
        %p330 = pneg %p87
        %p331 = pneg %p84
        %p332 = pneg %p108
        %p333 = pneg %p105
        %p334 = pneg %p129
        %p335 = pneg %p126
        %p336 = pneg %p150
        %p337 = pneg %p147
        %p338 = pneg %p171
        %p339 = pneg %p168
        %p340 = pneg %p192
        %p341 = pneg %p189
        %p342 = pneg %p213
        %p343 = pneg %p210
        %p344 = pneg %p234
        %p345 = pneg %p231
        %p346 = pneg %p260
        %p347 = pneg %p257
        %s348 = sand.u32 %s247, 1
        %s349 = scalar_lea.sflag [#allocation5], %s348
        %s350 = sand.u32 %s247, 1
        %s351 = smul.addr %s350, 64
        %s352 = scalar_lea.vmem [#allocation4], %s351
        %p353 = scmp.lt.s32.totalorder %s24, 1
        %s354 = scalar_select %p353, %s24, 1
        %s355 = smul.addr %s354, 60
        %s356 = smul.addr %s355, 8
        %s357 = scalar_lea.vmem %s0, %s356
        %v358 = vld [vmem:[%s357] sm:$0xff]
        %v359 = vld [vmem:[%s357 + $0x8] sm:$0xff]
        %v360 = vld [vmem:[%s357 + $0x10] sm:$0xff]
        %v361 = vld [vmem:[%s357 + $0x18] sm:$0xff]
        %v362 = vld [vmem:[%s357 + $0x20] sm:$0xff]
        %v363 = vld [vmem:[%s357 + $0x28] sm:$0xff]
        %v364 = vld [vmem:[%s357 + $0x30] sm:$0xff]
        %v365 = vld [vmem:[%s357 + $0x38] sm:$0xff]
        %v366 = vld [vmem:[%s357 + $0x40] sm:$0xff]
        %v367 = vld [vmem:[%s357 + $0x48] sm:$0xff]
        %v368 = vld [vmem:[%s357 + $0x50] sm:$0xff]
        %v369 = vld [vmem:[%s357 + $0x58] sm:$0xff]
        %v370 = vld [vmem:[%s357 + $0x60] sm:$0xff]
        %v371 = vld [vmem:[%s357 + $0x68] sm:$0xff]
        %v372 = vld [vmem:[%s357 + $0x70] sm:$0xff]
        %v373 = vld [vmem:[%s357 + $0x78] sm:$0xff]
        %v374 = vld [vmem:[%s357 + $0x80] sm:$0xff]
        %v375 = vld [vmem:[%s357 + $0x88] sm:$0xff]
        %v376 = vld [vmem:[%s357 + $0x90] sm:$0xff]
        %v377 = vld [vmem:[%s357 + $0x98] sm:$0xff]
        %v378 = vld [vmem:[%s357 + $0xa0] sm:$0xff]
        %v379 = vld [vmem:[%s357 + $0xa8] sm:$0xff]
        %v380 = vld [vmem:[%s357 + $0xb0] sm:$0xff]
        %v381 = vld [vmem:[%s357 + $0xb8] sm:$0xff]
        %v382 = vld [vmem:[%s357 + $0xc0] sm:$0xff]
        %v383 = vld [vmem:[%s357 + $0xc8] sm:$0xff]
        %v384 = vld [vmem:[%s357 + $0xd0] sm:$0xff]
        %v385 = vld [vmem:[%s357 + $0xd8] sm:$0xff]
        %v386 = vld [vmem:[%s357 + $0xe0] sm:$0xff]
        %v387 = vld [vmem:[%s357 + $0xe8] sm:$0xff]
        %v388 = vld [vmem:[%s357 + $0xf0] sm:$0xff]
        %v389 = vld [vmem:[%s357 + $0xf8] sm:$0xff]
        %v390 = vld [vmem:[%s357 + $0x100] sm:$0xff]
        %v391 = vld [vmem:[%s357 + $0x108] sm:$0xff]
        %v392 = vld [vmem:[%s357 + $0x110] sm:$0xff]
        %v393 = vld [vmem:[%s357 + $0x118] sm:$0xff]
        %v394 = vld [vmem:[%s357 + $0x120] sm:$0xff]
        %v395 = vld [vmem:[%s357 + $0x128] sm:$0xff]
        %v396 = vld [vmem:[%s357 + $0x130] sm:$0xff]
        %v397 = vld [vmem:[%s357 + $0x138] sm:$0xff]
        %v398 = vld [vmem:[%s357 + $0x140] sm:$0xff]
        %v399 = vld [vmem:[%s357 + $0x148] sm:$0xff]
        %v400 = vld [vmem:[%s357 + $0x150] sm:$0xff]
        %v401 = vld [vmem:[%s357 + $0x158] sm:$0xff]
        %v402 = vld [vmem:[%s357 + $0x160] sm:$0xff]
        %v403 = vld [vmem:[%s357 + $0x168] sm:$0xff]
        %v404 = vld [vmem:[%s357 + $0x170] sm:$0xff]
        %v405 = vld [vmem:[%s357 + $0x178] sm:$0xff]
        %v406 = vld [vmem:[%s357 + $0x180] sm:$0xff]
        %v407 = vld [vmem:[%s357 + $0x188] sm:$0xff]
        %v408 = vld [vmem:[%s357 + $0x190] sm:$0xff]
        %v409 = vld [vmem:[%s357 + $0x198] sm:$0xff]
        %v410 = vld [vmem:[%s357 + $0x1a0] sm:$0xff]
        %v411 = vld [vmem:[%s357 + $0x1a8] sm:$0xff]
        %v412 = vld [vmem:[%s357 + $0x1b0] sm:$0xff]
        %v413 = vld [vmem:[%s357 + $0x1b8] sm:$0xff]
        %v414 = vld [vmem:[%s357 + $0x1c0] sm:$0xff]
        %v415 = vld [vmem:[%s357 + $0x1c8] sm:$0xff]
        %v416 = vld [vmem:[%s357 + $0x1d0] sm:$0xff]
        %v417 = vld [vmem:[%s357 + $0x1d8] sm:$0xff]
        %v418 = vld [vmem:[%s1] sm:$0xf]
        %vm419 = vcmask 31744
        %v421 = vsel %vm419, %v358, 0
        %v424 = vsel %vm419, %v359, 0
        %v427 = vsel %vm419, %v360, 0
        %v430 = vsel %vm419, %v361, 0
        %v433 = vsel %vm419, %v362, 0
        %v436 = vsel %vm419, %v363, 0
        %v439 = vsel %vm419, %v364, 0
        %v442 = vsel %vm419, %v365, 0
        %v445 = vsel %vm419, %v366, 0
        %v448 = vsel %vm419, %v367, 0
        %v451 = vsel %vm419, %v368, 0
        %v454 = vsel %vm419, %v369, 0
        %v457 = vsel %vm419, %v370, 0
        %v460 = vsel %vm419, %v371, 0
        %v463 = vsel %vm419, %v372, 0
        %v466 = vsel %vm419, %v373, 0
        %v469 = vsel %vm419, %v374, 0
        %v472 = vsel %vm419, %v375, 0
        %v475 = vsel %vm419, %v376, 0
        %v478 = vsel %vm419, %v377, 0
        %v481 = vsel %vm419, %v378, 0
        %v484 = vsel %vm419, %v379, 0
        %v487 = vsel %vm419, %v380, 0
        %v490 = vsel %vm419, %v381, 0
        %v493 = vsel %vm419, %v382, 0
        %v496 = vsel %vm419, %v383, 0
        %v499 = vsel %vm419, %v384, 0
        %v502 = vsel %vm419, %v385, 0
        %v505 = vsel %vm419, %v386, 0
        %v508 = vsel %vm419, %v387, 0
        %v511 = vsel %vm419, %v388, 0
        %v514 = vsel %vm419, %v389, 0
        %v517 = vsel %vm419, %v390, 0
        %v520 = vsel %vm419, %v391, 0
        %v523 = vsel %vm419, %v392, 0
        %v526 = vsel %vm419, %v393, 0
        %v529 = vsel %vm419, %v394, 0
        %v532 = vsel %vm419, %v395, 0
        %v535 = vsel %vm419, %v396, 0
        %v538 = vsel %vm419, %v397, 0
        %v541 = vsel %vm419, %v398, 0
        %v544 = vsel %vm419, %v399, 0
        %v547 = vsel %vm419, %v400, 0
        %v550 = vsel %vm419, %v401, 0
        %v553 = vsel %vm419, %v402, 0
        %v556 = vsel %vm419, %v403, 0
        %v559 = vsel %vm419, %v404, 0
        %v562 = vsel %vm419, %v405, 0
        %v565 = vsel %vm419, %v406, 0
        %v568 = vsel %vm419, %v407, 0
        %v571 = vsel %vm419, %v408, 0
        %v574 = vsel %vm419, %v409, 0
        %v577 = vsel %vm419, %v410, 0
        %v580 = vsel %vm419, %v411, 0
        %v583 = vsel %vm419, %v412, 0
        %v586 = vsel %vm419, %v413, 0
        %v589 = vsel %vm419, %v414, 0
        %v592 = vsel %vm419, %v415, 0
        %v595 = vsel %vm419, %v416, 0
        %v598 = vsel %vm419, %v417, 0
        %vm600 = vcmask 1043456
        %v602 = vsel %vm600, %v418, 0
        %604 = vmatprep.subr.mxu0 0.0
        %605 = vmatpush1.msra.mxu0 0.0
        %606 = vmatprep.subr.mxu0 0.0
        %607 = vmatpush1.msra.mxu0 0.0
        %608 = vmatprep.subr.mxu0 0.0
        %609 = vmatpush1.msra.mxu0 0.0
        %610 = vmatprep.subr.mxu0 0.0
        %611 = vmatpush1.msra.mxu0 0.0
        %612 = vmatprep.subr.mxu0 0.0
        %613 = vmatpush1.msra.mxu0 0.0
        %614 = vmatprep.subr.mxu0 0.0
        %615 = vmatpush1.msra.mxu0 0.0
        %616 = vmatprep.subr.mxu0 0.0
        %617 = vmatpush1.msra.mxu0 0.0
        %618 = vmatprep.subr.mxu0 0.0
        %619 = vmatpush1.msra.mxu0 0.0
        %620 = vmatprep.subr.mxu0 0.0
        %621 = vmatpush1.msra.mxu0 0.0
        %622 = vmatprep.subr.mxu0 0.0
        %623 = vmatpush1.msra.mxu0 0.0
        %624 = vmatprep.subr.mxu0 0.0
        %625 = vmatpush1.msra.mxu0 0.0
        %626 = vmatprep.subr.mxu0 0.0
        %627 = vmatpush1.msra.mxu0 0.0
        %628 = vmatprep.subr.mxu0 0.0
        %629 = vmatpush1.msra.mxu0 0.0
        %630 = vmatprep.subr.mxu0 0.0
        %631 = vmatpush1.msra.mxu0 0.0
        %632 = vmatprep.subr.mxu0 0.0
        %633 = vmatpush1.msra.mxu0 0.0
        %634 = vmatprep.subr.mxu0 0.0
        %635 = vmatpush1.msra.mxu0 %v602
        %636 = vmatprep.subr.mxu0 0.0
        %637 = vmatpush2.msra.mxu0 0.0
        %638 = vmatprep.subr.mxu0 0.0
        %639 = vmatpush2.msra.mxu0 0.0
        %640 = vmatprep.subr.mxu0 0.0
        %641 = vmatpush2.msra.mxu0 0.0
        %642 = vmatprep.subr.mxu0 0.0
        %643 = vmatpush2.msra.mxu0 0.0
        %644 = vmatprep.subr.mxu0 0.0
        %645 = vmatpush2.msra.mxu0 0.0
        %646 = vmatprep.subr.mxu0 0.0
        %647 = vmatpush2.msra.mxu0 0.0
        %648 = vmatprep.subr.mxu0 0.0
        %649 = vmatpush2.msra.mxu0 0.0
        %650 = vmatprep.subr.mxu0 0.0
        %651 = vmatpush2.msra.mxu0 0.0
        %652 = vmatprep.subr.mxu0 0.0
        %653 = vmatpush2.msra.mxu0 0.0
        %654 = vmatprep.subr.mxu0 0.0
        %655 = vmatpush2.msra.mxu0 0.0
        %656 = vmatprep.subr.mxu0 0.0
        %657 = vmatpush2.msra.mxu0 0.0
        %658 = vmatprep.subr.mxu0 0.0
        %659 = vmatpush2.msra.mxu0 0.0
        %660 = vmatprep.subr.mxu0 0.0
        %661 = vmatpush2.msra.mxu0 0.0
        %662 = vmatprep.subr.mxu0 0.0
        %663 = vmatpush2.msra.mxu0 0.0
        %664 = vmatprep.subr.mxu0 0.0
        %665 = vmatpush2.msra.mxu0 0.0
        %666 = vmatprep.subr.mxu0 0.0
        %667 = vmatpush2.msra.mxu0 0.0
        %668 = vmatprep.mubr.f32.mxu0 0.0
        %669 = vmatmul.mubr.f32.gmra.mxu0 %v421
        %v670 = vpop.f32.mrf.mxu0
        %v671 = vadd.f32 0.0, %v670
        %v672 = vpop.f32.mrf.mxu0
        %673 = vmatprep.mubr.f32.mxu0 0.0
        %674 = vmatmul.mubr.f32.gmra.mxu0 %v424
        %v675 = vpop.f32.mrf.mxu0
        %v676 = vadd.f32 0.0, %v675
        %v677 = vpop.f32.mrf.mxu0
        %678 = vmatprep.mubr.f32.mxu0 0.0
        %679 = vmatmul.mubr.f32.gmra.mxu0 %v427
        %v680 = vpop.f32.mrf.mxu0
        %v681 = vadd.f32 0.0, %v680
        %v682 = vpop.f32.mrf.mxu0
        %683 = vmatprep.mubr.f32.mxu0 0.0
        %684 = vmatmul.mubr.f32.gmra.mxu0 %v430
        %v685 = vpop.f32.mrf.mxu0
        %v686 = vadd.f32 0.0, %v685
        %v687 = vpop.f32.mrf.mxu0
        %688 = vmatprep.mubr.f32.mxu0 0.0
        %689 = vmatmul.mubr.f32.gmra.mxu0 %v433
        %v690 = vpop.f32.mrf.mxu0
        %v691 = vadd.f32 0.0, %v690
        %v692 = vpop.f32.mrf.mxu0
        %693 = vmatprep.mubr.f32.mxu0 0.0
        %694 = vmatmul.mubr.f32.gmra.mxu0 %v436
        %v695 = vpop.f32.mrf.mxu0
        %v696 = vadd.f32 0.0, %v695
        %v697 = vpop.f32.mrf.mxu0
        %698 = vmatprep.mubr.f32.mxu0 0.0
        %699 = vmatmul.mubr.f32.gmra.mxu0 %v439
        %v700 = vpop.f32.mrf.mxu0
        %v701 = vadd.f32 0.0, %v700
        %v702 = vpop.f32.mrf.mxu0
        %703 = vmatprep.mubr.f32.mxu0 0.0
        %704 = vmatmul.mubr.f32.gmra.mxu0 %v442
        %v705 = vpop.f32.mrf.mxu0
        %v706 = vadd.f32 0.0, %v705
        %v707 = vpop.f32.mrf.mxu0
        %708 = vmatprep.mubr.f32.mxu0 0.0
        %709 = vmatmul.mubr.f32.gmra.mxu0 %v445
        %v710 = vpop.f32.mrf.mxu0
        %v711 = vadd.f32 0.0, %v710
        %v712 = vpop.f32.mrf.mxu0
        %713 = vmatprep.mubr.f32.mxu0 0.0
        %714 = vmatmul.mubr.f32.gmra.mxu0 %v448
        %v715 = vpop.f32.mrf.mxu0
        %v716 = vadd.f32 0.0, %v715
        %v717 = vpop.f32.mrf.mxu0
        %718 = vmatprep.mubr.f32.mxu0 0.0
        %719 = vmatmul.mubr.f32.gmra.mxu0 %v451
        %v720 = vpop.f32.mrf.mxu0
        %v721 = vadd.f32 0.0, %v720
        %v722 = vpop.f32.mrf.mxu0
        %723 = vmatprep.mubr.f32.mxu0 0.0
        %724 = vmatmul.mubr.f32.gmra.mxu0 %v454
        %v725 = vpop.f32.mrf.mxu0
        %v726 = vadd.f32 0.0, %v725
        %v727 = vpop.f32.mrf.mxu0
        %728 = vmatprep.mubr.f32.mxu0 0.0
        %729 = vmatmul.mubr.f32.gmra.mxu0 %v457
        %v730 = vpop.f32.mrf.mxu0
        %v731 = vadd.f32 0.0, %v730
        %v732 = vpop.f32.mrf.mxu0
        %733 = vmatprep.mubr.f32.mxu0 0.0
        %734 = vmatmul.mubr.f32.gmra.mxu0 %v460
        %v735 = vpop.f32.mrf.mxu0
        %v736 = vadd.f32 0.0, %v735
        %v737 = vpop.f32.mrf.mxu0
        %738 = vmatprep.mubr.f32.mxu0 0.0
        %739 = vmatmul.mubr.f32.gmra.mxu0 %v463
        %v740 = vpop.f32.mrf.mxu0
        %v741 = vadd.f32 0.0, %v740
        %v742 = vpop.f32.mrf.mxu0
        %743 = vmatprep.mubr.f32.mxu0 0.0
        %744 = vmatmul.mubr.f32.gmra.mxu0 %v466
        %v745 = vpop.f32.mrf.mxu0
        %v746 = vadd.f32 0.0, %v745
        %v747 = vpop.f32.mrf.mxu0
        %748 = vmatprep.mubr.f32.mxu0 0.0
        %749 = vmatmul.mubr.f32.gmra.mxu0 %v469
        %v750 = vpop.f32.mrf.mxu0
        %v751 = vadd.f32 0.0, %v750
        %v752 = vpop.f32.mrf.mxu0
        %753 = vmatprep.mubr.f32.mxu0 0.0
        %754 = vmatmul.mubr.f32.gmra.mxu0 %v472
        %v755 = vpop.f32.mrf.mxu0
        %v756 = vadd.f32 0.0, %v755
        %v757 = vpop.f32.mrf.mxu0
        %758 = vmatprep.mubr.f32.mxu0 0.0
        %759 = vmatmul.mubr.f32.gmra.mxu0 %v475
        %v760 = vpop.f32.mrf.mxu0
        %v761 = vadd.f32 0.0, %v760
        %v762 = vpop.f32.mrf.mxu0
        %763 = vmatprep.mubr.f32.mxu0 0.0
        %764 = vmatmul.mubr.f32.gmra.mxu0 %v478
        %v765 = vpop.f32.mrf.mxu0
        %v766 = vadd.f32 0.0, %v765
        %v767 = vpop.f32.mrf.mxu0
        %768 = vmatprep.mubr.f32.mxu0 0.0
        %769 = vmatmul.mubr.f32.gmra.mxu0 %v481
        %v770 = vpop.f32.mrf.mxu0
        %v771 = vadd.f32 0.0, %v770
        %v772 = vpop.f32.mrf.mxu0
        %773 = vmatprep.mubr.f32.mxu0 0.0
        %774 = vmatmul.mubr.f32.gmra.mxu0 %v484
        %v775 = vpop.f32.mrf.mxu0
        %v776 = vadd.f32 0.0, %v775
        %v777 = vpop.f32.mrf.mxu0
        %778 = vmatprep.mubr.f32.mxu0 0.0
        %779 = vmatmul.mubr.f32.gmra.mxu0 %v487
        %v780 = vpop.f32.mrf.mxu0
        %v781 = vadd.f32 0.0, %v780
        %v782 = vpop.f32.mrf.mxu0
        %783 = vmatprep.mubr.f32.mxu0 0.0
        %784 = vmatmul.mubr.f32.gmra.mxu0 %v490
        %v785 = vpop.f32.mrf.mxu0
        %v786 = vadd.f32 0.0, %v785
        %v787 = vpop.f32.mrf.mxu0
        %788 = vmatprep.mubr.f32.mxu0 0.0
        %789 = vmatmul.mubr.f32.gmra.mxu0 %v493
        %v790 = vpop.f32.mrf.mxu0
        %v791 = vadd.f32 0.0, %v790
        %v792 = vpop.f32.mrf.mxu0
        %793 = vmatprep.mubr.f32.mxu0 0.0
        %794 = vmatmul.mubr.f32.gmra.mxu0 %v496
        %v795 = vpop.f32.mrf.mxu0
        %v796 = vadd.f32 0.0, %v795
        %v797 = vpop.f32.mrf.mxu0
        %798 = vmatprep.mubr.f32.mxu0 0.0
        %799 = vmatmul.mubr.f32.gmra.mxu0 %v499
        %v800 = vpop.f32.mrf.mxu0
        %v801 = vadd.f32 0.0, %v800
        %v802 = vpop.f32.mrf.mxu0
        %803 = vmatprep.mubr.f32.mxu0 0.0
        %804 = vmatmul.mubr.f32.gmra.mxu0 %v502
        %v805 = vpop.f32.mrf.mxu0
        %v806 = vadd.f32 0.0, %v805
        %v807 = vpop.f32.mrf.mxu0
        %808 = vmatprep.mubr.f32.mxu0 0.0
        %809 = vmatmul.mubr.f32.gmra.mxu0 %v505
        %v810 = vpop.f32.mrf.mxu0
        %v811 = vadd.f32 0.0, %v810
        %v812 = vpop.f32.mrf.mxu0
        %813 = vmatprep.mubr.f32.mxu0 0.0
        %814 = vmatmul.mubr.f32.gmra.mxu0 %v508
        %v815 = vpop.f32.mrf.mxu0
        %v816 = vadd.f32 0.0, %v815
        %v817 = vpop.f32.mrf.mxu0
        %818 = vmatprep.mubr.f32.mxu0 0.0
        %819 = vmatmul.mubr.f32.gmra.mxu0 %v511
        %v820 = vpop.f32.mrf.mxu0
        %v821 = vadd.f32 0.0, %v820
        %v822 = vpop.f32.mrf.mxu0
        %823 = vmatprep.mubr.f32.mxu0 0.0
        %824 = vmatmul.mubr.f32.gmra.mxu0 %v514
        %v825 = vpop.f32.mrf.mxu0
        %v826 = vadd.f32 0.0, %v825
        %v827 = vpop.f32.mrf.mxu0
        %828 = vmatprep.mubr.f32.mxu0 0.0
        %829 = vmatmul.mubr.f32.gmra.mxu0 %v517
        %v830 = vpop.f32.mrf.mxu0
        %v831 = vadd.f32 0.0, %v830
        %v832 = vpop.f32.mrf.mxu0
        %833 = vmatprep.mubr.f32.mxu0 0.0
        %834 = vmatmul.mubr.f32.gmra.mxu0 %v520
        %v835 = vpop.f32.mrf.mxu0
        %v836 = vadd.f32 0.0, %v835
        %v837 = vpop.f32.mrf.mxu0
        %838 = vmatprep.mubr.f32.mxu0 0.0
        %839 = vmatmul.mubr.f32.gmra.mxu0 %v523
        %v840 = vpop.f32.mrf.mxu0
        %v841 = vadd.f32 0.0, %v840
        %v842 = vpop.f32.mrf.mxu0
        %843 = vmatprep.mubr.f32.mxu0 0.0
        %844 = vmatmul.mubr.f32.gmra.mxu0 %v526
        %v845 = vpop.f32.mrf.mxu0
        %v846 = vadd.f32 0.0, %v845
        %v847 = vpop.f32.mrf.mxu0
        %848 = vmatprep.mubr.f32.mxu0 0.0
        %849 = vmatmul.mubr.f32.gmra.mxu0 %v529
        %v850 = vpop.f32.mrf.mxu0
        %v851 = vadd.f32 0.0, %v850
        %v852 = vpop.f32.mrf.mxu0
        %853 = vmatprep.mubr.f32.mxu0 0.0
        %854 = vmatmul.mubr.f32.gmra.mxu0 %v532
        %v855 = vpop.f32.mrf.mxu0
        %v856 = vadd.f32 0.0, %v855
        %v857 = vpop.f32.mrf.mxu0
        %858 = vmatprep.mubr.f32.mxu0 0.0
        %859 = vmatmul.mubr.f32.gmra.mxu0 %v535
        %v860 = vpop.f32.mrf.mxu0
        %v861 = vadd.f32 0.0, %v860
        %v862 = vpop.f32.mrf.mxu0
        %863 = vmatprep.mubr.f32.mxu0 0.0
        %864 = vmatmul.mubr.f32.gmra.mxu0 %v538
        %v865 = vpop.f32.mrf.mxu0
        %v866 = vadd.f32 0.0, %v865
        %v867 = vpop.f32.mrf.mxu0
        %868 = vmatprep.mubr.f32.mxu0 0.0
        %869 = vmatmul.mubr.f32.gmra.mxu0 %v541
        %v870 = vpop.f32.mrf.mxu0
        %v871 = vadd.f32 0.0, %v870
        %v872 = vpop.f32.mrf.mxu0
        %873 = vmatprep.mubr.f32.mxu0 0.0
        %874 = vmatmul.mubr.f32.gmra.mxu0 %v544
        %v875 = vpop.f32.mrf.mxu0
        %v876 = vadd.f32 0.0, %v875
        %v877 = vpop.f32.mrf.mxu0
        %878 = vmatprep.mubr.f32.mxu0 0.0
        %879 = vmatmul.mubr.f32.gmra.mxu0 %v547
        %v880 = vpop.f32.mrf.mxu0
        %v881 = vadd.f32 0.0, %v880
        %v882 = vpop.f32.mrf.mxu0
        %883 = vmatprep.mubr.f32.mxu0 0.0
        %884 = vmatmul.mubr.f32.gmra.mxu0 %v550
        %v885 = vpop.f32.mrf.mxu0
        %v886 = vadd.f32 0.0, %v885
        %v887 = vpop.f32.mrf.mxu0
        %888 = vmatprep.mubr.f32.mxu0 0.0
        %889 = vmatmul.mubr.f32.gmra.mxu0 %v553
        %v890 = vpop.f32.mrf.mxu0
        %v891 = vadd.f32 0.0, %v890
        %v892 = vpop.f32.mrf.mxu0
        %893 = vmatprep.mubr.f32.mxu0 0.0
        %894 = vmatmul.mubr.f32.gmra.mxu0 %v556
        %v895 = vpop.f32.mrf.mxu0
        %v896 = vadd.f32 0.0, %v895
        %v897 = vpop.f32.mrf.mxu0
        %898 = vmatprep.mubr.f32.mxu0 0.0
        %899 = vmatmul.mubr.f32.gmra.mxu0 %v559
        %v900 = vpop.f32.mrf.mxu0
        %v901 = vadd.f32 0.0, %v900
        %v902 = vpop.f32.mrf.mxu0
        %903 = vmatprep.mubr.f32.mxu0 0.0
        %904 = vmatmul.mubr.f32.gmra.mxu0 %v562
        %v905 = vpop.f32.mrf.mxu0
        %v906 = vadd.f32 0.0, %v905
        %v907 = vpop.f32.mrf.mxu0
        %908 = vmatprep.mubr.f32.mxu0 0.0
        %909 = vmatmul.mubr.f32.gmra.mxu0 %v565
        %v910 = vpop.f32.mrf.mxu0
        %v911 = vadd.f32 0.0, %v910
        %v912 = vpop.f32.mrf.mxu0
        %913 = vmatprep.mubr.f32.mxu0 0.0
        %914 = vmatmul.mubr.f32.gmra.mxu0 %v568
        %v915 = vpop.f32.mrf.mxu0
        %v916 = vadd.f32 0.0, %v915
        %v917 = vpop.f32.mrf.mxu0
        %918 = vmatprep.mubr.f32.mxu0 0.0
        %919 = vmatmul.mubr.f32.gmra.mxu0 %v571
        %v920 = vpop.f32.mrf.mxu0
        %v921 = vadd.f32 0.0, %v920
        %v922 = vpop.f32.mrf.mxu0
        %923 = vmatprep.mubr.f32.mxu0 0.0
        %924 = vmatmul.mubr.f32.gmra.mxu0 %v574
        %v925 = vpop.f32.mrf.mxu0
        %v926 = vadd.f32 0.0, %v925
        %v927 = vpop.f32.mrf.mxu0
        %928 = vmatprep.mubr.f32.mxu0 0.0
        %929 = vmatmul.mubr.f32.gmra.mxu0 %v577
        %v930 = vpop.f32.mrf.mxu0
        %v931 = vadd.f32 0.0, %v930
        %v932 = vpop.f32.mrf.mxu0
        %933 = vmatprep.mubr.f32.mxu0 0.0
        %934 = vmatmul.mubr.f32.gmra.mxu0 %v580
        %v935 = vpop.f32.mrf.mxu0
        %v936 = vadd.f32 0.0, %v935
        %v937 = vpop.f32.mrf.mxu0
        %938 = vmatprep.mubr.f32.mxu0 0.0
        %939 = vmatmul.mubr.f32.gmra.mxu0 %v583
        %v940 = vpop.f32.mrf.mxu0
        %v941 = vadd.f32 0.0, %v940
        %v942 = vpop.f32.mrf.mxu0
        %943 = vmatprep.mubr.f32.mxu0 0.0
        %944 = vmatmul.mubr.f32.gmra.mxu0 %v586
        %v945 = vpop.f32.mrf.mxu0
        %v946 = vadd.f32 0.0, %v945
        %v947 = vpop.f32.mrf.mxu0
        %948 = vmatprep.mubr.f32.mxu0 0.0
        %949 = vmatmul.mubr.f32.gmra.mxu0 %v589
        %v950 = vpop.f32.mrf.mxu0
        %v951 = vadd.f32 0.0, %v950
        %v952 = vpop.f32.mrf.mxu0
        %953 = vmatprep.mubr.f32.mxu0 0.0
        %954 = vmatmul.mubr.f32.gmra.mxu0 %v592
        %v955 = vpop.f32.mrf.mxu0
        %v956 = vadd.f32 0.0, %v955
        %v957 = vpop.f32.mrf.mxu0
        %958 = vmatprep.mubr.f32.mxu0 0.0
        %959 = vmatmul.mubr.f32.gmra.mxu0 %v595
        %v960 = vpop.f32.mrf.mxu0
        %v961 = vadd.f32 0.0, %v960
        %v962 = vpop.f32.mrf.mxu0
        %963 = vmatprep.mubr.f32.mxu0 0.0
        %964 = vmatmul.mubr.f32.gmra.mxu0 %v598
        %v965 = vpop.f32.mrf.mxu0
        %v966 = vadd.f32 0.0, %v965
        %v967 = vpop.f32.mrf.mxu0
        %968 = vdwg.mxu0
        %vm969 = vcmask 64512
        %970 = vst.msk [vmem:[#allocation2] sm:$0xff] %vm969, %v671
        %971 = vst.msk [vmem:[#allocation2 + $0x8] sm:$0xff] %vm969, %v676
        %972 = vst.msk [vmem:[#allocation2 + $0x10] sm:$0xff] %vm969, %v681
        %973 = vst.msk [vmem:[#allocation2 + $0x18] sm:$0xff] %vm969, %v686
        %974 = vst.msk [vmem:[#allocation2 + $0x20] sm:$0xff] %vm969, %v691
        %975 = vst.msk [vmem:[#allocation2 + $0x28] sm:$0xff] %vm969, %v696
        %976 = vst.msk [vmem:[#allocation2 + $0x30] sm:$0xff] %vm969, %v701
        %977 = vst.msk [vmem:[#allocation2 + $0x38] sm:$0xff] %vm969, %v706
        %978 = vst.msk [vmem:[#allocation2 + $0x40] sm:$0xff] %vm969, %v711
        %979 = vst.msk [vmem:[#allocation2 + $0x48] sm:$0xff] %vm969, %v716
        %980 = vst.msk [vmem:[#allocation2 + $0x50] sm:$0xff] %vm969, %v721
        %981 = vst.msk [vmem:[#allocation2 + $0x58] sm:$0xff] %vm969, %v726
        %982 = vst.msk [vmem:[#allocation2 + $0x60] sm:$0xff] %vm969, %v731
        %983 = vst.msk [vmem:[#allocation2 + $0x68] sm:$0xff] %vm969, %v736
        %984 = vst.msk [vmem:[#allocation2 + $0x70] sm:$0xff] %vm969, %v741
        %985 = vst.msk [vmem:[#allocation2 + $0x78] sm:$0xff] %vm969, %v746
        %986 = vst.msk [vmem:[#allocation2 + $0x80] sm:$0xff] %vm969, %v751
        %987 = vst.msk [vmem:[#allocation2 + $0x88] sm:$0xff] %vm969, %v756
        %988 = vst.msk [vmem:[#allocation2 + $0x90] sm:$0xff] %vm969, %v761
        %989 = vst.msk [vmem:[#allocation2 + $0x98] sm:$0xff] %vm969, %v766
        %990 = vst.msk [vmem:[#allocation2 + $0xa0] sm:$0xff] %vm969, %v771
        %991 = vst.msk [vmem:[#allocation2 + $0xa8] sm:$0xff] %vm969, %v776
        %992 = vst.msk [vmem:[#allocation2 + $0xb0] sm:$0xff] %vm969, %v781
        %993 = vst.msk [vmem:[#allocation2 + $0xb8] sm:$0xff] %vm969, %v786
        %994 = vst.msk [vmem:[#allocation2 + $0xc0] sm:$0xff] %vm969, %v791
        %995 = vst.msk [vmem:[#allocation2 + $0xc8] sm:$0xff] %vm969, %v796
        %996 = vst.msk [vmem:[#allocation2 + $0xd0] sm:$0xff] %vm969, %v801
        %997 = vst.msk [vmem:[#allocation2 + $0xd8] sm:$0xff] %vm969, %v806
        %998 = vst.msk [vmem:[#allocation2 + $0xe0] sm:$0xff] %vm969, %v811
        %999 = vst.msk [vmem:[#allocation2 + $0xe8] sm:$0xff] %vm969, %v816
        %1000 = vst.msk [vmem:[#allocation2 + $0xf0] sm:$0xff] %vm969, %v821
        %1001 = vst.msk [vmem:[#allocation2 + $0xf8] sm:$0xff] %vm969, %v826
        %1002 = vst.msk [vmem:[#allocation2 + $0x100] sm:$0xff] %vm969, %v831
        %1003 = vst.msk [vmem:[#allocation2 + $0x108] sm:$0xff] %vm969, %v836
        %1004 = vst.msk [vmem:[#allocation2 + $0x110] sm:$0xff] %vm969, %v841
        %1005 = vst.msk [vmem:[#allocation2 + $0x118] sm:$0xff] %vm969, %v846
        %1006 = vst.msk [vmem:[#allocation2 + $0x120] sm:$0xff] %vm969, %v851
        %1007 = vst.msk [vmem:[#allocation2 + $0x128] sm:$0xff] %vm969, %v856
        %1008 = vst.msk [vmem:[#allocation2 + $0x130] sm:$0xff] %vm969, %v861
        %1009 = vst.msk [vmem:[#allocation2 + $0x138] sm:$0xff] %vm969, %v866
        %1010 = vst.msk [vmem:[#allocation2 + $0x140] sm:$0xff] %vm969, %v871
        %1011 = vst.msk [vmem:[#allocation2 + $0x148] sm:$0xff] %vm969, %v876
        %1012 = vst.msk [vmem:[#allocation2 + $0x150] sm:$0xff] %vm969, %v881
        %1013 = vst.msk [vmem:[#allocation2 + $0x158] sm:$0xff] %vm969, %v886
        %1014 = vst.msk [vmem:[#allocation2 + $0x160] sm:$0xff] %vm969, %v891
        %1015 = vst.msk [vmem:[#allocation2 + $0x168] sm:$0xff] %vm969, %v896
        %1016 = vst.msk [vmem:[#allocation2 + $0x170] sm:$0xff] %vm969, %v901
        %1017 = vst.msk [vmem:[#allocation2 + $0x178] sm:$0xff] %vm969, %v906
        %1018 = vst.msk [vmem:[#allocation2 + $0x180] sm:$0xff] %vm969, %v911
        %1019 = vst.msk [vmem:[#allocation2 + $0x188] sm:$0xff] %vm969, %v916
        %1020 = vst.msk [vmem:[#allocation2 + $0x190] sm:$0xff] %vm969, %v921
        %1021 = vst.msk [vmem:[#allocation2 + $0x198] sm:$0xff] %vm969, %v926
        %1022 = vst.msk [vmem:[#allocation2 + $0x1a0] sm:$0xff] %vm969, %v931
        %1023 = vst.msk [vmem:[#allocation2 + $0x1a8] sm:$0xff] %vm969, %v936
        %1024 = vst.msk [vmem:[#allocation2 + $0x1b0] sm:$0xff] %vm969, %v941
        %1025 = vst.msk [vmem:[#allocation2 + $0x1b8] sm:$0xff] %vm969, %v946
        %1026 = vst.msk [vmem:[#allocation2 + $0x1c0] sm:$0xff] %vm969, %v951
        %1027 = vst.msk [vmem:[#allocation2 + $0x1c8] sm:$0xff] %vm969, %v956
        %1028 = vst.msk [vmem:[#allocation2 + $0x1d0] sm:$0xff] %vm969, %v961
        %1029 = vst.msk [vmem:[#allocation2 + $0x1d8] sm:$0xff] %vm969, %v966
        %v1030 = vld [vmem:[#allocation2] sm:$0xff]
        %v1031 = vld [vmem:[#allocation2 + $0x8] sm:$0xff]
        %v1032 = vld [vmem:[#allocation2 + $0x10] sm:$0x3]
        %v1033 = vld [vmem:[#allocation2 + $0x18] sm:$0xff]
        %v1034 = vld [vmem:[#allocation2 + $0x20] sm:$0xff]
        %v1035 = vld [vmem:[#allocation2 + $0x28] sm:$0x3]
        %v1036 = vld [vmem:[#allocation2 + $0x30] sm:$0xff]
        %v1037 = vld [vmem:[#allocation2 + $0x38] sm:$0xff]
        %v1038 = vld [vmem:[#allocation2 + $0x40] sm:$0x3]
        %v1039 = vld [vmem:[#allocation2 + $0x48] sm:$0xff]
        %v1040 = vld [vmem:[#allocation2 + $0x50] sm:$0xff]
        %v1041 = vld [vmem:[#allocation2 + $0x58] sm:$0x3]
        %v1042 = vld [vmem:[#allocation2 + $0x60] sm:$0xff]
        %v1043 = vld [vmem:[#allocation2 + $0x68] sm:$0xff]
        %v1044 = vld [vmem:[#allocation2 + $0x70] sm:$0x3]
        %v1045 = vld [vmem:[#allocation2 + $0x78] sm:$0xff]
        %v1046 = vld [vmem:[#allocation2 + $0x80] sm:$0xff]
        %v1047 = vld [vmem:[#allocation2 + $0x88] sm:$0x3]
        %v1048 = vld [vmem:[#allocation2 + $0x90] sm:$0xff]
        %v1049 = vld [vmem:[#allocation2 + $0x98] sm:$0xff]
        %v1050 = vld [vmem:[#allocation2 + $0xa0] sm:$0x3]
        %v1051 = vld [vmem:[#allocation2 + $0xa8] sm:$0xff]
        %v1052 = vld [vmem:[#allocation2 + $0xb0] sm:$0xff]
        %v1053 = vld [vmem:[#allocation2 + $0xb8] sm:$0x3]
        %v1054 = vld [vmem:[#allocation2 + $0xc0] sm:$0xff]
        %v1055 = vld [vmem:[#allocation2 + $0xc8] sm:$0xff]
        %v1056 = vld [vmem:[#allocation2 + $0xd0] sm:$0x3]
        %v1057 = vld [vmem:[#allocation2 + $0xd8] sm:$0xff]
        %v1058 = vld [vmem:[#allocation2 + $0xe0] sm:$0xff]
        %v1059 = vld [vmem:[#allocation2 + $0xe8] sm:$0x3]
        %v1060 = vld [vmem:[#allocation2 + $0xf0] sm:$0xff]
        %v1061 = vld [vmem:[#allocation2 + $0xf8] sm:$0xff]
        %v1062 = vld [vmem:[#allocation2 + $0x100] sm:$0x3]
        %v1063 = vld [vmem:[#allocation2 + $0x108] sm:$0xff]
        %v1064 = vld [vmem:[#allocation2 + $0x110] sm:$0xff]
        %v1065 = vld [vmem:[#allocation2 + $0x118] sm:$0x3]
        %v1066 = vld [vmem:[#allocation2 + $0x120] sm:$0xff]
        %v1067 = vld [vmem:[#allocation2 + $0x128] sm:$0xff]
        %v1068 = vld [vmem:[#allocation2 + $0x130] sm:$0x3]
        %v1069 = vld [vmem:[#allocation2 + $0x138] sm:$0xff]
        %v1070 = vld [vmem:[#allocation2 + $0x140] sm:$0xff]
        %v1071 = vld [vmem:[#allocation2 + $0x148] sm:$0x3]
        %v1072 = vld [vmem:[#allocation2 + $0x150] sm:$0xff]
        %v1073 = vld [vmem:[#allocation2 + $0x158] sm:$0xff]
        %v1074 = vld [vmem:[#allocation2 + $0x160] sm:$0x3]
        %v1075 = vld [vmem:[#allocation2 + $0x168] sm:$0xff]
        %v1076 = vld [vmem:[#allocation2 + $0x170] sm:$0xff]
        %v1077 = vld [vmem:[#allocation2 + $0x178] sm:$0x3]
        %v1078 = vld [vmem:[#allocation2 + $0x180] sm:$0xff]
        %v1079 = vld [vmem:[#allocation2 + $0x188] sm:$0xff]
        %v1080 = vld [vmem:[#allocation2 + $0x190] sm:$0x3]
        %v1081 = vld [vmem:[#allocation2 + $0x198] sm:$0xff]
        %v1082 = vld [vmem:[#allocation2 + $0x1a0] sm:$0xff]
        %v1083 = vld [vmem:[#allocation2 + $0x1a8] sm:$0x3]
        %v1084 = vld [vmem:[%s2] sm:$0x1]
        %v1085 = vlaneseq
        %v1086 = vshrl.u32 %v1085, 7
        %v1087 = vsub.s32 0, %v1086
        %v1088 = vrot.slane %v1084, %v1087
        %v1089 = vmul.f32 %v1030, %v1088
        %v1090 = vmul.f32 %v1031, %v1088
        %v1091 = vmul.f32 %v1032, %v1088
        %v1092 = vmul.f32 %v1033, %v1088
        %v1093 = vmul.f32 %v1034, %v1088
        %v1094 = vmul.f32 %v1035, %v1088
        %v1095 = vmul.f32 %v1036, %v1088
        %v1096 = vmul.f32 %v1037, %v1088
        %v1097 = vmul.f32 %v1038, %v1088
        %v1098 = vmul.f32 %v1039, %v1088
        %v1099 = vmul.f32 %v1040, %v1088
        %v1100 = vmul.f32 %v1041, %v1088
        %v1101 = vmul.f32 %v1042, %v1088
        %v1102 = vmul.f32 %v1043, %v1088
        %v1103 = vmul.f32 %v1044, %v1088
        %v1104 = vmul.f32 %v1045, %v1088
        %v1105 = vmul.f32 %v1046, %v1088
        %v1106 = vmul.f32 %v1047, %v1088
        %v1107 = vmul.f32 %v1048, %v1088
        %v1108 = vmul.f32 %v1049, %v1088
        %v1109 = vmul.f32 %v1050, %v1088
        %v1110 = vmul.f32 %v1051, %v1088
        %v1111 = vmul.f32 %v1052, %v1088
        %v1112 = vmul.f32 %v1053, %v1088
        %v1113 = vmul.f32 %v1054, %v1088
        %v1114 = vmul.f32 %v1055, %v1088
        %v1115 = vmul.f32 %v1056, %v1088
        %v1116 = vmul.f32 %v1057, %v1088
        %v1117 = vmul.f32 %v1058, %v1088
        %v1118 = vmul.f32 %v1059, %v1088
        %v1119 = vmul.f32 %v1060, %v1088
        %v1120 = vmul.f32 %v1061, %v1088
        %v1121 = vmul.f32 %v1062, %v1088
        %v1122 = vmul.f32 %v1063, %v1088
        %v1123 = vmul.f32 %v1064, %v1088
        %v1124 = vmul.f32 %v1065, %v1088
        %v1125 = vmul.f32 %v1066, %v1088
        %v1126 = vmul.f32 %v1067, %v1088
        %v1127 = vmul.f32 %v1068, %v1088
        %v1128 = vmul.f32 %v1069, %v1088
        %v1129 = vmul.f32 %v1070, %v1088
        %v1130 = vmul.f32 %v1071, %v1088
        %v1131 = vmul.f32 %v1072, %v1088
        %v1132 = vmul.f32 %v1073, %v1088
        %v1133 = vmul.f32 %v1074, %v1088
        %v1134 = vmul.f32 %v1075, %v1088
        %v1135 = vmul.f32 %v1076, %v1088
        %v1136 = vmul.f32 %v1077, %v1088
        %v1137 = vmul.f32 %v1078, %v1088
        %v1138 = vmul.f32 %v1079, %v1088
        %v1139 = vmul.f32 %v1080, %v1088
        %v1140 = vmul.f32 %v1081, %v1088
        %v1141 = vmul.f32 %v1082, %v1088
        %v1142 = vmul.f32 %v1083, %v1088
        %v1143 = vadd.f32 %v1089, 0.0
        %v1144 = vadd.f32 %v1090, 0.0
        %v1145 = vadd.f32 %v1091, 0.0
        %v1146 = vadd.f32 %v1092, 0.0
        %v1147 = vadd.f32 %v1093, 0.0
        %v1148 = vadd.f32 %v1094, 0.0
        %v1149 = vadd.f32 %v1095, 0.0
        %v1150 = vadd.f32 %v1096, 0.0
        %v1151 = vadd.f32 %v1097, 0.0
        %v1152 = vadd.f32 %v1098, 0.0
        %v1153 = vadd.f32 %v1099, 0.0
        %v1154 = vadd.f32 %v1100, 0.0
        %v1155 = vadd.f32 %v1101, 0.0
        %v1156 = vadd.f32 %v1102, 0.0
        %v1157 = vadd.f32 %v1103, 0.0
        %v1158 = vadd.f32 %v1104, 0.0
        %v1159 = vadd.f32 %v1105, 0.0
        %v1160 = vadd.f32 %v1106, 0.0
        %v1161 = vadd.f32 %v1107, 0.0
        %v1162 = vadd.f32 %v1108, 0.0
        %v1163 = vadd.f32 %v1109, 0.0
        %v1164 = vadd.f32 %v1110, 0.0
        %v1165 = vadd.f32 %v1111, 0.0
        %v1166 = vadd.f32 %v1112, 0.0
        %v1167 = vadd.f32 %v1113, 0.0
        %v1168 = vadd.f32 %v1114, 0.0
        %v1169 = vadd.f32 %v1115, 0.0
        %v1170 = vadd.f32 %v1116, 0.0
        %v1171 = vadd.f32 %v1117, 0.0
        %v1172 = vadd.f32 %v1118, 0.0
        %v1173 = vadd.f32 %v1119, 0.0
        %v1174 = vadd.f32 %v1120, 0.0
        %v1175 = vadd.f32 %v1121, 0.0
        %v1176 = vadd.f32 %v1122, 0.0
        %v1177 = vadd.f32 %v1123, 0.0
        %v1178 = vadd.f32 %v1124, 0.0
        %v1179 = vadd.f32 %v1125, 0.0
        %v1180 = vadd.f32 %v1126, 0.0
        %v1181 = vadd.f32 %v1127, 0.0
        %v1182 = vadd.f32 %v1128, 0.0
        %v1183 = vadd.f32 %v1129, 0.0
        %v1184 = vadd.f32 %v1130, 0.0
        %v1185 = vadd.f32 %v1131, 0.0
        %v1186 = vadd.f32 %v1132, 0.0
        %v1187 = vadd.f32 %v1133, 0.0
        %v1188 = vadd.f32 %v1134, 0.0
        %v1189 = vadd.f32 %v1135, 0.0
        %v1190 = vadd.f32 %v1136, 0.0
        %v1191 = vadd.f32 %v1137, 0.0
        %v1192 = vadd.f32 %v1138, 0.0
        %v1193 = vadd.f32 %v1139, 0.0
        %v1194 = vadd.f32 %v1140, 0.0
        %v1195 = vadd.f32 %v1141, 0.0
        %v1196 = vadd.f32 %v1142, 0.0
        %v1197 = vld [vmem:[#allocation2 + $0x1] sm:$0xff]
        %v1198 = vld [vmem:[#allocation2 + $0x9] sm:$0xff]
        %v1199 = vld [vmem:[#allocation2 + $0x11] sm:$0x3]
        %v1200 = vld [vmem:[#allocation2 + $0x19] sm:$0xff]
        %v1201 = vld [vmem:[#allocation2 + $0x21] sm:$0xff]
        %v1202 = vld [vmem:[#allocation2 + $0x29] sm:$0x3]
        %v1203 = vld [vmem:[#allocation2 + $0x31] sm:$0xff]
        %v1204 = vld [vmem:[#allocation2 + $0x39] sm:$0xff]
        %v1205 = vld [vmem:[#allocation2 + $0x41] sm:$0x3]
        %v1206 = vld [vmem:[#allocation2 + $0x49] sm:$0xff]
        %v1207 = vld [vmem:[#allocation2 + $0x51] sm:$0xff]
        %v1208 = vld [vmem:[#allocation2 + $0x59] sm:$0x3]
        %v1209 = vld [vmem:[#allocation2 + $0x61] sm:$0xff]
        %v1210 = vld [vmem:[#allocation2 + $0x69] sm:$0xff]
        %v1211 = vld [vmem:[#allocation2 + $0x71] sm:$0x3]
        %v1212 = vld [vmem:[#allocation2 + $0x79] sm:$0xff]
        %v1213 = vld [vmem:[#allocation2 + $0x81] sm:$0xff]
        %v1214 = vld [vmem:[#allocation2 + $0x89] sm:$0x3]
        %v1215 = vld [vmem:[#allocation2 + $0x91] sm:$0xff]
        %v1216 = vld [vmem:[#allocation2 + $0x99] sm:$0xff]
        %v1217 = vld [vmem:[#allocation2 + $0xa1] sm:$0x3]
        %v1218 = vld [vmem:[#allocation2 + $0xa9] sm:$0xff]
        %v1219 = vld [vmem:[#allocation2 + $0xb1] sm:$0xff]
        %v1220 = vld [vmem:[#allocation2 + $0xb9] sm:$0x3]
        %v1221 = vld [vmem:[#allocation2 + $0xc1] sm:$0xff]
        %v1222 = vld [vmem:[#allocation2 + $0xc9] sm:$0xff]
        %v1223 = vld [vmem:[#allocation2 + $0xd1] sm:$0x3]
        %v1224 = vld [vmem:[#allocation2 + $0xd9] sm:$0xff]
        %v1225 = vld [vmem:[#allocation2 + $0xe1] sm:$0xff]
        %v1226 = vld [vmem:[#allocation2 + $0xe9] sm:$0x3]
        %v1227 = vld [vmem:[#allocation2 + $0xf1] sm:$0xff]
        %v1228 = vld [vmem:[#allocation2 + $0xf9] sm:$0xff]
        %v1229 = vld [vmem:[#allocation2 + $0x101] sm:$0x3]
        %v1230 = vld [vmem:[#allocation2 + $0x109] sm:$0xff]
        %v1231 = vld [vmem:[#allocation2 + $0x111] sm:$0xff]
        %v1232 = vld [vmem:[#allocation2 + $0x119] sm:$0x3]
        %v1233 = vld [vmem:[#allocation2 + $0x121] sm:$0xff]
        %v1234 = vld [vmem:[#allocation2 + $0x129] sm:$0xff]
        %v1235 = vld [vmem:[#allocation2 + $0x131] sm:$0x3]
        %v1236 = vld [vmem:[#allocation2 + $0x139] sm:$0xff]
        %v1237 = vld [vmem:[#allocation2 + $0x141] sm:$0xff]
        %v1238 = vld [vmem:[#allocation2 + $0x149] sm:$0x3]
        %v1239 = vld [vmem:[#allocation2 + $0x151] sm:$0xff]
        %v1240 = vld [vmem:[#allocation2 + $0x159] sm:$0xff]
        %v1241 = vld [vmem:[#allocation2 + $0x161] sm:$0x3]
        %v1242 = vld [vmem:[#allocation2 + $0x169] sm:$0xff]
        %v1243 = vld [vmem:[#allocation2 + $0x171] sm:$0xff]
        %v1244 = vld [vmem:[#allocation2 + $0x179] sm:$0x3]
        %v1245 = vld [vmem:[#allocation2 + $0x181] sm:$0xff]
        %v1246 = vld [vmem:[#allocation2 + $0x189] sm:$0xff]
        %v1247 = vld [vmem:[#allocation2 + $0x191] sm:$0x3]
        %v1248 = vld [vmem:[#allocation2 + $0x199] sm:$0xff]
        %v1249 = vld [vmem:[#allocation2 + $0x1a1] sm:$0xff]
        %v1250 = vld [vmem:[#allocation2 + $0x1a9] sm:$0x3]
        %v1251 = vld [vmem:[%s2 + $0x1] sm:$0x1]
        %v1252 = vlaneseq
        %v1253 = vshrl.u32 %v1252, 7
        %v1254 = vsub.s32 0, %v1253
        %v1255 = vrot.slane %v1251, %v1254
        %v1256 = vmul.f32 %v1197, %v1255
        %v1257 = vmul.f32 %v1198, %v1255
        %v1258 = vmul.f32 %v1199, %v1255
        %v1259 = vmul.f32 %v1200, %v1255
        %v1260 = vmul.f32 %v1201, %v1255
        %v1261 = vmul.f32 %v1202, %v1255
        %v1262 = vmul.f32 %v1203, %v1255
        %v1263 = vmul.f32 %v1204, %v1255
        %v1264 = vmul.f32 %v1205, %v1255
        %v1265 = vmul.f32 %v1206, %v1255
        %v1266 = vmul.f32 %v1207, %v1255
        %v1267 = vmul.f32 %v1208, %v1255
        %v1268 = vmul.f32 %v1209, %v1255
        %v1269 = vmul.f32 %v1210, %v1255
        %v1270 = vmul.f32 %v1211, %v1255
        %v1271 = vmul.f32 %v1212, %v1255
        %v1272 = vmul.f32 %v1213, %v1255
        %v1273 = vmul.f32 %v1214, %v1255
        %v1274 = vmul.f32 %v1215, %v1255
        %v1275 = vmul.f32 %v1216, %v1255
        %v1276 = vmul.f32 %v1217, %v1255
        %v1277 = vmul.f32 %v1218, %v1255
        %v1278 = vmul.f32 %v1219, %v1255
        %v1279 = vmul.f32 %v1220, %v1255
        %v1280 = vmul.f32 %v1221, %v1255
        %v1281 = vmul.f32 %v1222, %v1255
        %v1282 = vmul.f32 %v1223, %v1255
        %v1283 = vmul.f32 %v1224, %v1255
        %v1284 = vmul.f32 %v1225, %v1255
        %v1285 = vmul.f32 %v1226, %v1255
        %v1286 = vmul.f32 %v1227, %v1255
        %v1287 = vmul.f32 %v1228, %v1255
        %v1288 = vmul.f32 %v1229, %v1255
        %v1289 = vmul.f32 %v1230, %v1255
        %v1290 = vmul.f32 %v1231, %v1255
        %v1291 = vmul.f32 %v1232, %v1255
        %v1292 = vmul.f32 %v1233, %v1255
        %v1293 = vmul.f32 %v1234, %v1255
        %v1294 = vmul.f32 %v1235, %v1255
        %v1295 = vmul.f32 %v1236, %v1255
        %v1296 = vmul.f32 %v1237, %v1255
        %v1297 = vmul.f32 %v1238, %v1255
        %v1298 = vmul.f32 %v1239, %v1255
        %v1299 = vmul.f32 %v1240, %v1255
        %v1300 = vmul.f32 %v1241, %v1255
        %v1301 = vmul.f32 %v1242, %v1255
        %v1302 = vmul.f32 %v1243, %v1255
        %v1303 = vmul.f32 %v1244, %v1255
        %v1304 = vmul.f32 %v1245, %v1255
        %v1305 = vmul.f32 %v1246, %v1255
        %v1306 = vmul.f32 %v1247, %v1255
        %v1307 = vmul.f32 %v1248, %v1255
        %v1308 = vmul.f32 %v1249, %v1255
        %v1309 = vmul.f32 %v1250, %v1255
        %v1310 = vadd.f32 %v1143, %v1256
        %v1311 = vadd.f32 %v1144, %v1257
        %v1312 = vadd.f32 %v1145, %v1258
        %v1313 = vadd.f32 %v1146, %v1259
        %v1314 = vadd.f32 %v1147, %v1260
        %v1315 = vadd.f32 %v1148, %v1261
        %v1316 = vadd.f32 %v1149, %v1262
        %v1317 = vadd.f32 %v1150, %v1263
        %v1318 = vadd.f32 %v1151, %v1264
        %v1319 = vadd.f32 %v1152, %v1265
        %v1320 = vadd.f32 %v1153, %v1266
        %v1321 = vadd.f32 %v1154, %v1267
        %v1322 = vadd.f32 %v1155, %v1268
        %v1323 = vadd.f32 %v1156, %v1269
        %v1324 = vadd.f32 %v1157, %v1270
        %v1325 = vadd.f32 %v1158, %v1271
        %v1326 = vadd.f32 %v1159, %v1272
        %v1327 = vadd.f32 %v1160, %v1273
        %v1328 = vadd.f32 %v1161, %v1274
        %v1329 = vadd.f32 %v1162, %v1275
        %v1330 = vadd.f32 %v1163, %v1276
        %v1331 = vadd.f32 %v1164, %v1277
        %v1332 = vadd.f32 %v1165, %v1278
        %v1333 = vadd.f32 %v1166, %v1279
        %v1334 = vadd.f32 %v1167, %v1280
        %v1335 = vadd.f32 %v1168, %v1281
        %v1336 = vadd.f32 %v1169, %v1282
        %v1337 = vadd.f32 %v1170, %v1283
        %v1338 = vadd.f32 %v1171, %v1284
        %v1339 = vadd.f32 %v1172, %v1285
        %v1340 = vadd.f32 %v1173, %v1286
        %v1341 = vadd.f32 %v1174, %v1287
        %v1342 = vadd.f32 %v1175, %v1288
        %v1343 = vadd.f32 %v1176, %v1289
        %v1344 = vadd.f32 %v1177, %v1290
        %v1345 = vadd.f32 %v1178, %v1291
        %v1346 = vadd.f32 %v1179, %v1292
        %v1347 = vadd.f32 %v1180, %v1293
        %v1348 = vadd.f32 %v1181, %v1294
        %v1349 = vadd.f32 %v1182, %v1295
        %v1350 = vadd.f32 %v1183, %v1296
        %v1351 = vadd.f32 %v1184, %v1297
        %v1352 = vadd.f32 %v1185, %v1298
        %v1353 = vadd.f32 %v1186, %v1299
        %v1354 = vadd.f32 %v1187, %v1300
        %v1355 = vadd.f32 %v1188, %v1301
        %v1356 = vadd.f32 %v1189, %v1302
        %v1357 = vadd.f32 %v1190, %v1303
        %v1358 = vadd.f32 %v1191, %v1304
        %v1359 = vadd.f32 %v1192, %v1305
        %v1360 = vadd.f32 %v1193, %v1306
        %v1361 = vadd.f32 %v1194, %v1307
        %v1362 = vadd.f32 %v1195, %v1308
        %v1363 = vadd.f32 %v1196, %v1309
        %v1364 = vld [vmem:[#allocation2 + $0x2] sm:$0xff]
        %v1365 = vld [vmem:[#allocation2 + $0xa] sm:$0xff]
        %v1366 = vld [vmem:[#allocation2 + $0x12] sm:$0x3]
        %v1367 = vld [vmem:[#allocation2 + $0x1a] sm:$0xff]
        %v1368 = vld [vmem:[#allocation2 + $0x22] sm:$0xff]
        %v1369 = vld [vmem:[#allocation2 + $0x2a] sm:$0x3]
        %v1370 = vld [vmem:[#allocation2 + $0x32] sm:$0xff]
        %v1371 = vld [vmem:[#allocation2 + $0x3a] sm:$0xff]
        %v1372 = vld [vmem:[#allocation2 + $0x42] sm:$0x3]
        %v1373 = vld [vmem:[#allocation2 + $0x4a] sm:$0xff]
        %v1374 = vld [vmem:[#allocation2 + $0x52] sm:$0xff]
        %v1375 = vld [vmem:[#allocation2 + $0x5a] sm:$0x3]
        %v1376 = vld [vmem:[#allocation2 + $0x62] sm:$0xff]
        %v1377 = vld [vmem:[#allocation2 + $0x6a] sm:$0xff]
        %v1378 = vld [vmem:[#allocation2 + $0x72] sm:$0x3]
        %v1379 = vld [vmem:[#allocation2 + $0x7a] sm:$0xff]
        %v1380 = vld [vmem:[#allocation2 + $0x82] sm:$0xff]
        %v1381 = vld [vmem:[#allocation2 + $0x8a] sm:$0x3]
        %v1382 = vld [vmem:[#allocation2 + $0x92] sm:$0xff]
        %v1383 = vld [vmem:[#allocation2 + $0x9a] sm:$0xff]
        %v1384 = vld [vmem:[#allocation2 + $0xa2] sm:$0x3]
        %v1385 = vld [vmem:[#allocation2 + $0xaa] sm:$0xff]
        %v1386 = vld [vmem:[#allocation2 + $0xb2] sm:$0xff]
        %v1387 = vld [vmem:[#allocation2 + $0xba] sm:$0x3]
        %v1388 = vld [vmem:[#allocation2 + $0xc2] sm:$0xff]
        %v1389 = vld [vmem:[#allocation2 + $0xca] sm:$0xff]
        %v1390 = vld [vmem:[#allocation2 + $0xd2] sm:$0x3]
        %v1391 = vld [vmem:[#allocation2 + $0xda] sm:$0xff]
        %v1392 = vld [vmem:[#allocation2 + $0xe2] sm:$0xff]
        %v1393 = vld [vmem:[#allocation2 + $0xea] sm:$0x3]
        %v1394 = vld [vmem:[#allocation2 + $0xf2] sm:$0xff]
        %v1395 = vld [vmem:[#allocation2 + $0xfa] sm:$0xff]
        %v1396 = vld [vmem:[#allocation2 + $0x102] sm:$0x3]
        %v1397 = vld [vmem:[#allocation2 + $0x10a] sm:$0xff]
        %v1398 = vld [vmem:[#allocation2 + $0x112] sm:$0xff]
        %v1399 = vld [vmem:[#allocation2 + $0x11a] sm:$0x3]
        %v1400 = vld [vmem:[#allocation2 + $0x122] sm:$0xff]
        %v1401 = vld [vmem:[#allocation2 + $0x12a] sm:$0xff]
        %v1402 = vld [vmem:[#allocation2 + $0x132] sm:$0x3]
        %v1403 = vld [vmem:[#allocation2 + $0x13a] sm:$0xff]
        %v1404 = vld [vmem:[#allocation2 + $0x142] sm:$0xff]
        %v1405 = vld [vmem:[#allocation2 + $0x14a] sm:$0x3]
        %v1406 = vld [vmem:[#allocation2 + $0x152] sm:$0xff]
        %v1407 = vld [vmem:[#allocation2 + $0x15a] sm:$0xff]
        %v1408 = vld [vmem:[#allocation2 + $0x162] sm:$0x3]
        %v1409 = vld [vmem:[#allocation2 + $0x16a] sm:$0xff]
        %v1410 = vld [vmem:[#allocation2 + $0x172] sm:$0xff]
        %v1411 = vld [vmem:[#allocation2 + $0x17a] sm:$0x3]
        %v1412 = vld [vmem:[#allocation2 + $0x182] sm:$0xff]
        %v1413 = vld [vmem:[#allocation2 + $0x18a] sm:$0xff]
        %v1414 = vld [vmem:[#allocation2 + $0x192] sm:$0x3]
        %v1415 = vld [vmem:[#allocation2 + $0x19a] sm:$0xff]
        %v1416 = vld [vmem:[#allocation2 + $0x1a2] sm:$0xff]
        %v1417 = vld [vmem:[#allocation2 + $0x1aa] sm:$0x3]
        %v1418 = vld [vmem:[%s2 + $0x2] sm:$0x1]
        %v1419 = vlaneseq
        %v1420 = vshrl.u32 %v1419, 7
        %v1421 = vsub.s32 0, %v1420
        %v1422 = vrot.slane %v1418, %v1421
        %v1423 = vmul.f32 %v1364, %v1422
        %v1424 = vmul.f32 %v1365, %v1422
        %v1425 = vmul.f32 %v1366, %v1422
        %v1426 = vmul.f32 %v1367, %v1422
        %v1427 = vmul.f32 %v1368, %v1422
        %v1428 = vmul.f32 %v1369, %v1422
        %v1429 = vmul.f32 %v1370, %v1422
        %v1430 = vmul.f32 %v1371, %v1422
        %v1431 = vmul.f32 %v1372, %v1422
        %v1432 = vmul.f32 %v1373, %v1422
        %v1433 = vmul.f32 %v1374, %v1422
        %v1434 = vmul.f32 %v1375, %v1422
        %v1435 = vmul.f32 %v1376, %v1422
        %v1436 = vmul.f32 %v1377, %v1422
        %v1437 = vmul.f32 %v1378, %v1422
        %v1438 = vmul.f32 %v1379, %v1422
        %v1439 = vmul.f32 %v1380, %v1422
        %v1440 = vmul.f32 %v1381, %v1422
        %v1441 = vmul.f32 %v1382, %v1422
        %v1442 = vmul.f32 %v1383, %v1422
        %v1443 = vmul.f32 %v1384, %v1422
        %v1444 = vmul.f32 %v1385, %v1422
        %v1445 = vmul.f32 %v1386, %v1422
        %v1446 = vmul.f32 %v1387, %v1422
        %v1447 = vmul.f32 %v1388, %v1422
        %v1448 = vmul.f32 %v1389, %v1422
        %v1449 = vmul.f32 %v1390, %v1422
        %v1450 = vmul.f32 %v1391, %v1422
        %v1451 = vmul.f32 %v1392, %v1422
        %v1452 = vmul.f32 %v1393, %v1422
        %v1453 = vmul.f32 %v1394, %v1422
        %v1454 = vmul.f32 %v1395, %v1422
        %v1455 = vmul.f32 %v1396, %v1422
        %v1456 = vmul.f32 %v1397, %v1422
        %v1457 = vmul.f32 %v1398, %v1422
        %v1458 = vmul.f32 %v1399, %v1422
        %v1459 = vmul.f32 %v1400, %v1422
        %v1460 = vmul.f32 %v1401, %v1422
        %v1461 = vmul.f32 %v1402, %v1422
        %v1462 = vmul.f32 %v1403, %v1422
        %v1463 = vmul.f32 %v1404, %v1422
        %v1464 = vmul.f32 %v1405, %v1422
        %v1465 = vmul.f32 %v1406, %v1422
        %v1466 = vmul.f32 %v1407, %v1422
        %v1467 = vmul.f32 %v1408, %v1422
        %v1468 = vmul.f32 %v1409, %v1422
        %v1469 = vmul.f32 %v1410, %v1422
        %v1470 = vmul.f32 %v1411, %v1422
        %v1471 = vmul.f32 %v1412, %v1422
        %v1472 = vmul.f32 %v1413, %v1422
        %v1473 = vmul.f32 %v1414, %v1422
        %v1474 = vmul.f32 %v1415, %v1422
        %v1475 = vmul.f32 %v1416, %v1422
        %v1476 = vmul.f32 %v1417, %v1422
        %v1477 = vadd.f32 %v1310, %v1423
        %v1478 = vadd.f32 %v1311, %v1424
        %v1479 = vadd.f32 %v1312, %v1425
        %v1480 = vadd.f32 %v1313, %v1426
        %v1481 = vadd.f32 %v1314, %v1427
        %v1482 = vadd.f32 %v1315, %v1428
        %v1483 = vadd.f32 %v1316, %v1429
        %v1484 = vadd.f32 %v1317, %v1430
        %v1485 = vadd.f32 %v1318, %v1431
        %v1486 = vadd.f32 %v1319, %v1432
        %v1487 = vadd.f32 %v1320, %v1433
        %v1488 = vadd.f32 %v1321, %v1434
        %v1489 = vadd.f32 %v1322, %v1435
        %v1490 = vadd.f32 %v1323, %v1436
        %v1491 = vadd.f32 %v1324, %v1437
        %v1492 = vadd.f32 %v1325, %v1438
        %v1493 = vadd.f32 %v1326, %v1439
        %v1494 = vadd.f32 %v1327, %v1440
        %v1495 = vadd.f32 %v1328, %v1441
        %v1496 = vadd.f32 %v1329, %v1442
        %v1497 = vadd.f32 %v1330, %v1443
        %v1498 = vadd.f32 %v1331, %v1444
        %v1499 = vadd.f32 %v1332, %v1445
        %v1500 = vadd.f32 %v1333, %v1446
        %v1501 = vadd.f32 %v1334, %v1447
        %v1502 = vadd.f32 %v1335, %v1448
        %v1503 = vadd.f32 %v1336, %v1449
        %v1504 = vadd.f32 %v1337, %v1450
        %v1505 = vadd.f32 %v1338, %v1451
        %v1506 = vadd.f32 %v1339, %v1452
        %v1507 = vadd.f32 %v1340, %v1453
        %v1508 = vadd.f32 %v1341, %v1454
        %v1509 = vadd.f32 %v1342, %v1455
        %v1510 = vadd.f32 %v1343, %v1456
        %v1511 = vadd.f32 %v1344, %v1457
        %v1512 = vadd.f32 %v1345, %v1458
        %v1513 = vadd.f32 %v1346, %v1459
        %v1514 = vadd.f32 %v1347, %v1460
        %v1515 = vadd.f32 %v1348, %v1461
        %v1516 = vadd.f32 %v1349, %v1462
        %v1517 = vadd.f32 %v1350, %v1463
        %v1518 = vadd.f32 %v1351, %v1464
        %v1519 = vadd.f32 %v1352, %v1465
        %v1520 = vadd.f32 %v1353, %v1466
        %v1521 = vadd.f32 %v1354, %v1467
        %v1522 = vadd.f32 %v1355, %v1468
        %v1523 = vadd.f32 %v1356, %v1469
        %v1524 = vadd.f32 %v1357, %v1470
        %v1525 = vadd.f32 %v1358, %v1471
        %v1526 = vadd.f32 %v1359, %v1472
        %v1527 = vadd.f32 %v1360, %v1473
        %v1528 = vadd.f32 %v1361, %v1474
        %v1529 = vadd.f32 %v1362, %v1475
        %v1530 = vadd.f32 %v1363, %v1476
        %s1531 = scalar_lea.vmem [#allocation2], 24
        %v1532 = vld [vmem:[%s1531] sm:$0xff]
        %v1533 = vld [vmem:[%s1531 + $0x8] sm:$0xff]
        %v1534 = vld [vmem:[%s1531 + $0x10] sm:$0x3]
        %v1535 = vld [vmem:[%s1531 + $0x18] sm:$0xff]
        %v1536 = vld [vmem:[%s1531 + $0x20] sm:$0xff]
        %v1537 = vld [vmem:[%s1531 + $0x28] sm:$0x3]
        %v1538 = vld [vmem:[%s1531 + $0x30] sm:$0xff]
        %v1539 = vld [vmem:[%s1531 + $0x38] sm:$0xff]
        %v1540 = vld [vmem:[%s1531 + $0x40] sm:$0x3]
        %v1541 = vld [vmem:[%s1531 + $0x48] sm:$0xff]
        %v1542 = vld [vmem:[%s1531 + $0x50] sm:$0xff]
        %v1543 = vld [vmem:[%s1531 + $0x58] sm:$0x3]
        %v1544 = vld [vmem:[%s1531 + $0x60] sm:$0xff]
        %v1545 = vld [vmem:[%s1531 + $0x68] sm:$0xff]
        %v1546 = vld [vmem:[%s1531 + $0x70] sm:$0x3]
        %v1547 = vld [vmem:[%s1531 + $0x78] sm:$0xff]
        %v1548 = vld [vmem:[%s1531 + $0x80] sm:$0xff]
        %v1549 = vld [vmem:[%s1531 + $0x88] sm:$0x3]
        %v1550 = vld [vmem:[%s1531 + $0x90] sm:$0xff]
        %v1551 = vld [vmem:[%s1531 + $0x98] sm:$0xff]
        %v1552 = vld [vmem:[%s1531 + $0xa0] sm:$0x3]
        %v1553 = vld [vmem:[%s1531 + $0xa8] sm:$0xff]
        %v1554 = vld [vmem:[%s1531 + $0xb0] sm:$0xff]
        %v1555 = vld [vmem:[%s1531 + $0xb8] sm:$0x3]
        %v1556 = vld [vmem:[%s1531 + $0xc0] sm:$0xff]
        %v1557 = vld [vmem:[%s1531 + $0xc8] sm:$0xff]
        %v1558 = vld [vmem:[%s1531 + $0xd0] sm:$0x3]
        %v1559 = vld [vmem:[%s1531 + $0xd8] sm:$0xff]
        %v1560 = vld [vmem:[%s1531 + $0xe0] sm:$0xff]
        %v1561 = vld [vmem:[%s1531 + $0xe8] sm:$0x3]
        %v1562 = vld [vmem:[%s1531 + $0xf0] sm:$0xff]
        %v1563 = vld [vmem:[%s1531 + $0xf8] sm:$0xff]
        %v1564 = vld [vmem:[%s1531 + $0x100] sm:$0x3]
        %v1565 = vld [vmem:[%s1531 + $0x108] sm:$0xff]
        %v1566 = vld [vmem:[%s1531 + $0x110] sm:$0xff]
        %v1567 = vld [vmem:[%s1531 + $0x118] sm:$0x3]
        %v1568 = vld [vmem:[%s1531 + $0x120] sm:$0xff]
        %v1569 = vld [vmem:[%s1531 + $0x128] sm:$0xff]
        %v1570 = vld [vmem:[%s1531 + $0x130] sm:$0x3]
        %v1571 = vld [vmem:[%s1531 + $0x138] sm:$0xff]
        %v1572 = vld [vmem:[%s1531 + $0x140] sm:$0xff]
        %v1573 = vld [vmem:[%s1531 + $0x148] sm:$0x3]
        %v1574 = vld [vmem:[%s1531 + $0x150] sm:$0xff]
        %v1575 = vld [vmem:[%s1531 + $0x158] sm:$0xff]
        %v1576 = vld [vmem:[%s1531 + $0x160] sm:$0x3]
        %v1577 = vld [vmem:[%s1531 + $0x168] sm:$0xff]
        %v1578 = vld [vmem:[%s1531 + $0x170] sm:$0xff]
        %v1579 = vld [vmem:[%s1531 + $0x178] sm:$0x3]
        %v1580 = vld [vmem:[%s1531 + $0x180] sm:$0xff]
        %v1581 = vld [vmem:[%s1531 + $0x188] sm:$0xff]
        %v1582 = vld [vmem:[%s1531 + $0x190] sm:$0x3]
        %v1583 = vld [vmem:[%s1531 + $0x198] sm:$0xff]
        %v1584 = vld [vmem:[%s1531 + $0x1a0] sm:$0xff]
        %v1585 = vld [vmem:[%s1531 + $0x1a8] sm:$0x3]
        %v1586 = vld [vmem:[%s2 + $0x3] sm:$0x1]
        %v1587 = vlaneseq
        %v1588 = vshrl.u32 %v1587, 7
        %v1589 = vsub.s32 0, %v1588
        %v1590 = vrot.slane %v1586, %v1589
        %v1591 = vmul.f32 %v1532, %v1590
        %v1592 = vmul.f32 %v1533, %v1590
        %v1593 = vmul.f32 %v1534, %v1590
        %v1594 = vmul.f32 %v1535, %v1590
        %v1595 = vmul.f32 %v1536, %v1590
        %v1596 = vmul.f32 %v1537, %v1590
        %v1597 = vmul.f32 %v1538, %v1590
        %v1598 = vmul.f32 %v1539, %v1590
        %v1599 = vmul.f32 %v1540, %v1590
        %v1600 = vmul.f32 %v1541, %v1590
        %v1601 = vmul.f32 %v1542, %v1590
        %v1602 = vmul.f32 %v1543, %v1590
        %v1603 = vmul.f32 %v1544, %v1590
        %v1604 = vmul.f32 %v1545, %v1590
        %v1605 = vmul.f32 %v1546, %v1590
        %v1606 = vmul.f32 %v1547, %v1590
        %v1607 = vmul.f32 %v1548, %v1590
        %v1608 = vmul.f32 %v1549, %v1590
        %v1609 = vmul.f32 %v1550, %v1590
        %v1610 = vmul.f32 %v1551, %v1590
        %v1611 = vmul.f32 %v1552, %v1590
        %v1612 = vmul.f32 %v1553, %v1590
        %v1613 = vmul.f32 %v1554, %v1590
        %v1614 = vmul.f32 %v1555, %v1590
        %v1615 = vmul.f32 %v1556, %v1590
        %v1616 = vmul.f32 %v1557, %v1590
        %v1617 = vmul.f32 %v1558, %v1590
        %v1618 = vmul.f32 %v1559, %v1590
        %v1619 = vmul.f32 %v1560, %v1590
        %v1620 = vmul.f32 %v1561, %v1590
        %v1621 = vmul.f32 %v1562, %v1590
        %v1622 = vmul.f32 %v1563, %v1590
        %v1623 = vmul.f32 %v1564, %v1590
        %v1624 = vmul.f32 %v1565, %v1590
        %v1625 = vmul.f32 %v1566, %v1590
        %v1626 = vmul.f32 %v1567, %v1590
        %v1627 = vmul.f32 %v1568, %v1590
        %v1628 = vmul.f32 %v1569, %v1590
        %v1629 = vmul.f32 %v1570, %v1590
        %v1630 = vmul.f32 %v1571, %v1590
        %v1631 = vmul.f32 %v1572, %v1590
        %v1632 = vmul.f32 %v1573, %v1590
        %v1633 = vmul.f32 %v1574, %v1590
        %v1634 = vmul.f32 %v1575, %v1590
        %v1635 = vmul.f32 %v1576, %v1590
        %v1636 = vmul.f32 %v1577, %v1590
        %v1637 = vmul.f32 %v1578, %v1590
        %v1638 = vmul.f32 %v1579, %v1590
        %v1639 = vmul.f32 %v1580, %v1590
        %v1640 = vmul.f32 %v1581, %v1590
        %v1641 = vmul.f32 %v1582, %v1590
        %v1642 = vmul.f32 %v1583, %v1590
        %v1643 = vmul.f32 %v1584, %v1590
        %v1644 = vmul.f32 %v1585, %v1590
        %v1645 = vadd.f32 %v1477, %v1591
        %v1646 = vadd.f32 %v1478, %v1592
        %v1647 = vadd.f32 %v1479, %v1593
        %v1648 = vadd.f32 %v1480, %v1594
        %v1649 = vadd.f32 %v1481, %v1595
        %v1650 = vadd.f32 %v1482, %v1596
        %v1651 = vadd.f32 %v1483, %v1597
        %v1652 = vadd.f32 %v1484, %v1598
        %v1653 = vadd.f32 %v1485, %v1599
        %v1654 = vadd.f32 %v1486, %v1600
        %v1655 = vadd.f32 %v1487, %v1601
        %v1656 = vadd.f32 %v1488, %v1602
        %v1657 = vadd.f32 %v1489, %v1603
        %v1658 = vadd.f32 %v1490, %v1604
        %v1659 = vadd.f32 %v1491, %v1605
        %v1660 = vadd.f32 %v1492, %v1606
        %v1661 = vadd.f32 %v1493, %v1607
        %v1662 = vadd.f32 %v1494, %v1608
        %v1663 = vadd.f32 %v1495, %v1609
        %v1664 = vadd.f32 %v1496, %v1610
        %v1665 = vadd.f32 %v1497, %v1611
        %v1666 = vadd.f32 %v1498, %v1612
        %v1667 = vadd.f32 %v1499, %v1613
        %v1668 = vadd.f32 %v1500, %v1614
        %v1669 = vadd.f32 %v1501, %v1615
        %v1670 = vadd.f32 %v1502, %v1616
        %v1671 = vadd.f32 %v1503, %v1617
        %v1672 = vadd.f32 %v1504, %v1618
        %v1673 = vadd.f32 %v1505, %v1619
        %v1674 = vadd.f32 %v1506, %v1620
        %v1675 = vadd.f32 %v1507, %v1621
        %v1676 = vadd.f32 %v1508, %v1622
        %v1677 = vadd.f32 %v1509, %v1623
        %v1678 = vadd.f32 %v1510, %v1624
        %v1679 = vadd.f32 %v1511, %v1625
        %v1680 = vadd.f32 %v1512, %v1626
        %v1681 = vadd.f32 %v1513, %v1627
        %v1682 = vadd.f32 %v1514, %v1628
        %v1683 = vadd.f32 %v1515, %v1629
        %v1684 = vadd.f32 %v1516, %v1630
        %v1685 = vadd.f32 %v1517, %v1631
        %v1686 = vadd.f32 %v1518, %v1632
        %v1687 = vadd.f32 %v1519, %v1633
        %v1688 = vadd.f32 %v1520, %v1634
        %v1689 = vadd.f32 %v1521, %v1635
        %v1690 = vadd.f32 %v1522, %v1636
        %v1691 = vadd.f32 %v1523, %v1637
        %v1692 = vadd.f32 %v1524, %v1638
        %v1693 = vadd.f32 %v1525, %v1639
        %v1694 = vadd.f32 %v1526, %v1640
        %v1695 = vadd.f32 %v1527, %v1641
        %v1696 = vadd.f32 %v1528, %v1642
        %v1697 = vadd.f32 %v1529, %v1643
        %v1698 = vadd.f32 %v1530, %v1644
        %v1699 = vld [vmem:[%s1531 + $0x1] sm:$0xff]
        %v1700 = vld [vmem:[%s1531 + $0x9] sm:$0xff]
        %v1701 = vld [vmem:[%s1531 + $0x11] sm:$0x3]
        %v1702 = vld [vmem:[%s1531 + $0x19] sm:$0xff]
        %v1703 = vld [vmem:[%s1531 + $0x21] sm:$0xff]
        %v1704 = vld [vmem:[%s1531 + $0x29] sm:$0x3]
        %v1705 = vld [vmem:[%s1531 + $0x31] sm:$0xff]
        %v1706 = vld [vmem:[%s1531 + $0x39] sm:$0xff]
        %v1707 = vld [vmem:[%s1531 + $0x41] sm:$0x3]
        %v1708 = vld [vmem:[%s1531 + $0x49] sm:$0xff]
        %v1709 = vld [vmem:[%s1531 + $0x51] sm:$0xff]
        %v1710 = vld [vmem:[%s1531 + $0x59] sm:$0x3]
        %v1711 = vld [vmem:[%s1531 + $0x61] sm:$0xff]
        %v1712 = vld [vmem:[%s1531 + $0x69] sm:$0xff]
        %v1713 = vld [vmem:[%s1531 + $0x71] sm:$0x3]
        %v1714 = vld [vmem:[%s1531 + $0x79] sm:$0xff]
        %v1715 = vld [vmem:[%s1531 + $0x81] sm:$0xff]
        %v1716 = vld [vmem:[%s1531 + $0x89] sm:$0x3]
        %v1717 = vld [vmem:[%s1531 + $0x91] sm:$0xff]
        %v1718 = vld [vmem:[%s1531 + $0x99] sm:$0xff]
        %v1719 = vld [vmem:[%s1531 + $0xa1] sm:$0x3]
        %v1720 = vld [vmem:[%s1531 + $0xa9] sm:$0xff]
        %v1721 = vld [vmem:[%s1531 + $0xb1] sm:$0xff]
        %v1722 = vld [vmem:[%s1531 + $0xb9] sm:$0x3]
        %v1723 = vld [vmem:[%s1531 + $0xc1] sm:$0xff]
        %v1724 = vld [vmem:[%s1531 + $0xc9] sm:$0xff]
        %v1725 = vld [vmem:[%s1531 + $0xd1] sm:$0x3]
        %v1726 = vld [vmem:[%s1531 + $0xd9] sm:$0xff]
        %v1727 = vld [vmem:[%s1531 + $0xe1] sm:$0xff]
        %v1728 = vld [vmem:[%s1531 + $0xe9] sm:$0x3]
        %v1729 = vld [vmem:[%s1531 + $0xf1] sm:$0xff]
        %v1730 = vld [vmem:[%s1531 + $0xf9] sm:$0xff]
        %v1731 = vld [vmem:[%s1531 + $0x101] sm:$0x3]
        %v1732 = vld [vmem:[%s1531 + $0x109] sm:$0xff]
        %v1733 = vld [vmem:[%s1531 + $0x111] sm:$0xff]
        %v1734 = vld [vmem:[%s1531 + $0x119] sm:$0x3]
        %v1735 = vld [vmem:[%s1531 + $0x121] sm:$0xff]
        %v1736 = vld [vmem:[%s1531 + $0x129] sm:$0xff]
        %v1737 = vld [vmem:[%s1531 + $0x131] sm:$0x3]
        %v1738 = vld [vmem:[%s1531 + $0x139] sm:$0xff]
        %v1739 = vld [vmem:[%s1531 + $0x141] sm:$0xff]
        %v1740 = vld [vmem:[%s1531 + $0x149] sm:$0x3]
        %v1741 = vld [vmem:[%s1531 + $0x151] sm:$0xff]
        %v1742 = vld [vmem:[%s1531 + $0x159] sm:$0xff]
        %v1743 = vld [vmem:[%s1531 + $0x161] sm:$0x3]
        %v1744 = vld [vmem:[%s1531 + $0x169] sm:$0xff]
        %v1745 = vld [vmem:[%s1531 + $0x171] sm:$0xff]
        %v1746 = vld [vmem:[%s1531 + $0x179] sm:$0x3]
        %v1747 = vld [vmem:[%s1531 + $0x181] sm:$0xff]
        %v1748 = vld [vmem:[%s1531 + $0x189] sm:$0xff]
        %v1749 = vld [vmem:[%s1531 + $0x191] sm:$0x3]
        %v1750 = vld [vmem:[%s1531 + $0x199] sm:$0xff]
        %v1751 = vld [vmem:[%s1531 + $0x1a1] sm:$0xff]
        %v1752 = vld [vmem:[%s1531 + $0x1a9] sm:$0x3]
        %v1753 = vld [vmem:[%s2 + $0x4] sm:$0x1]
        %v1754 = vlaneseq
        %v1755 = vshrl.u32 %v1754, 7
        %v1756 = vsub.s32 0, %v1755
        %v1757 = vrot.slane %v1753, %v1756
        %v1758 = vmul.f32 %v1699, %v1757
        %v1759 = vmul.f32 %v1700, %v1757
        %v1760 = vmul.f32 %v1701, %v1757
        %v1761 = vmul.f32 %v1702, %v1757
        %v1762 = vmul.f32 %v1703, %v1757
        %v1763 = vmul.f32 %v1704, %v1757
        %v1764 = vmul.f32 %v1705, %v1757
        %v1765 = vmul.f32 %v1706, %v1757
        %v1766 = vmul.f32 %v1707, %v1757
        %v1767 = vmul.f32 %v1708, %v1757
        %v1768 = vmul.f32 %v1709, %v1757
        %v1769 = vmul.f32 %v1710, %v1757
        %v1770 = vmul.f32 %v1711, %v1757
        %v1771 = vmul.f32 %v1712, %v1757
        %v1772 = vmul.f32 %v1713, %v1757
        %v1773 = vmul.f32 %v1714, %v1757
        %v1774 = vmul.f32 %v1715, %v1757
        %v1775 = vmul.f32 %v1716, %v1757
        %v1776 = vmul.f32 %v1717, %v1757
        %v1777 = vmul.f32 %v1718, %v1757
        %v1778 = vmul.f32 %v1719, %v1757
        %v1779 = vmul.f32 %v1720, %v1757
        %v1780 = vmul.f32 %v1721, %v1757
        %v1781 = vmul.f32 %v1722, %v1757
        %v1782 = vmul.f32 %v1723, %v1757
        %v1783 = vmul.f32 %v1724, %v1757
        %v1784 = vmul.f32 %v1725, %v1757
        %v1785 = vmul.f32 %v1726, %v1757
        %v1786 = vmul.f32 %v1727, %v1757
        %v1787 = vmul.f32 %v1728, %v1757
        %v1788 = vmul.f32 %v1729, %v1757
        %v1789 = vmul.f32 %v1730, %v1757
        %v1790 = vmul.f32 %v1731, %v1757
        %v1791 = vmul.f32 %v1732, %v1757
        %v1792 = vmul.f32 %v1733, %v1757
        %v1793 = vmul.f32 %v1734, %v1757
        %v1794 = vmul.f32 %v1735, %v1757
        %v1795 = vmul.f32 %v1736, %v1757
        %v1796 = vmul.f32 %v1737, %v1757
        %v1797 = vmul.f32 %v1738, %v1757
        %v1798 = vmul.f32 %v1739, %v1757
        %v1799 = vmul.f32 %v1740, %v1757
        %v1800 = vmul.f32 %v1741, %v1757
        %v1801 = vmul.f32 %v1742, %v1757
        %v1802 = vmul.f32 %v1743, %v1757
        %v1803 = vmul.f32 %v1744, %v1757
        %v1804 = vmul.f32 %v1745, %v1757
        %v1805 = vmul.f32 %v1746, %v1757
        %v1806 = vmul.f32 %v1747, %v1757
        %v1807 = vmul.f32 %v1748, %v1757
        %v1808 = vmul.f32 %v1749, %v1757
        %v1809 = vmul.f32 %v1750, %v1757
        %v1810 = vmul.f32 %v1751, %v1757
        %v1811 = vmul.f32 %v1752, %v1757
        %v1812 = vadd.f32 %v1645, %v1758
        %v1813 = vadd.f32 %v1646, %v1759
        %v1814 = vadd.f32 %v1647, %v1760
        %v1815 = vadd.f32 %v1648, %v1761
        %v1816 = vadd.f32 %v1649, %v1762
        %v1817 = vadd.f32 %v1650, %v1763
        %v1818 = vadd.f32 %v1651, %v1764
        %v1819 = vadd.f32 %v1652, %v1765
        %v1820 = vadd.f32 %v1653, %v1766
        %v1821 = vadd.f32 %v1654, %v1767
        %v1822 = vadd.f32 %v1655, %v1768
        %v1823 = vadd.f32 %v1656, %v1769
        %v1824 = vadd.f32 %v1657, %v1770
        %v1825 = vadd.f32 %v1658, %v1771
        %v1826 = vadd.f32 %v1659, %v1772
        %v1827 = vadd.f32 %v1660, %v1773
        %v1828 = vadd.f32 %v1661, %v1774
        %v1829 = vadd.f32 %v1662, %v1775
        %v1830 = vadd.f32 %v1663, %v1776
        %v1831 = vadd.f32 %v1664, %v1777
        %v1832 = vadd.f32 %v1665, %v1778
        %v1833 = vadd.f32 %v1666, %v1779
        %v1834 = vadd.f32 %v1667, %v1780
        %v1835 = vadd.f32 %v1668, %v1781
        %v1836 = vadd.f32 %v1669, %v1782
        %v1837 = vadd.f32 %v1670, %v1783
        %v1838 = vadd.f32 %v1671, %v1784
        %v1839 = vadd.f32 %v1672, %v1785
        %v1840 = vadd.f32 %v1673, %v1786
        %v1841 = vadd.f32 %v1674, %v1787
        %v1842 = vadd.f32 %v1675, %v1788
        %v1843 = vadd.f32 %v1676, %v1789
        %v1844 = vadd.f32 %v1677, %v1790
        %v1845 = vadd.f32 %v1678, %v1791
        %v1846 = vadd.f32 %v1679, %v1792
        %v1847 = vadd.f32 %v1680, %v1793
        %v1848 = vadd.f32 %v1681, %v1794
        %v1849 = vadd.f32 %v1682, %v1795
        %v1850 = vadd.f32 %v1683, %v1796
        %v1851 = vadd.f32 %v1684, %v1797
        %v1852 = vadd.f32 %v1685, %v1798
        %v1853 = vadd.f32 %v1686, %v1799
        %v1854 = vadd.f32 %v1687, %v1800
        %v1855 = vadd.f32 %v1688, %v1801
        %v1856 = vadd.f32 %v1689, %v1802
        %v1857 = vadd.f32 %v1690, %v1803
        %v1858 = vadd.f32 %v1691, %v1804
        %v1859 = vadd.f32 %v1692, %v1805
        %v1860 = vadd.f32 %v1693, %v1806
        %v1861 = vadd.f32 %v1694, %v1807
        %v1862 = vadd.f32 %v1695, %v1808
        %v1863 = vadd.f32 %v1696, %v1809
        %v1864 = vadd.f32 %v1697, %v1810
        %v1865 = vadd.f32 %v1698, %v1811
        %v1866 = vld [vmem:[%s1531 + $0x2] sm:$0xff]
        %v1867 = vld [vmem:[%s1531 + $0xa] sm:$0xff]
        %v1868 = vld [vmem:[%s1531 + $0x12] sm:$0x3]
        %v1869 = vld [vmem:[%s1531 + $0x1a] sm:$0xff]
        %v1870 = vld [vmem:[%s1531 + $0x22] sm:$0xff]
        %v1871 = vld [vmem:[%s1531 + $0x2a] sm:$0x3]
        %v1872 = vld [vmem:[%s1531 + $0x32] sm:$0xff]
        %v1873 = vld [vmem:[%s1531 + $0x3a] sm:$0xff]
        %v1874 = vld [vmem:[%s1531 + $0x42] sm:$0x3]
        %v1875 = vld [vmem:[%s1531 + $0x4a] sm:$0xff]
        %v1876 = vld [vmem:[%s1531 + $0x52] sm:$0xff]
        %v1877 = vld [vmem:[%s1531 + $0x5a] sm:$0x3]
        %v1878 = vld [vmem:[%s1531 + $0x62] sm:$0xff]
        %v1879 = vld [vmem:[%s1531 + $0x6a] sm:$0xff]
        %v1880 = vld [vmem:[%s1531 + $0x72] sm:$0x3]
        %v1881 = vld [vmem:[%s1531 + $0x7a] sm:$0xff]
        %v1882 = vld [vmem:[%s1531 + $0x82] sm:$0xff]
        %v1883 = vld [vmem:[%s1531 + $0x8a] sm:$0x3]
        %v1884 = vld [vmem:[%s1531 + $0x92] sm:$0xff]
        %v1885 = vld [vmem:[%s1531 + $0x9a] sm:$0xff]
        %v1886 = vld [vmem:[%s1531 + $0xa2] sm:$0x3]
        %v1887 = vld [vmem:[%s1531 + $0xaa] sm:$0xff]
        %v1888 = vld [vmem:[%s1531 + $0xb2] sm:$0xff]
        %v1889 = vld [vmem:[%s1531 + $0xba] sm:$0x3]
        %v1890 = vld [vmem:[%s1531 + $0xc2] sm:$0xff]
        %v1891 = vld [vmem:[%s1531 + $0xca] sm:$0xff]
        %v1892 = vld [vmem:[%s1531 + $0xd2] sm:$0x3]
        %v1893 = vld [vmem:[%s1531 + $0xda] sm:$0xff]
        %v1894 = vld [vmem:[%s1531 + $0xe2] sm:$0xff]
        %v1895 = vld [vmem:[%s1531 + $0xea] sm:$0x3]
        %v1896 = vld [vmem:[%s1531 + $0xf2] sm:$0xff]
        %v1897 = vld [vmem:[%s1531 + $0xfa] sm:$0xff]
        %v1898 = vld [vmem:[%s1531 + $0x102] sm:$0x3]
        %v1899 = vld [vmem:[%s1531 + $0x10a] sm:$0xff]
        %v1900 = vld [vmem:[%s1531 + $0x112] sm:$0xff]
        %v1901 = vld [vmem:[%s1531 + $0x11a] sm:$0x3]
        %v1902 = vld [vmem:[%s1531 + $0x122] sm:$0xff]
        %v1903 = vld [vmem:[%s1531 + $0x12a] sm:$0xff]
        %v1904 = vld [vmem:[%s1531 + $0x132] sm:$0x3]
        %v1905 = vld [vmem:[%s1531 + $0x13a] sm:$0xff]
        %v1906 = vld [vmem:[%s1531 + $0x142] sm:$0xff]
        %v1907 = vld [vmem:[%s1531 + $0x14a] sm:$0x3]
        %v1908 = vld [vmem:[%s1531 + $0x152] sm:$0xff]
        %v1909 = vld [vmem:[%s1531 + $0x15a] sm:$0xff]
        %v1910 = vld [vmem:[%s1531 + $0x162] sm:$0x3]
        %v1911 = vld [vmem:[%s1531 + $0x16a] sm:$0xff]
        %v1912 = vld [vmem:[%s1531 + $0x172] sm:$0xff]
        %v1913 = vld [vmem:[%s1531 + $0x17a] sm:$0x3]
        %v1914 = vld [vmem:[%s1531 + $0x182] sm:$0xff]
        %v1915 = vld [vmem:[%s1531 + $0x18a] sm:$0xff]
        %v1916 = vld [vmem:[%s1531 + $0x192] sm:$0x3]
        %v1917 = vld [vmem:[%s1531 + $0x19a] sm:$0xff]
        %v1918 = vld [vmem:[%s1531 + $0x1a2] sm:$0xff]
        %v1919 = vld [vmem:[%s1531 + $0x1aa] sm:$0x3]
        %v1920 = vld [vmem:[%s2 + $0x5] sm:$0x1]
        %v1921 = vlaneseq
        %v1922 = vshrl.u32 %v1921, 7
        %v1923 = vsub.s32 0, %v1922
        %v1924 = vrot.slane %v1920, %v1923
        %v1925 = vmul.f32 %v1866, %v1924
        %v1926 = vmul.f32 %v1867, %v1924
        %v1927 = vmul.f32 %v1868, %v1924
        %v1928 = vmul.f32 %v1869, %v1924
        %v1929 = vmul.f32 %v1870, %v1924
        %v1930 = vmul.f32 %v1871, %v1924
        %v1931 = vmul.f32 %v1872, %v1924
        %v1932 = vmul.f32 %v1873, %v1924
        %v1933 = vmul.f32 %v1874, %v1924
        %v1934 = vmul.f32 %v1875, %v1924
        %v1935 = vmul.f32 %v1876, %v1924
        %v1936 = vmul.f32 %v1877, %v1924
        %v1937 = vmul.f32 %v1878, %v1924
        %v1938 = vmul.f32 %v1879, %v1924
        %v1939 = vmul.f32 %v1880, %v1924
        %v1940 = vmul.f32 %v1881, %v1924
        %v1941 = vmul.f32 %v1882, %v1924
        %v1942 = vmul.f32 %v1883, %v1924
        %v1943 = vmul.f32 %v1884, %v1924
        %v1944 = vmul.f32 %v1885, %v1924
        %v1945 = vmul.f32 %v1886, %v1924
        %v1946 = vmul.f32 %v1887, %v1924
        %v1947 = vmul.f32 %v1888, %v1924
        %v1948 = vmul.f32 %v1889, %v1924
        %v1949 = vmul.f32 %v1890, %v1924
        %v1950 = vmul.f32 %v1891, %v1924
        %v1951 = vmul.f32 %v1892, %v1924
        %v1952 = vmul.f32 %v1893, %v1924
        %v1953 = vmul.f32 %v1894, %v1924
        %v1954 = vmul.f32 %v1895, %v1924
        %v1955 = vmul.f32 %v1896, %v1924
        %v1956 = vmul.f32 %v1897, %v1924
        %v1957 = vmul.f32 %v1898, %v1924
        %v1958 = vmul.f32 %v1899, %v1924
        %v1959 = vmul.f32 %v1900, %v1924
        %v1960 = vmul.f32 %v1901, %v1924
        %v1961 = vmul.f32 %v1902, %v1924
        %v1962 = vmul.f32 %v1903, %v1924
        %v1963 = vmul.f32 %v1904, %v1924
        %v1964 = vmul.f32 %v1905, %v1924
        %v1965 = vmul.f32 %v1906, %v1924
        %v1966 = vmul.f32 %v1907, %v1924
        %v1967 = vmul.f32 %v1908, %v1924
        %v1968 = vmul.f32 %v1909, %v1924
        %v1969 = vmul.f32 %v1910, %v1924
        %v1970 = vmul.f32 %v1911, %v1924
        %v1971 = vmul.f32 %v1912, %v1924
        %v1972 = vmul.f32 %v1913, %v1924
        %v1973 = vmul.f32 %v1914, %v1924
        %v1974 = vmul.f32 %v1915, %v1924
        %v1975 = vmul.f32 %v1916, %v1924
        %v1976 = vmul.f32 %v1917, %v1924
        %v1977 = vmul.f32 %v1918, %v1924
        %v1978 = vmul.f32 %v1919, %v1924
        %v1979 = vadd.f32 %v1812, %v1925
        %v1980 = vadd.f32 %v1813, %v1926
        %v1981 = vadd.f32 %v1814, %v1927
        %v1982 = vadd.f32 %v1815, %v1928
        %v1983 = vadd.f32 %v1816, %v1929
        %v1984 = vadd.f32 %v1817, %v1930
        %v1985 = vadd.f32 %v1818, %v1931
        %v1986 = vadd.f32 %v1819, %v1932
        %v1987 = vadd.f32 %v1820, %v1933
        %v1988 = vadd.f32 %v1821, %v1934
        %v1989 = vadd.f32 %v1822, %v1935
        %v1990 = vadd.f32 %v1823, %v1936
        %v1991 = vadd.f32 %v1824, %v1937
        %v1992 = vadd.f32 %v1825, %v1938
        %v1993 = vadd.f32 %v1826, %v1939
        %v1994 = vadd.f32 %v1827, %v1940
        %v1995 = vadd.f32 %v1828, %v1941
        %v1996 = vadd.f32 %v1829, %v1942
        %v1997 = vadd.f32 %v1830, %v1943
        %v1998 = vadd.f32 %v1831, %v1944
        %v1999 = vadd.f32 %v1832, %v1945
        %v2000 = vadd.f32 %v1833, %v1946
        %v2001 = vadd.f32 %v1834, %v1947
        %v2002 = vadd.f32 %v1835, %v1948
        %v2003 = vadd.f32 %v1836, %v1949
        %v2004 = vadd.f32 %v1837, %v1950
        %v2005 = vadd.f32 %v1838, %v1951
        %v2006 = vadd.f32 %v1839, %v1952
        %v2007 = vadd.f32 %v1840, %v1953
        %v2008 = vadd.f32 %v1841, %v1954
        %v2009 = vadd.f32 %v1842, %v1955
        %v2010 = vadd.f32 %v1843, %v1956
        %v2011 = vadd.f32 %v1844, %v1957
        %v2012 = vadd.f32 %v1845, %v1958
        %v2013 = vadd.f32 %v1846, %v1959
        %v2014 = vadd.f32 %v1847, %v1960
        %v2015 = vadd.f32 %v1848, %v1961
        %v2016 = vadd.f32 %v1849, %v1962
        %v2017 = vadd.f32 %v1850, %v1963
        %v2018 = vadd.f32 %v1851, %v1964
        %v2019 = vadd.f32 %v1852, %v1965
        %v2020 = vadd.f32 %v1853, %v1966
        %v2021 = vadd.f32 %v1854, %v1967
        %v2022 = vadd.f32 %v1855, %v1968
        %v2023 = vadd.f32 %v1856, %v1969
        %v2024 = vadd.f32 %v1857, %v1970
        %v2025 = vadd.f32 %v1858, %v1971
        %v2026 = vadd.f32 %v1859, %v1972
        %v2027 = vadd.f32 %v1860, %v1973
        %v2028 = vadd.f32 %v1861, %v1974
        %v2029 = vadd.f32 %v1862, %v1975
        %v2030 = vadd.f32 %v1863, %v1976
        %v2031 = vadd.f32 %v1864, %v1977
        %v2032 = vadd.f32 %v1865, %v1978
        %s2033 = scalar_lea.vmem [#allocation2], 48
        %v2034 = vld [vmem:[%s2033] sm:$0xff]
        %v2035 = vld [vmem:[%s2033 + $0x8] sm:$0xff]
        %v2036 = vld [vmem:[%s2033 + $0x10] sm:$0x3]
        %v2037 = vld [vmem:[%s2033 + $0x18] sm:$0xff]
        %v2038 = vld [vmem:[%s2033 + $0x20] sm:$0xff]
        %v2039 = vld [vmem:[%s2033 + $0x28] sm:$0x3]
        %v2040 = vld [vmem:[%s2033 + $0x30] sm:$0xff]
        %v2041 = vld [vmem:[%s2033 + $0x38] sm:$0xff]
        %v2042 = vld [vmem:[%s2033 + $0x40] sm:$0x3]
        %v2043 = vld [vmem:[%s2033 + $0x48] sm:$0xff]
        %v2044 = vld [vmem:[%s2033 + $0x50] sm:$0xff]
        %v2045 = vld [vmem:[%s2033 + $0x58] sm:$0x3]
        %v2046 = vld [vmem:[%s2033 + $0x60] sm:$0xff]
        %v2047 = vld [vmem:[%s2033 + $0x68] sm:$0xff]
        %v2048 = vld [vmem:[%s2033 + $0x70] sm:$0x3]
        %v2049 = vld [vmem:[%s2033 + $0x78] sm:$0xff]
        %v2050 = vld [vmem:[%s2033 + $0x80] sm:$0xff]
        %v2051 = vld [vmem:[%s2033 + $0x88] sm:$0x3]
        %v2052 = vld [vmem:[%s2033 + $0x90] sm:$0xff]
        %v2053 = vld [vmem:[%s2033 + $0x98] sm:$0xff]
        %v2054 = vld [vmem:[%s2033 + $0xa0] sm:$0x3]
        %v2055 = vld [vmem:[%s2033 + $0xa8] sm:$0xff]
        %v2056 = vld [vmem:[%s2033 + $0xb0] sm:$0xff]
        %v2057 = vld [vmem:[%s2033 + $0xb8] sm:$0x3]
        %v2058 = vld [vmem:[%s2033 + $0xc0] sm:$0xff]
        %v2059 = vld [vmem:[%s2033 + $0xc8] sm:$0xff]
        %v2060 = vld [vmem:[%s2033 + $0xd0] sm:$0x3]
        %v2061 = vld [vmem:[%s2033 + $0xd8] sm:$0xff]
        %v2062 = vld [vmem:[%s2033 + $0xe0] sm:$0xff]
        %v2063 = vld [vmem:[%s2033 + $0xe8] sm:$0x3]
        %v2064 = vld [vmem:[%s2033 + $0xf0] sm:$0xff]
        %v2065 = vld [vmem:[%s2033 + $0xf8] sm:$0xff]
        %v2066 = vld [vmem:[%s2033 + $0x100] sm:$0x3]
        %v2067 = vld [vmem:[%s2033 + $0x108] sm:$0xff]
        %v2068 = vld [vmem:[%s2033 + $0x110] sm:$0xff]
        %v2069 = vld [vmem:[%s2033 + $0x118] sm:$0x3]
        %v2070 = vld [vmem:[%s2033 + $0x120] sm:$0xff]
        %v2071 = vld [vmem:[%s2033 + $0x128] sm:$0xff]
        %v2072 = vld [vmem:[%s2033 + $0x130] sm:$0x3]
        %v2073 = vld [vmem:[%s2033 + $0x138] sm:$0xff]
        %v2074 = vld [vmem:[%s2033 + $0x140] sm:$0xff]
        %v2075 = vld [vmem:[%s2033 + $0x148] sm:$0x3]
        %v2076 = vld [vmem:[%s2033 + $0x150] sm:$0xff]
        %v2077 = vld [vmem:[%s2033 + $0x158] sm:$0xff]
        %v2078 = vld [vmem:[%s2033 + $0x160] sm:$0x3]
        %v2079 = vld [vmem:[%s2033 + $0x168] sm:$0xff]
        %v2080 = vld [vmem:[%s2033 + $0x170] sm:$0xff]
        %v2081 = vld [vmem:[%s2033 + $0x178] sm:$0x3]
        %v2082 = vld [vmem:[%s2033 + $0x180] sm:$0xff]
        %v2083 = vld [vmem:[%s2033 + $0x188] sm:$0xff]
        %v2084 = vld [vmem:[%s2033 + $0x190] sm:$0x3]
        %v2085 = vld [vmem:[%s2033 + $0x198] sm:$0xff]
        %v2086 = vld [vmem:[%s2033 + $0x1a0] sm:$0xff]
        %v2087 = vld [vmem:[%s2033 + $0x1a8] sm:$0x3]
        %v2088 = vld [vmem:[%s2 + $0x6] sm:$0x1]
        %v2089 = vlaneseq
        %v2090 = vshrl.u32 %v2089, 7
        %v2091 = vsub.s32 0, %v2090
        %v2092 = vrot.slane %v2088, %v2091
        %v2093 = vmul.f32 %v2034, %v2092
        %v2094 = vmul.f32 %v2035, %v2092
        %v2095 = vmul.f32 %v2036, %v2092
        %v2096 = vmul.f32 %v2037, %v2092
        %v2097 = vmul.f32 %v2038, %v2092
        %v2098 = vmul.f32 %v2039, %v2092
        %v2099 = vmul.f32 %v2040, %v2092
        %v2100 = vmul.f32 %v2041, %v2092
        %v2101 = vmul.f32 %v2042, %v2092
        %v2102 = vmul.f32 %v2043, %v2092
        %v2103 = vmul.f32 %v2044, %v2092
        %v2104 = vmul.f32 %v2045, %v2092
        %v2105 = vmul.f32 %v2046, %v2092
        %v2106 = vmul.f32 %v2047, %v2092
        %v2107 = vmul.f32 %v2048, %v2092
        %v2108 = vmul.f32 %v2049, %v2092
        %v2109 = vmul.f32 %v2050, %v2092
        %v2110 = vmul.f32 %v2051, %v2092
        %v2111 = vmul.f32 %v2052, %v2092
        %v2112 = vmul.f32 %v2053, %v2092
        %v2113 = vmul.f32 %v2054, %v2092
        %v2114 = vmul.f32 %v2055, %v2092
        %v2115 = vmul.f32 %v2056, %v2092
        %v2116 = vmul.f32 %v2057, %v2092
        %v2117 = vmul.f32 %v2058, %v2092
        %v2118 = vmul.f32 %v2059, %v2092
        %v2119 = vmul.f32 %v2060, %v2092
        %v2120 = vmul.f32 %v2061, %v2092
        %v2121 = vmul.f32 %v2062, %v2092
        %v2122 = vmul.f32 %v2063, %v2092
        %v2123 = vmul.f32 %v2064, %v2092
        %v2124 = vmul.f32 %v2065, %v2092
        %v2125 = vmul.f32 %v2066, %v2092
        %v2126 = vmul.f32 %v2067, %v2092
        %v2127 = vmul.f32 %v2068, %v2092
        %v2128 = vmul.f32 %v2069, %v2092
        %v2129 = vmul.f32 %v2070, %v2092
        %v2130 = vmul.f32 %v2071, %v2092
        %v2131 = vmul.f32 %v2072, %v2092
        %v2132 = vmul.f32 %v2073, %v2092
        %v2133 = vmul.f32 %v2074, %v2092
        %v2134 = vmul.f32 %v2075, %v2092
        %v2135 = vmul.f32 %v2076, %v2092
        %v2136 = vmul.f32 %v2077, %v2092
        %v2137 = vmul.f32 %v2078, %v2092
        %v2138 = vmul.f32 %v2079, %v2092
        %v2139 = vmul.f32 %v2080, %v2092
        %v2140 = vmul.f32 %v2081, %v2092
        %v2141 = vmul.f32 %v2082, %v2092
        %v2142 = vmul.f32 %v2083, %v2092
        %v2143 = vmul.f32 %v2084, %v2092
        %v2144 = vmul.f32 %v2085, %v2092
        %v2145 = vmul.f32 %v2086, %v2092
        %v2146 = vmul.f32 %v2087, %v2092
        %v2147 = vadd.f32 %v1979, %v2093
        %v2148 = vadd.f32 %v1980, %v2094
        %v2149 = vadd.f32 %v1981, %v2095
        %v2150 = vadd.f32 %v1982, %v2096
        %v2151 = vadd.f32 %v1983, %v2097
        %v2152 = vadd.f32 %v1984, %v2098
        %v2153 = vadd.f32 %v1985, %v2099
        %v2154 = vadd.f32 %v1986, %v2100
        %v2155 = vadd.f32 %v1987, %v2101
        %v2156 = vadd.f32 %v1988, %v2102
        %v2157 = vadd.f32 %v1989, %v2103
        %v2158 = vadd.f32 %v1990, %v2104
        %v2159 = vadd.f32 %v1991, %v2105
        %v2160 = vadd.f32 %v1992, %v2106
        %v2161 = vadd.f32 %v1993, %v2107
        %v2162 = vadd.f32 %v1994, %v2108
        %v2163 = vadd.f32 %v1995, %v2109
        %v2164 = vadd.f32 %v1996, %v2110
        %v2165 = vadd.f32 %v1997, %v2111
        %v2166 = vadd.f32 %v1998, %v2112
        %v2167 = vadd.f32 %v1999, %v2113
        %v2168 = vadd.f32 %v2000, %v2114
        %v2169 = vadd.f32 %v2001, %v2115
        %v2170 = vadd.f32 %v2002, %v2116
        %v2171 = vadd.f32 %v2003, %v2117
        %v2172 = vadd.f32 %v2004, %v2118
        %v2173 = vadd.f32 %v2005, %v2119
        %v2174 = vadd.f32 %v2006, %v2120
        %v2175 = vadd.f32 %v2007, %v2121
        %v2176 = vadd.f32 %v2008, %v2122
        %v2177 = vadd.f32 %v2009, %v2123
        %v2178 = vadd.f32 %v2010, %v2124
        %v2179 = vadd.f32 %v2011, %v2125
        %v2180 = vadd.f32 %v2012, %v2126
        %v2181 = vadd.f32 %v2013, %v2127
        %v2182 = vadd.f32 %v2014, %v2128
        %v2183 = vadd.f32 %v2015, %v2129
        %v2184 = vadd.f32 %v2016, %v2130
        %v2185 = vadd.f32 %v2017, %v2131
        %v2186 = vadd.f32 %v2018, %v2132
        %v2187 = vadd.f32 %v2019, %v2133
        %v2188 = vadd.f32 %v2020, %v2134
        %v2189 = vadd.f32 %v2021, %v2135
        %v2190 = vadd.f32 %v2022, %v2136
        %v2191 = vadd.f32 %v2023, %v2137
        %v2192 = vadd.f32 %v2024, %v2138
        %v2193 = vadd.f32 %v2025, %v2139
        %v2194 = vadd.f32 %v2026, %v2140
        %v2195 = vadd.f32 %v2027, %v2141
        %v2196 = vadd.f32 %v2028, %v2142
        %v2197 = vadd.f32 %v2029, %v2143
        %v2198 = vadd.f32 %v2030, %v2144
        %v2199 = vadd.f32 %v2031, %v2145
        %v2200 = vadd.f32 %v2032, %v2146
        %v2201 = vld [vmem:[%s2033 + $0x1] sm:$0xff]
        %v2202 = vld [vmem:[%s2033 + $0x9] sm:$0xff]
        %v2203 = vld [vmem:[%s2033 + $0x11] sm:$0x3]
        %v2204 = vld [vmem:[%s2033 + $0x19] sm:$0xff]
        %v2205 = vld [vmem:[%s2033 + $0x21] sm:$0xff]
        %v2206 = vld [vmem:[%s2033 + $0x29] sm:$0x3]
        %v2207 = vld [vmem:[%s2033 + $0x31] sm:$0xff]
        %v2208 = vld [vmem:[%s2033 + $0x39] sm:$0xff]
        %v2209 = vld [vmem:[%s2033 + $0x41] sm:$0x3]
        %v2210 = vld [vmem:[%s2033 + $0x49] sm:$0xff]
        %v2211 = vld [vmem:[%s2033 + $0x51] sm:$0xff]
        %v2212 = vld [vmem:[%s2033 + $0x59] sm:$0x3]
        %v2213 = vld [vmem:[%s2033 + $0x61] sm:$0xff]
        %v2214 = vld [vmem:[%s2033 + $0x69] sm:$0xff]
        %v2215 = vld [vmem:[%s2033 + $0x71] sm:$0x3]
        %v2216 = vld [vmem:[%s2033 + $0x79] sm:$0xff]
        %v2217 = vld [vmem:[%s2033 + $0x81] sm:$0xff]
        %v2218 = vld [vmem:[%s2033 + $0x89] sm:$0x3]
        %v2219 = vld [vmem:[%s2033 + $0x91] sm:$0xff]
        %v2220 = vld [vmem:[%s2033 + $0x99] sm:$0xff]
        %v2221 = vld [vmem:[%s2033 + $0xa1] sm:$0x3]
        %v2222 = vld [vmem:[%s2033 + $0xa9] sm:$0xff]
        %v2223 = vld [vmem:[%s2033 + $0xb1] sm:$0xff]
        %v2224 = vld [vmem:[%s2033 + $0xb9] sm:$0x3]
        %v2225 = vld [vmem:[%s2033 + $0xc1] sm:$0xff]
        %v2226 = vld [vmem:[%s2033 + $0xc9] sm:$0xff]
        %v2227 = vld [vmem:[%s2033 + $0xd1] sm:$0x3]
        %v2228 = vld [vmem:[%s2033 + $0xd9] sm:$0xff]
        %v2229 = vld [vmem:[%s2033 + $0xe1] sm:$0xff]
        %v2230 = vld [vmem:[%s2033 + $0xe9] sm:$0x3]
        %v2231 = vld [vmem:[%s2033 + $0xf1] sm:$0xff]
        %v2232 = vld [vmem:[%s2033 + $0xf9] sm:$0xff]
        %v2233 = vld [vmem:[%s2033 + $0x101] sm:$0x3]
        %v2234 = vld [vmem:[%s2033 + $0x109] sm:$0xff]
        %v2235 = vld [vmem:[%s2033 + $0x111] sm:$0xff]
        %v2236 = vld [vmem:[%s2033 + $0x119] sm:$0x3]
        %v2237 = vld [vmem:[%s2033 + $0x121] sm:$0xff]
        %v2238 = vld [vmem:[%s2033 + $0x129] sm:$0xff]
        %v2239 = vld [vmem:[%s2033 + $0x131] sm:$0x3]
        %v2240 = vld [vmem:[%s2033 + $0x139] sm:$0xff]
        %v2241 = vld [vmem:[%s2033 + $0x141] sm:$0xff]
        %v2242 = vld [vmem:[%s2033 + $0x149] sm:$0x3]
        %v2243 = vld [vmem:[%s2033 + $0x151] sm:$0xff]
        %v2244 = vld [vmem:[%s2033 + $0x159] sm:$0xff]
        %v2245 = vld [vmem:[%s2033 + $0x161] sm:$0x3]
        %v2246 = vld [vmem:[%s2033 + $0x169] sm:$0xff]
        %v2247 = vld [vmem:[%s2033 + $0x171] sm:$0xff]
        %v2248 = vld [vmem:[%s2033 + $0x179] sm:$0x3]
        %v2249 = vld [vmem:[%s2033 + $0x181] sm:$0xff]
        %v2250 = vld [vmem:[%s2033 + $0x189] sm:$0xff]
        %v2251 = vld [vmem:[%s2033 + $0x191] sm:$0x3]
        %v2252 = vld [vmem:[%s2033 + $0x199] sm:$0xff]
        %v2253 = vld [vmem:[%s2033 + $0x1a1] sm:$0xff]
        %v2254 = vld [vmem:[%s2033 + $0x1a9] sm:$0x3]
        %v2255 = vld [vmem:[%s2 + $0x7] sm:$0x1]
        %v2256 = vlaneseq
        %v2257 = vshrl.u32 %v2256, 7
        %v2258 = vsub.s32 0, %v2257
        %v2259 = vrot.slane %v2255, %v2258
        %v2260 = vmul.f32 %v2201, %v2259
        %v2261 = vmul.f32 %v2202, %v2259
        %v2262 = vmul.f32 %v2203, %v2259
        %v2263 = vmul.f32 %v2204, %v2259
        %v2264 = vmul.f32 %v2205, %v2259
        %v2265 = vmul.f32 %v2206, %v2259
        %v2266 = vmul.f32 %v2207, %v2259
        %v2267 = vmul.f32 %v2208, %v2259
        %v2268 = vmul.f32 %v2209, %v2259
        %v2269 = vmul.f32 %v2210, %v2259
        %v2270 = vmul.f32 %v2211, %v2259
        %v2271 = vmul.f32 %v2212, %v2259
        %v2272 = vmul.f32 %v2213, %v2259
        %v2273 = vmul.f32 %v2214, %v2259
        %v2274 = vmul.f32 %v2215, %v2259
        %v2275 = vmul.f32 %v2216, %v2259
        %v2276 = vmul.f32 %v2217, %v2259
        %v2277 = vmul.f32 %v2218, %v2259
        %v2278 = vmul.f32 %v2219, %v2259
        %v2279 = vmul.f32 %v2220, %v2259
        %v2280 = vmul.f32 %v2221, %v2259
        %v2281 = vmul.f32 %v2222, %v2259
        %v2282 = vmul.f32 %v2223, %v2259
        %v2283 = vmul.f32 %v2224, %v2259
        %v2284 = vmul.f32 %v2225, %v2259
        %v2285 = vmul.f32 %v2226, %v2259
        %v2286 = vmul.f32 %v2227, %v2259
        %v2287 = vmul.f32 %v2228, %v2259
        %v2288 = vmul.f32 %v2229, %v2259
        %v2289 = vmul.f32 %v2230, %v2259
        %v2290 = vmul.f32 %v2231, %v2259
        %v2291 = vmul.f32 %v2232, %v2259
        %v2292 = vmul.f32 %v2233, %v2259
        %v2293 = vmul.f32 %v2234, %v2259
        %v2294 = vmul.f32 %v2235, %v2259
        %v2295 = vmul.f32 %v2236, %v2259
        %v2296 = vmul.f32 %v2237, %v2259
        %v2297 = vmul.f32 %v2238, %v2259
        %v2298 = vmul.f32 %v2239, %v2259
        %v2299 = vmul.f32 %v2240, %v2259
        %v2300 = vmul.f32 %v2241, %v2259
        %v2301 = vmul.f32 %v2242, %v2259
        %v2302 = vmul.f32 %v2243, %v2259
        %v2303 = vmul.f32 %v2244, %v2259
        %v2304 = vmul.f32 %v2245, %v2259
        %v2305 = vmul.f32 %v2246, %v2259
        %v2306 = vmul.f32 %v2247, %v2259
        %v2307 = vmul.f32 %v2248, %v2259
        %v2308 = vmul.f32 %v2249, %v2259
        %v2309 = vmul.f32 %v2250, %v2259
        %v2310 = vmul.f32 %v2251, %v2259
        %v2311 = vmul.f32 %v2252, %v2259
        %v2312 = vmul.f32 %v2253, %v2259
        %v2313 = vmul.f32 %v2254, %v2259
        %v2314 = vadd.f32 %v2147, %v2260
        %v2315 = vadd.f32 %v2148, %v2261
        %v2316 = vadd.f32 %v2149, %v2262
        %v2317 = vadd.f32 %v2150, %v2263
        %v2318 = vadd.f32 %v2151, %v2264
        %v2319 = vadd.f32 %v2152, %v2265
        %v2320 = vadd.f32 %v2153, %v2266
        %v2321 = vadd.f32 %v2154, %v2267
        %v2322 = vadd.f32 %v2155, %v2268
        %v2323 = vadd.f32 %v2156, %v2269
        %v2324 = vadd.f32 %v2157, %v2270
        %v2325 = vadd.f32 %v2158, %v2271
        %v2326 = vadd.f32 %v2159, %v2272
        %v2327 = vadd.f32 %v2160, %v2273
        %v2328 = vadd.f32 %v2161, %v2274
        %v2329 = vadd.f32 %v2162, %v2275
        %v2330 = vadd.f32 %v2163, %v2276
        %v2331 = vadd.f32 %v2164, %v2277
        %v2332 = vadd.f32 %v2165, %v2278
        %v2333 = vadd.f32 %v2166, %v2279
        %v2334 = vadd.f32 %v2167, %v2280
        %v2335 = vadd.f32 %v2168, %v2281
        %v2336 = vadd.f32 %v2169, %v2282
        %v2337 = vadd.f32 %v2170, %v2283
        %v2338 = vadd.f32 %v2171, %v2284
        %v2339 = vadd.f32 %v2172, %v2285
        %v2340 = vadd.f32 %v2173, %v2286
        %v2341 = vadd.f32 %v2174, %v2287
        %v2342 = vadd.f32 %v2175, %v2288
        %v2343 = vadd.f32 %v2176, %v2289
        %v2344 = vadd.f32 %v2177, %v2290
        %v2345 = vadd.f32 %v2178, %v2291
        %v2346 = vadd.f32 %v2179, %v2292
        %v2347 = vadd.f32 %v2180, %v2293
        %v2348 = vadd.f32 %v2181, %v2294
        %v2349 = vadd.f32 %v2182, %v2295
        %v2350 = vadd.f32 %v2183, %v2296
        %v2351 = vadd.f32 %v2184, %v2297
        %v2352 = vadd.f32 %v2185, %v2298
        %v2353 = vadd.f32 %v2186, %v2299
        %v2354 = vadd.f32 %v2187, %v2300
        %v2355 = vadd.f32 %v2188, %v2301
        %v2356 = vadd.f32 %v2189, %v2302
        %v2357 = vadd.f32 %v2190, %v2303
        %v2358 = vadd.f32 %v2191, %v2304
        %v2359 = vadd.f32 %v2192, %v2305
        %v2360 = vadd.f32 %v2193, %v2306
        %v2361 = vadd.f32 %v2194, %v2307
        %v2362 = vadd.f32 %v2195, %v2308
        %v2363 = vadd.f32 %v2196, %v2309
        %v2364 = vadd.f32 %v2197, %v2310
        %v2365 = vadd.f32 %v2198, %v2311
        %v2366 = vadd.f32 %v2199, %v2312
        %v2367 = vadd.f32 %v2200, %v2313
        %v2368 = vld [vmem:[%s2033 + $0x2] sm:$0xff]
        %v2369 = vld [vmem:[%s2033 + $0xa] sm:$0xff]
        %v2370 = vld [vmem:[%s2033 + $0x12] sm:$0x3]
        %v2371 = vld [vmem:[%s2033 + $0x1a] sm:$0xff]
        %v2372 = vld [vmem:[%s2033 + $0x22] sm:$0xff]
        %v2373 = vld [vmem:[%s2033 + $0x2a] sm:$0x3]
        %v2374 = vld [vmem:[%s2033 + $0x32] sm:$0xff]
        %v2375 = vld [vmem:[%s2033 + $0x3a] sm:$0xff]
        %v2376 = vld [vmem:[%s2033 + $0x42] sm:$0x3]
        %v2377 = vld [vmem:[%s2033 + $0x4a] sm:$0xff]
        %v2378 = vld [vmem:[%s2033 + $0x52] sm:$0xff]
        %v2379 = vld [vmem:[%s2033 + $0x5a] sm:$0x3]
        %v2380 = vld [vmem:[%s2033 + $0x62] sm:$0xff]
        %v2381 = vld [vmem:[%s2033 + $0x6a] sm:$0xff]
        %v2382 = vld [vmem:[%s2033 + $0x72] sm:$0x3]
        %v2383 = vld [vmem:[%s2033 + $0x7a] sm:$0xff]
        %v2384 = vld [vmem:[%s2033 + $0x82] sm:$0xff]
        %v2385 = vld [vmem:[%s2033 + $0x8a] sm:$0x3]
        %v2386 = vld [vmem:[%s2033 + $0x92] sm:$0xff]
        %v2387 = vld [vmem:[%s2033 + $0x9a] sm:$0xff]
        %v2388 = vld [vmem:[%s2033 + $0xa2] sm:$0x3]
        %v2389 = vld [vmem:[%s2033 + $0xaa] sm:$0xff]
        %v2390 = vld [vmem:[%s2033 + $0xb2] sm:$0xff]
        %v2391 = vld [vmem:[%s2033 + $0xba] sm:$0x3]
        %v2392 = vld [vmem:[%s2033 + $0xc2] sm:$0xff]
        %v2393 = vld [vmem:[%s2033 + $0xca] sm:$0xff]
        %v2394 = vld [vmem:[%s2033 + $0xd2] sm:$0x3]
        %v2395 = vld [vmem:[%s2033 + $0xda] sm:$0xff]
        %v2396 = vld [vmem:[%s2033 + $0xe2] sm:$0xff]
        %v2397 = vld [vmem:[%s2033 + $0xea] sm:$0x3]
        %v2398 = vld [vmem:[%s2033 + $0xf2] sm:$0xff]
        %v2399 = vld [vmem:[%s2033 + $0xfa] sm:$0xff]
        %v2400 = vld [vmem:[%s2033 + $0x102] sm:$0x3]
        %v2401 = vld [vmem:[%s2033 + $0x10a] sm:$0xff]
        %v2402 = vld [vmem:[%s2033 + $0x112] sm:$0xff]
        %v2403 = vld [vmem:[%s2033 + $0x11a] sm:$0x3]
        %v2404 = vld [vmem:[%s2033 + $0x122] sm:$0xff]
        %v2405 = vld [vmem:[%s2033 + $0x12a] sm:$0xff]
        %v2406 = vld [vmem:[%s2033 + $0x132] sm:$0x3]
        %v2407 = vld [vmem:[%s2033 + $0x13a] sm:$0xff]
        %v2408 = vld [vmem:[%s2033 + $0x142] sm:$0xff]
        %v2409 = vld [vmem:[%s2033 + $0x14a] sm:$0x3]
        %v2410 = vld [vmem:[%s2033 + $0x152] sm:$0xff]
        %v2411 = vld [vmem:[%s2033 + $0x15a] sm:$0xff]
        %v2412 = vld [vmem:[%s2033 + $0x162] sm:$0x3]
        %v2413 = vld [vmem:[%s2033 + $0x16a] sm:$0xff]
        %v2414 = vld [vmem:[%s2033 + $0x172] sm:$0xff]
        %v2415 = vld [vmem:[%s2033 + $0x17a] sm:$0x3]
        %v2416 = vld [vmem:[%s2033 + $0x182] sm:$0xff]
        %v2417 = vld [vmem:[%s2033 + $0x18a] sm:$0xff]
        %v2418 = vld [vmem:[%s2033 + $0x192] sm:$0x3]
        %v2419 = vld [vmem:[%s2033 + $0x19a] sm:$0xff]
        %v2420 = vld [vmem:[%s2033 + $0x1a2] sm:$0xff]
        %v2421 = vld [vmem:[%s2033 + $0x1aa] sm:$0x3]
        %v2422 = vld [vmem:[%s2 + $0x8] sm:$0x1]
        %v2423 = vlaneseq
        %v2424 = vshrl.u32 %v2423, 7
        %v2425 = vsub.s32 0, %v2424
        %v2426 = vrot.slane %v2422, %v2425
        %v2427 = vmul.f32 %v2368, %v2426
        %v2428 = vmul.f32 %v2369, %v2426
        %v2429 = vmul.f32 %v2370, %v2426
        %v2430 = vmul.f32 %v2371, %v2426
        %v2431 = vmul.f32 %v2372, %v2426
        %v2432 = vmul.f32 %v2373, %v2426
        %v2433 = vmul.f32 %v2374, %v2426
        %v2434 = vmul.f32 %v2375, %v2426
        %v2435 = vmul.f32 %v2376, %v2426
        %v2436 = vmul.f32 %v2377, %v2426
        %v2437 = vmul.f32 %v2378, %v2426
        %v2438 = vmul.f32 %v2379, %v2426
        %v2439 = vmul.f32 %v2380, %v2426
        %v2440 = vmul.f32 %v2381, %v2426
        %v2441 = vmul.f32 %v2382, %v2426
        %v2442 = vmul.f32 %v2383, %v2426
        %v2443 = vmul.f32 %v2384, %v2426
        %v2444 = vmul.f32 %v2385, %v2426
        %v2445 = vmul.f32 %v2386, %v2426
        %v2446 = vmul.f32 %v2387, %v2426
        %v2447 = vmul.f32 %v2388, %v2426
        %v2448 = vmul.f32 %v2389, %v2426
        %v2449 = vmul.f32 %v2390, %v2426
        %v2450 = vmul.f32 %v2391, %v2426
        %v2451 = vmul.f32 %v2392, %v2426
        %v2452 = vmul.f32 %v2393, %v2426
        %v2453 = vmul.f32 %v2394, %v2426
        %v2454 = vmul.f32 %v2395, %v2426
        %v2455 = vmul.f32 %v2396, %v2426
        %v2456 = vmul.f32 %v2397, %v2426
        %v2457 = vmul.f32 %v2398, %v2426
        %v2458 = vmul.f32 %v2399, %v2426
        %v2459 = vmul.f32 %v2400, %v2426
        %v2460 = vmul.f32 %v2401, %v2426
        %v2461 = vmul.f32 %v2402, %v2426
        %v2462 = vmul.f32 %v2403, %v2426
        %v2463 = vmul.f32 %v2404, %v2426
        %v2464 = vmul.f32 %v2405, %v2426
        %v2465 = vmul.f32 %v2406, %v2426
        %v2466 = vmul.f32 %v2407, %v2426
        %v2467 = vmul.f32 %v2408, %v2426
        %v2468 = vmul.f32 %v2409, %v2426
        %v2469 = vmul.f32 %v2410, %v2426
        %v2470 = vmul.f32 %v2411, %v2426
        %v2471 = vmul.f32 %v2412, %v2426
        %v2472 = vmul.f32 %v2413, %v2426
        %v2473 = vmul.f32 %v2414, %v2426
        %v2474 = vmul.f32 %v2415, %v2426
        %v2475 = vmul.f32 %v2416, %v2426
        %v2476 = vmul.f32 %v2417, %v2426
        %v2477 = vmul.f32 %v2418, %v2426
        %v2478 = vmul.f32 %v2419, %v2426
        %v2479 = vmul.f32 %v2420, %v2426
        %v2480 = vmul.f32 %v2421, %v2426
        %v2481 = vadd.f32 %v2314, %v2427
        %v2482 = vadd.f32 %v2315, %v2428
        %v2483 = vadd.f32 %v2316, %v2429
        %v2484 = vadd.f32 %v2317, %v2430
        %v2485 = vadd.f32 %v2318, %v2431
        %v2486 = vadd.f32 %v2319, %v2432
        %v2487 = vadd.f32 %v2320, %v2433
        %v2488 = vadd.f32 %v2321, %v2434
        %v2489 = vadd.f32 %v2322, %v2435
        %v2490 = vadd.f32 %v2323, %v2436
        %v2491 = vadd.f32 %v2324, %v2437
        %v2492 = vadd.f32 %v2325, %v2438
        %v2493 = vadd.f32 %v2326, %v2439
        %v2494 = vadd.f32 %v2327, %v2440
        %v2495 = vadd.f32 %v2328, %v2441
        %v2496 = vadd.f32 %v2329, %v2442
        %v2497 = vadd.f32 %v2330, %v2443
        %v2498 = vadd.f32 %v2331, %v2444
        %v2499 = vadd.f32 %v2332, %v2445
        %v2500 = vadd.f32 %v2333, %v2446
        %v2501 = vadd.f32 %v2334, %v2447
        %v2502 = vadd.f32 %v2335, %v2448
        %v2503 = vadd.f32 %v2336, %v2449
        %v2504 = vadd.f32 %v2337, %v2450
        %v2505 = vadd.f32 %v2338, %v2451
        %v2506 = vadd.f32 %v2339, %v2452
        %v2507 = vadd.f32 %v2340, %v2453
        %v2508 = vadd.f32 %v2341, %v2454
        %v2509 = vadd.f32 %v2342, %v2455
        %v2510 = vadd.f32 %v2343, %v2456
        %v2511 = vadd.f32 %v2344, %v2457
        %v2512 = vadd.f32 %v2345, %v2458
        %v2513 = vadd.f32 %v2346, %v2459
        %v2514 = vadd.f32 %v2347, %v2460
        %v2515 = vadd.f32 %v2348, %v2461
        %v2516 = vadd.f32 %v2349, %v2462
        %v2517 = vadd.f32 %v2350, %v2463
        %v2518 = vadd.f32 %v2351, %v2464
        %v2519 = vadd.f32 %v2352, %v2465
        %v2520 = vadd.f32 %v2353, %v2466
        %v2521 = vadd.f32 %v2354, %v2467
        %v2522 = vadd.f32 %v2355, %v2468
        %v2523 = vadd.f32 %v2356, %v2469
        %v2524 = vadd.f32 %v2357, %v2470
        %v2525 = vadd.f32 %v2358, %v2471
        %v2526 = vadd.f32 %v2359, %v2472
        %v2527 = vadd.f32 %v2360, %v2473
        %v2528 = vadd.f32 %v2361, %v2474
        %v2529 = vadd.f32 %v2362, %v2475
        %v2530 = vadd.f32 %v2363, %v2476
        %v2531 = vadd.f32 %v2364, %v2477
        %v2532 = vadd.f32 %v2365, %v2478
        %v2533 = vadd.f32 %v2366, %v2479
        %v2534 = vadd.f32 %v2367, %v2480
        %v2535 = vlaneseq
        %v2536 = vshrl.u32 %v2535, 7
        %v2537 = vadd.s32 %v2536, 8
        %v2538 = vadd.s32 %v2536, 16
        %vm2539 = vcmp.gt.s32.totalorder %v2536, 0
        %vm2540 = vcmp.gt.s32.totalorder %v2537, 0
        %vm2541 = vcmp.gt.s32.totalorder %v2538, 0
        %vm2542 = vmand 0, %vm2539
        %vm2543 = vmand 0, %vm2540
        %vm2544 = vmand 0, %vm2541
        %vm2545 = vmand 1, %vm2539
        %vm2546 = vmand 1, %vm2540
        %vm2547 = vmand 1, %vm2541
        %vm2548 = vcmp.lt.s32.totalorder %v2536, 17
        %vm2549 = vcmp.lt.s32.totalorder %v2537, 17
        %vm2550 = vcmp.lt.s32.totalorder %v2538, 17
        %vm2551 = vmand %vm2542, %vm2548
        %vm2552 = vmand %vm2543, %vm2549
        %vm2553 = vmand %vm2544, %vm2550
        %vm2554 = vmand %vm2545, %vm2548
        %vm2555 = vmand %vm2546, %vm2549
        %vm2556 = vmand %vm2547, %vm2550
        %v2557 = vld [vmem:[%s3] sm:$0x1]
        %v2559 = vlaneseq
        %v2560 = vshrl.u32 %v2559, 7
        %v2561 = vsub.s32 0, %v2560
        %v2562 = vrot.slane %v2557, %v2561
        %v2564 = vadd.f32 %v2481, %v2562
        %v2565 = vadd.f32 %v2482, %v2562
        %v2566 = vadd.f32 %v2483, %v2562
        %v2567 = vadd.f32 %v2484, %v2562
        %v2568 = vadd.f32 %v2485, %v2562
        %v2569 = vadd.f32 %v2486, %v2562
        %v2570 = vadd.f32 %v2487, %v2562
        %v2571 = vadd.f32 %v2488, %v2562
        %v2572 = vadd.f32 %v2489, %v2562
        %v2573 = vadd.f32 %v2490, %v2562
        %v2574 = vadd.f32 %v2491, %v2562
        %v2575 = vadd.f32 %v2492, %v2562
        %v2576 = vadd.f32 %v2493, %v2562
        %v2577 = vadd.f32 %v2494, %v2562
        %v2578 = vadd.f32 %v2495, %v2562
        %v2579 = vadd.f32 %v2496, %v2562
        %v2580 = vadd.f32 %v2497, %v2562
        %v2581 = vadd.f32 %v2498, %v2562
        %v2582 = vadd.f32 %v2499, %v2562
        %v2583 = vadd.f32 %v2500, %v2562
        %v2584 = vadd.f32 %v2501, %v2562
        %v2585 = vadd.f32 %v2502, %v2562
        %v2586 = vadd.f32 %v2503, %v2562
        %v2587 = vadd.f32 %v2504, %v2562
        %v2588 = vadd.f32 %v2505, %v2562
        %v2589 = vadd.f32 %v2506, %v2562
        %v2590 = vadd.f32 %v2507, %v2562
        %v2591 = vadd.f32 %v2508, %v2562
        %v2592 = vadd.f32 %v2509, %v2562
        %v2593 = vadd.f32 %v2510, %v2562
        %v2594 = vadd.f32 %v2511, %v2562
        %v2595 = vadd.f32 %v2512, %v2562
        %v2596 = vadd.f32 %v2513, %v2562
        %v2597 = vadd.f32 %v2514, %v2562
        %v2598 = vadd.f32 %v2515, %v2562
        %v2599 = vadd.f32 %v2516, %v2562
        %v2600 = vadd.f32 %v2517, %v2562
        %v2601 = vadd.f32 %v2518, %v2562
        %v2602 = vadd.f32 %v2519, %v2562
        %v2603 = vadd.f32 %v2520, %v2562
        %v2604 = vadd.f32 %v2521, %v2562
        %v2605 = vadd.f32 %v2522, %v2562
        %v2606 = vadd.f32 %v2523, %v2562
        %v2607 = vadd.f32 %v2524, %v2562
        %v2608 = vadd.f32 %v2525, %v2562
        %v2609 = vadd.f32 %v2526, %v2562
        %v2610 = vadd.f32 %v2527, %v2562
        %v2611 = vadd.f32 %v2528, %v2562
        %v2612 = vadd.f32 %v2529, %v2562
        %v2613 = vadd.f32 %v2530, %v2562
        %v2614 = vadd.f32 %v2531, %v2562
        %v2615 = vadd.f32 %v2532, %v2562
        %v2616 = vadd.f32 %v2533, %v2562
        %v2617 = vadd.f32 %v2534, %v2562
        %v2618 = vsel %vm2551, 1, 0
        %v2619 = vsel %vm2552, 1, 0
        %v2620 = vsel %vm2553, 1, 0
        %v2621 = vsel %vm2554, 1, 0
        %v2622 = vsel %vm2555, 1, 0
        %v2623 = vsel %vm2556, 1, 0
        %vm2624 = vcmp.eq.s32.totalorder %v2618, 1
        %vm2625 = vcmp.eq.s32.totalorder %v2619, 1
        %vm2626 = vcmp.eq.s32.totalorder %v2620, 1
        %vm2627 = vcmp.eq.s32.totalorder %v2621, 1
        %vm2628 = vcmp.eq.s32.totalorder %v2622, 1
        %vm2629 = vcmp.eq.s32.totalorder %v2623, 1
        %v2630 = vsel %vm2624, %v2564, 0.0
        %v2631 = vsel %vm2625, %v2565, 0.0
        %v2632 = vsel %vm2626, %v2566, 0.0
        %v2633 = vsel %vm2627, %v2567, 0.0
        %v2634 = vsel %vm2628, %v2568, 0.0
        %v2635 = vsel %vm2629, %v2569, 0.0
        %v2636 = vsel %vm2627, %v2570, 0.0
        %v2637 = vsel %vm2628, %v2571, 0.0
        %v2638 = vsel %vm2629, %v2572, 0.0
        %v2639 = vsel %vm2627, %v2573, 0.0
        %v2640 = vsel %vm2628, %v2574, 0.0
        %v2641 = vsel %vm2629, %v2575, 0.0
        %v2642 = vsel %vm2627, %v2576, 0.0
        %v2643 = vsel %vm2628, %v2577, 0.0
        %v2644 = vsel %vm2629, %v2578, 0.0
        %v2645 = vsel %vm2627, %v2579, 0.0
        %v2646 = vsel %vm2628, %v2580, 0.0
        %v2647 = vsel %vm2629, %v2581, 0.0
        %v2648 = vsel %vm2627, %v2582, 0.0
        %v2649 = vsel %vm2628, %v2583, 0.0
        %v2650 = vsel %vm2629, %v2584, 0.0
        %v2651 = vsel %vm2627, %v2585, 0.0
        %v2652 = vsel %vm2628, %v2586, 0.0
        %v2653 = vsel %vm2629, %v2587, 0.0
        %v2654 = vsel %vm2627, %v2588, 0.0
        %v2655 = vsel %vm2628, %v2589, 0.0
        %v2656 = vsel %vm2629, %v2590, 0.0
        %v2657 = vsel %vm2627, %v2591, 0.0
        %v2658 = vsel %vm2628, %v2592, 0.0
        %v2659 = vsel %vm2629, %v2593, 0.0
        %v2660 = vsel %vm2627, %v2594, 0.0
        %v2661 = vsel %vm2628, %v2595, 0.0
        %v2662 = vsel %vm2629, %v2596, 0.0
        %v2663 = vsel %vm2627, %v2597, 0.0
        %v2664 = vsel %vm2628, %v2598, 0.0
        %v2665 = vsel %vm2629, %v2599, 0.0
        %v2666 = vsel %vm2627, %v2600, 0.0
        %v2667 = vsel %vm2628, %v2601, 0.0
        %v2668 = vsel %vm2629, %v2602, 0.0
        %v2669 = vsel %vm2627, %v2603, 0.0
        %v2670 = vsel %vm2628, %v2604, 0.0
        %v2671 = vsel %vm2629, %v2605, 0.0
        %v2672 = vsel %vm2627, %v2606, 0.0
        %v2673 = vsel %vm2628, %v2607, 0.0
        %v2674 = vsel %vm2629, %v2608, 0.0
        %v2675 = vsel %vm2627, %v2609, 0.0
        %v2676 = vsel %vm2628, %v2610, 0.0
        %v2677 = vsel %vm2629, %v2611, 0.0
        %v2678 = vsel %vm2627, %v2612, 0.0
        %v2679 = vsel %vm2628, %v2613, 0.0
        %v2680 = vsel %vm2629, %v2614, 0.0
        %v2681 = vsel %vm2624, %v2615, 0.0
        %v2682 = vsel %vm2625, %v2616, 0.0
        %v2683 = vsel %vm2626, %v2617, 0.0
        %2684 = vst.msk [vmem:[#allocation3] sm:$0xff] %vm969, %v2630
        %2685 = vst.msk [vmem:[#allocation3 + $0x8] sm:$0xff] %vm969, %v2631
        %vm2686 = vcmask 58368
        %2687 = vst.msk [vmem:[#allocation3 + $0x10] sm:$0x3] %vm2686, %v2632
        %2688 = vst.msk [vmem:[#allocation3 + $0x18] sm:$0xff] %vm969, %v2633
        %2689 = vst.msk [vmem:[#allocation3 + $0x20] sm:$0xff] %vm969, %v2634
        %2690 = vst.msk [vmem:[#allocation3 + $0x28] sm:$0x3] %vm2686, %v2635
        %2691 = vst.msk [vmem:[#allocation3 + $0x30] sm:$0xff] %vm969, %v2636
        %2692 = vst.msk [vmem:[#allocation3 + $0x38] sm:$0xff] %vm969, %v2637
        %2693 = vst.msk [vmem:[#allocation3 + $0x40] sm:$0x3] %vm2686, %v2638
        %2694 = vst.msk [vmem:[#allocation3 + $0x48] sm:$0xff] %vm969, %v2639
        %2695 = vst.msk [vmem:[#allocation3 + $0x50] sm:$0xff] %vm969, %v2640
        %2696 = vst.msk [vmem:[#allocation3 + $0x58] sm:$0x3] %vm2686, %v2641
        %2697 = vst.msk [vmem:[#allocation3 + $0x60] sm:$0xff] %vm969, %v2642
        %2698 = vst.msk [vmem:[#allocation3 + $0x68] sm:$0xff] %vm969, %v2643
        %2699 = vst.msk [vmem:[#allocation3 + $0x70] sm:$0x3] %vm2686, %v2644
        %2700 = vst.msk [vmem:[#allocation3 + $0x78] sm:$0xff] %vm969, %v2645
        %2701 = vst.msk [vmem:[#allocation3 + $0x80] sm:$0xff] %vm969, %v2646
        %2702 = vst.msk [vmem:[#allocation3 + $0x88] sm:$0x3] %vm2686, %v2647
        %2703 = vst.msk [vmem:[#allocation3 + $0x90] sm:$0xff] %vm969, %v2648
        %2704 = vst.msk [vmem:[#allocation3 + $0x98] sm:$0xff] %vm969, %v2649
        %2705 = vst.msk [vmem:[#allocation3 + $0xa0] sm:$0x3] %vm2686, %v2650
        %2706 = vst.msk [vmem:[#allocation3 + $0xa8] sm:$0xff] %vm969, %v2651
        %2707 = vst.msk [vmem:[#allocation3 + $0xb0] sm:$0xff] %vm969, %v2652
        %2708 = vst.msk [vmem:[#allocation3 + $0xb8] sm:$0x3] %vm2686, %v2653
        %2709 = vst.msk [vmem:[#allocation3 + $0xc0] sm:$0xff] %vm969, %v2654
        %2710 = vst.msk [vmem:[#allocation3 + $0xc8] sm:$0xff] %vm969, %v2655
        %2711 = vst.msk [vmem:[#allocation3 + $0xd0] sm:$0x3] %vm2686, %v2656
        %2712 = vst.msk [vmem:[#allocation3 + $0xd8] sm:$0xff] %vm969, %v2657
        %2713 = vst.msk [vmem:[#allocation3 + $0xe0] sm:$0xff] %vm969, %v2658
        %2714 = vst.msk [vmem:[#allocation3 + $0xe8] sm:$0x3] %vm2686, %v2659
        %2715 = vst.msk [vmem:[#allocation3 + $0xf0] sm:$0xff] %vm969, %v2660
        %2716 = vst.msk [vmem:[#allocation3 + $0xf8] sm:$0xff] %vm969, %v2661
        %2717 = vst.msk [vmem:[#allocation3 + $0x100] sm:$0x3] %vm2686, %v2662
        %2718 = vst.msk [vmem:[#allocation3 + $0x108] sm:$0xff] %vm969, %v2663
        %2719 = vst.msk [vmem:[#allocation3 + $0x110] sm:$0xff] %vm969, %v2664
        %2720 = vst.msk [vmem:[#allocation3 + $0x118] sm:$0x3] %vm2686, %v2665
        %2721 = vst.msk [vmem:[#allocation3 + $0x120] sm:$0xff] %vm969, %v2666
        %2722 = vst.msk [vmem:[#allocation3 + $0x128] sm:$0xff] %vm969, %v2667
        %2723 = vst.msk [vmem:[#allocation3 + $0x130] sm:$0x3] %vm2686, %v2668
        %2724 = vst.msk [vmem:[#allocation3 + $0x138] sm:$0xff] %vm969, %v2669
        %2725 = vst.msk [vmem:[#allocation3 + $0x140] sm:$0xff] %vm969, %v2670
        %2726 = vst.msk [vmem:[#allocation3 + $0x148] sm:$0x3] %vm2686, %v2671
        %2727 = vst.msk [vmem:[#allocation3 + $0x150] sm:$0xff] %vm969, %v2672
        %2728 = vst.msk [vmem:[#allocation3 + $0x158] sm:$0xff] %vm969, %v2673
        %2729 = vst.msk [vmem:[#allocation3 + $0x160] sm:$0x3] %vm2686, %v2674
        %2730 = vst.msk [vmem:[#allocation3 + $0x168] sm:$0xff] %vm969, %v2675
        %2731 = vst.msk [vmem:[#allocation3 + $0x170] sm:$0xff] %vm969, %v2676
        %2732 = vst.msk [vmem:[#allocation3 + $0x178] sm:$0x3] %vm2686, %v2677
        %2733 = vst.msk [vmem:[#allocation3 + $0x180] sm:$0xff] %vm969, %v2678
        %2734 = vst.msk [vmem:[#allocation3 + $0x188] sm:$0xff] %vm969, %v2679
        %2735 = vst.msk [vmem:[#allocation3 + $0x190] sm:$0x3] %vm2686, %v2680
        %2736 = vst.msk [vmem:[#allocation3 + $0x198] sm:$0xff] %vm969, %v2681
        %2737 = vst.msk [vmem:[#allocation3 + $0x1a0] sm:$0xff] %vm969, %v2682
        %2738 = vst.msk [vmem:[#allocation3 + $0x1a8] sm:$0x3] %vm2686, %v2683
        %v2739 = vld [vmem:[#allocation3] ss:$2 sm:$0xff]
        %s2740 = scalar_lea.vmem [#allocation3], 16
        %v2741 = vld [vmem:[%s2740] ss:$2 sm:$0x1]
        %s2742 = scalar_lea.vmem [#allocation3], 48
        %v2743 = vld [vmem:[%s2742] ss:$2 sm:$0xff]
        %s2744 = scalar_lea.vmem [#allocation3], 64
        %v2745 = vld [vmem:[%s2744] ss:$2 sm:$0x1]
        %s2746 = scalar_lea.vmem [#allocation3], 96
        %v2747 = vld [vmem:[%s2746] ss:$2 sm:$0xff]
        %s2748 = scalar_lea.vmem [#allocation3], 112
        %v2749 = vld [vmem:[%s2748] ss:$2 sm:$0x1]
        %s2750 = scalar_lea.vmem [#allocation3], 144
        %v2751 = vld [vmem:[%s2750] ss:$2 sm:$0xff]
        %s2752 = scalar_lea.vmem [#allocation3], 160
        %v2753 = vld [vmem:[%s2752] ss:$2 sm:$0x1]
        %s2754 = scalar_lea.vmem [#allocation3], 192
        %v2755 = vld [vmem:[%s2754] ss:$2 sm:$0xff]
        %s2756 = scalar_lea.vmem [#allocation3], 208
        %v2757 = vld [vmem:[%s2756] ss:$2 sm:$0x1]
        %s2758 = scalar_lea.vmem [#allocation3], 240
        %v2759 = vld [vmem:[%s2758] ss:$2 sm:$0xff]
        %s2760 = scalar_lea.vmem [#allocation3], 256
        %v2761 = vld [vmem:[%s2760] ss:$2 sm:$0x1]
        %s2762 = scalar_lea.vmem [#allocation3], 288
        %v2763 = vld [vmem:[%s2762] ss:$2 sm:$0xff]
        %s2764 = scalar_lea.vmem [#allocation3], 304
        %v2765 = vld [vmem:[%s2764] ss:$2 sm:$0x1]
        %s2766 = scalar_lea.vmem [#allocation3], 336
        %v2767 = vld [vmem:[%s2766] ss:$2 sm:$0xff]
        %s2768 = scalar_lea.vmem [#allocation3], 352
        %v2769 = vld [vmem:[%s2768] ss:$2 sm:$0x1]
        %s2770 = scalar_lea.vmem [#allocation3], 384
        %v2771 = vld [vmem:[%s2770] ss:$2 sm:$0xff]
        %s2772 = scalar_lea.vmem [#allocation3], 400
        %v2773 = vld [vmem:[%s2772] ss:$2 sm:$0x1]
        %s2774 = scalar_lea.vmem [#allocation3], 24
        %v2775 = vld [vmem:[%s2774] ss:$2 sm:$0xff]
        %s2776 = scalar_lea.vmem %s2774, 16 [#allocation3]
        %v2777 = vld [vmem:[%s2776] ss:$2 sm:$0x1]
        %s2778 = scalar_lea.vmem %s2774, 48 [#allocation3]
        %v2779 = vld [vmem:[%s2778] ss:$2 sm:$0xff]
        %s2780 = scalar_lea.vmem %s2774, 64 [#allocation3]
        %v2781 = vld [vmem:[%s2780] ss:$2 sm:$0x1]
        %s2782 = scalar_lea.vmem %s2774, 96 [#allocation3]
        %v2783 = vld [vmem:[%s2782] ss:$2 sm:$0xff]
        %s2784 = scalar_lea.vmem %s2774, 112 [#allocation3]
        %v2785 = vld [vmem:[%s2784] ss:$2 sm:$0x1]
        %s2786 = scalar_lea.vmem %s2774, 144 [#allocation3]
        %v2787 = vld [vmem:[%s2786] ss:$2 sm:$0xff]
        %s2788 = scalar_lea.vmem %s2774, 160 [#allocation3]
        %v2789 = vld [vmem:[%s2788] ss:$2 sm:$0x1]
        %s2790 = scalar_lea.vmem %s2774, 192 [#allocation3]
        %v2791 = vld [vmem:[%s2790] ss:$2 sm:$0xff]
        %s2792 = scalar_lea.vmem %s2774, 208 [#allocation3]
        %v2793 = vld [vmem:[%s2792] ss:$2 sm:$0x1]
        %s2794 = scalar_lea.vmem %s2774, 240 [#allocation3]
        %v2795 = vld [vmem:[%s2794] ss:$2 sm:$0xff]
        %s2796 = scalar_lea.vmem %s2774, 256 [#allocation3]
        %v2797 = vld [vmem:[%s2796] ss:$2 sm:$0x1]
        %s2798 = scalar_lea.vmem %s2774, 288 [#allocation3]
        %v2799 = vld [vmem:[%s2798] ss:$2 sm:$0xff]
        %s2800 = scalar_lea.vmem %s2774, 304 [#allocation3]
        %v2801 = vld [vmem:[%s2800] ss:$2 sm:$0x1]
        %s2802 = scalar_lea.vmem %s2774, 336 [#allocation3]
        %v2803 = vld [vmem:[%s2802] ss:$2 sm:$0xff]
        %s2804 = scalar_lea.vmem %s2774, 352 [#allocation3]
        %v2805 = vld [vmem:[%s2804] ss:$2 sm:$0x1]
        %s2806 = scalar_lea.vmem [#allocation3], 1
        %v2807 = vld [vmem:[%s2806] ss:$2 sm:$0xff]
        %s2808 = scalar_lea.vmem [#allocation3], 49
        %v2809 = vld [vmem:[%s2808] ss:$2 sm:$0xff]
        %s2810 = scalar_lea.vmem [#allocation3], 97
        %v2811 = vld [vmem:[%s2810] ss:$2 sm:$0xff]
        %s2812 = scalar_lea.vmem [#allocation3], 145
        %v2813 = vld [vmem:[%s2812] ss:$2 sm:$0xff]
        %s2814 = scalar_lea.vmem [#allocation3], 193
        %v2815 = vld [vmem:[%s2814] ss:$2 sm:$0xff]
        %s2816 = scalar_lea.vmem [#allocation3], 241
        %v2817 = vld [vmem:[%s2816] ss:$2 sm:$0xff]
        %s2818 = scalar_lea.vmem [#allocation3], 289
        %v2819 = vld [vmem:[%s2818] ss:$2 sm:$0xff]
        %s2820 = scalar_lea.vmem [#allocation3], 337
        %v2821 = vld [vmem:[%s2820] ss:$2 sm:$0xff]
        %s2822 = scalar_lea.vmem [#allocation3], 385
        %v2823 = vld [vmem:[%s2822] ss:$2 sm:$0xff]
        %s2824 = scalar_lea.vmem %s2774, 1 [#allocation3]
        %v2825 = vld [vmem:[%s2824] ss:$2 sm:$0xff]
        %s2826 = scalar_lea.vmem %s2774, 49 [#allocation3]
        %v2827 = vld [vmem:[%s2826] ss:$2 sm:$0xff]
        %s2828 = scalar_lea.vmem %s2774, 97 [#allocation3]
        %v2829 = vld [vmem:[%s2828] ss:$2 sm:$0xff]
        %s2830 = scalar_lea.vmem %s2774, 145 [#allocation3]
        %v2831 = vld [vmem:[%s2830] ss:$2 sm:$0xff]
        %s2832 = scalar_lea.vmem %s2774, 193 [#allocation3]
        %v2833 = vld [vmem:[%s2832] ss:$2 sm:$0xff]
        %s2834 = scalar_lea.vmem %s2774, 241 [#allocation3]
        %v2835 = vld [vmem:[%s2834] ss:$2 sm:$0xff]
        %s2836 = scalar_lea.vmem %s2774, 289 [#allocation3]
        %v2837 = vld [vmem:[%s2836] ss:$2 sm:$0xff]
        %s2838 = scalar_lea.vmem %s2774, 337 [#allocation3]
        %v2839 = vld [vmem:[%s2838] ss:$2 sm:$0xff]
        %v2840 = vld [vmem:[%s4] sm:$0x1]
        %v2841 = vlaneseq
        %v2842 = vshrl.u32 %v2841, 7
        %v2843 = vsub.s32 0, %v2842
        %v2844 = vrot.slane %v2840, %v2843
        %v2845 = vmul.f32 %v2739, %v2844
        %v2846 = vmul.f32 %v2743, %v2844
        %v2847 = vmul.f32 %v2747, %v2844
        %v2848 = vmul.f32 %v2751, %v2844
        %v2849 = vmul.f32 %v2755, %v2844
        %v2850 = vmul.f32 %v2759, %v2844
        %v2851 = vmul.f32 %v2763, %v2844
        %v2852 = vmul.f32 %v2767, %v2844
        %v2853 = vadd.f32 %v2845, 0.0
        %v2854 = vadd.f32 %v2846, 0.0
        %v2855 = vadd.f32 %v2847, 0.0
        %v2856 = vadd.f32 %v2848, 0.0
        %v2857 = vadd.f32 %v2849, 0.0
        %v2858 = vadd.f32 %v2850, 0.0
        %v2859 = vadd.f32 %v2851, 0.0
        %v2860 = vadd.f32 %v2852, 0.0
        %v2861 = vld [vmem:[%s4 + $0x1] sm:$0x1]
        %v2862 = vlaneseq
        %v2863 = vshrl.u32 %v2862, 7
        %v2864 = vsub.s32 0, %v2863
        %v2865 = vrot.slane %v2861, %v2864
        %v2866 = vmul.f32 %v2807, %v2865
        %v2867 = vmul.f32 %v2809, %v2865
        %v2868 = vmul.f32 %v2811, %v2865
        %v2869 = vmul.f32 %v2813, %v2865
        %v2870 = vmul.f32 %v2815, %v2865
        %v2871 = vmul.f32 %v2817, %v2865
        %v2872 = vmul.f32 %v2819, %v2865
        %v2873 = vmul.f32 %v2821, %v2865
        %v2874 = vadd.f32 %v2853, %v2866
        %v2875 = vadd.f32 %v2854, %v2867
        %v2876 = vadd.f32 %v2855, %v2868
        %v2877 = vadd.f32 %v2856, %v2869
        %v2878 = vadd.f32 %v2857, %v2870
        %v2879 = vadd.f32 %v2858, %v2871
        %v2880 = vadd.f32 %v2859, %v2872
        %v2881 = vadd.f32 %v2860, %v2873
        %v2882 = vld [vmem:[%s4 + $0x2] sm:$0x1]
        %v2883 = vlaneseq
        %v2884 = vshrl.u32 %v2883, 7
        %v2885 = vsub.s32 0, %v2884
        %v2886 = vrot.slane %v2882, %v2885
        %v2887 = vmul.f32 %v2739, %v2886
        %v2888 = vmul.f32 %v2741, %v2886
        %v2889 = vmul.f32 %v2743, %v2886
        %v2890 = vmul.f32 %v2745, %v2886
        %v2891 = vmul.f32 %v2747, %v2886
        %v2892 = vmul.f32 %v2749, %v2886
        %v2893 = vmul.f32 %v2751, %v2886
        %v2894 = vmul.f32 %v2753, %v2886
        %v2895 = vmul.f32 %v2755, %v2886
        %v2896 = vmul.f32 %v2757, %v2886
        %v2897 = vmul.f32 %v2759, %v2886
        %v2898 = vmul.f32 %v2761, %v2886
        %v2899 = vmul.f32 %v2763, %v2886
        %v2900 = vmul.f32 %v2765, %v2886
        %v2901 = vmul.f32 %v2767, %v2886
        %v2902 = vmul.f32 %v2769, %v2886
        %vm2919 = vcmask 1046528
        %v2920 = vrot.slane %v2887, 1
        %v2921 = vrot.slane %v2888, 1
        %v2922 = vsel %vm2919, %v2920, %v2921
        %v2923 = vrot.slane %v2889, 1
        %v2924 = vrot.slane %v2890, 1
        %v2925 = vsel %vm2919, %v2923, %v2924
        %v2926 = vrot.slane %v2891, 1
        %v2927 = vrot.slane %v2892, 1
        %v2928 = vsel %vm2919, %v2926, %v2927
        %v2929 = vrot.slane %v2893, 1
        %v2930 = vrot.slane %v2894, 1
        %v2931 = vsel %vm2919, %v2929, %v2930
        %v2932 = vrot.slane %v2895, 1
        %v2933 = vrot.slane %v2896, 1
        %v2934 = vsel %vm2919, %v2932, %v2933
        %v2935 = vrot.slane %v2897, 1
        %v2936 = vrot.slane %v2898, 1
        %v2937 = vsel %vm2919, %v2935, %v2936
        %v2938 = vrot.slane %v2899, 1
        %v2939 = vrot.slane %v2900, 1
        %v2940 = vsel %vm2919, %v2938, %v2939
        %v2941 = vrot.slane %v2901, 1
        %v2942 = vrot.slane %v2902, 1
        %v2943 = vsel %vm2919, %v2941, %v2942
        %v2952 = vadd.f32 %v2874, %v2922
        %v2953 = vadd.f32 %v2875, %v2925
        %v2954 = vadd.f32 %v2876, %v2928
        %v2955 = vadd.f32 %v2877, %v2931
        %v2956 = vadd.f32 %v2878, %v2934
        %v2957 = vadd.f32 %v2879, %v2937
        %v2958 = vadd.f32 %v2880, %v2940
        %v2959 = vadd.f32 %v2881, %v2943
        %v2960 = vld [vmem:[%s4 + $0x3] sm:$0x1]
        %v2961 = vlaneseq
        %v2962 = vshrl.u32 %v2961, 7
        %v2963 = vsub.s32 0, %v2962
        %v2964 = vrot.slane %v2960, %v2963
        %v2965 = vmul.f32 %v2775, %v2964
        %v2966 = vmul.f32 %v2779, %v2964
        %v2967 = vmul.f32 %v2783, %v2964
        %v2968 = vmul.f32 %v2787, %v2964
        %v2969 = vmul.f32 %v2791, %v2964
        %v2970 = vmul.f32 %v2795, %v2964
        %v2971 = vmul.f32 %v2799, %v2964
        %v2972 = vmul.f32 %v2803, %v2964
        %v2973 = vadd.f32 %v2952, %v2965
        %v2974 = vadd.f32 %v2953, %v2966
        %v2975 = vadd.f32 %v2954, %v2967
        %v2976 = vadd.f32 %v2955, %v2968
        %v2977 = vadd.f32 %v2956, %v2969
        %v2978 = vadd.f32 %v2957, %v2970
        %v2979 = vadd.f32 %v2958, %v2971
        %v2980 = vadd.f32 %v2959, %v2972
        %v2981 = vld [vmem:[%s4 + $0x4] sm:$0x1]
        %v2982 = vlaneseq
        %v2983 = vshrl.u32 %v2982, 7
        %v2984 = vsub.s32 0, %v2983
        %v2985 = vrot.slane %v2981, %v2984
        %v2986 = vmul.f32 %v2825, %v2985
        %v2987 = vmul.f32 %v2827, %v2985
        %v2988 = vmul.f32 %v2829, %v2985
        %v2989 = vmul.f32 %v2831, %v2985
        %v2990 = vmul.f32 %v2833, %v2985
        %v2991 = vmul.f32 %v2835, %v2985
        %v2992 = vmul.f32 %v2837, %v2985
        %v2993 = vmul.f32 %v2839, %v2985
        %v2994 = vadd.f32 %v2973, %v2986
        %v2995 = vadd.f32 %v2974, %v2987
        %v2996 = vadd.f32 %v2975, %v2988
        %v2997 = vadd.f32 %v2976, %v2989
        %v2998 = vadd.f32 %v2977, %v2990
        %v2999 = vadd.f32 %v2978, %v2991
        %v3000 = vadd.f32 %v2979, %v2992
        %v3001 = vadd.f32 %v2980, %v2993
        %v3002 = vld [vmem:[%s4 + $0x5] sm:$0x1]
        %v3003 = vlaneseq
        %v3004 = vshrl.u32 %v3003, 7
        %v3005 = vsub.s32 0, %v3004
        %v3006 = vrot.slane %v3002, %v3005
        %v3007 = vmul.f32 %v2775, %v3006
        %v3008 = vmul.f32 %v2777, %v3006
        %v3009 = vmul.f32 %v2779, %v3006
        %v3010 = vmul.f32 %v2781, %v3006
        %v3011 = vmul.f32 %v2783, %v3006
        %v3012 = vmul.f32 %v2785, %v3006
        %v3013 = vmul.f32 %v2787, %v3006
        %v3014 = vmul.f32 %v2789, %v3006
        %v3015 = vmul.f32 %v2791, %v3006
        %v3016 = vmul.f32 %v2793, %v3006
        %v3017 = vmul.f32 %v2795, %v3006
        %v3018 = vmul.f32 %v2797, %v3006
        %v3019 = vmul.f32 %v2799, %v3006
        %v3020 = vmul.f32 %v2801, %v3006
        %v3021 = vmul.f32 %v2803, %v3006
        %v3022 = vmul.f32 %v2805, %v3006
        %v3039 = vrot.slane %v3007, 1
        %v3040 = vrot.slane %v3008, 1
        %v3041 = vsel %vm2919, %v3039, %v3040
        %v3042 = vrot.slane %v3009, 1
        %v3043 = vrot.slane %v3010, 1
        %v3044 = vsel %vm2919, %v3042, %v3043
        %v3045 = vrot.slane %v3011, 1
        %v3046 = vrot.slane %v3012, 1
        %v3047 = vsel %vm2919, %v3045, %v3046
        %v3048 = vrot.slane %v3013, 1
        %v3049 = vrot.slane %v3014, 1
        %v3050 = vsel %vm2919, %v3048, %v3049
        %v3051 = vrot.slane %v3015, 1
        %v3052 = vrot.slane %v3016, 1
        %v3053 = vsel %vm2919, %v3051, %v3052
        %v3054 = vrot.slane %v3017, 1
        %v3055 = vrot.slane %v3018, 1
        %v3056 = vsel %vm2919, %v3054, %v3055
        %v3057 = vrot.slane %v3019, 1
        %v3058 = vrot.slane %v3020, 1
        %v3059 = vsel %vm2919, %v3057, %v3058
        %v3060 = vrot.slane %v3021, 1
        %v3061 = vrot.slane %v3022, 1
        %v3062 = vsel %vm2919, %v3060, %v3061
        %v3071 = vadd.f32 %v2994, %v3041
        %v3072 = vadd.f32 %v2995, %v3044
        %v3073 = vadd.f32 %v2996, %v3047
        %v3074 = vadd.f32 %v2997, %v3050
        %v3075 = vadd.f32 %v2998, %v3053
        %v3076 = vadd.f32 %v2999, %v3056
        %v3077 = vadd.f32 %v3000, %v3059
        %v3078 = vadd.f32 %v3001, %v3062
        %v3079 = vld [vmem:[%s4 + $0x6] sm:$0x1]
        %v3080 = vlaneseq
        %v3081 = vshrl.u32 %v3080, 7
        %v3082 = vsub.s32 0, %v3081
        %v3083 = vrot.slane %v3079, %v3082
        %v3084 = vmul.f32 %v2743, %v3083
        %v3085 = vmul.f32 %v2747, %v3083
        %v3086 = vmul.f32 %v2751, %v3083
        %v3087 = vmul.f32 %v2755, %v3083
        %v3088 = vmul.f32 %v2759, %v3083
        %v3089 = vmul.f32 %v2763, %v3083
        %v3090 = vmul.f32 %v2767, %v3083
        %v3091 = vmul.f32 %v2771, %v3083
        %v3092 = vadd.f32 %v3071, %v3084
        %v3093 = vadd.f32 %v3072, %v3085
        %v3094 = vadd.f32 %v3073, %v3086
        %v3095 = vadd.f32 %v3074, %v3087
        %v3096 = vadd.f32 %v3075, %v3088
        %v3097 = vadd.f32 %v3076, %v3089
        %v3098 = vadd.f32 %v3077, %v3090
        %v3099 = vadd.f32 %v3078, %v3091
        %v3100 = vld [vmem:[%s4 + $0x7] sm:$0x1]
        %v3101 = vlaneseq
        %v3102 = vshrl.u32 %v3101, 7
        %v3103 = vsub.s32 0, %v3102
        %v3104 = vrot.slane %v3100, %v3103
        %v3105 = vmul.f32 %v2809, %v3104
        %v3106 = vmul.f32 %v2811, %v3104
        %v3107 = vmul.f32 %v2813, %v3104
        %v3108 = vmul.f32 %v2815, %v3104
        %v3109 = vmul.f32 %v2817, %v3104
        %v3110 = vmul.f32 %v2819, %v3104
        %v3111 = vmul.f32 %v2821, %v3104
        %v3112 = vmul.f32 %v2823, %v3104
        %v3113 = vadd.f32 %v3092, %v3105
        %v3114 = vadd.f32 %v3093, %v3106
        %v3115 = vadd.f32 %v3094, %v3107
        %v3116 = vadd.f32 %v3095, %v3108
        %v3117 = vadd.f32 %v3096, %v3109
        %v3118 = vadd.f32 %v3097, %v3110
        %v3119 = vadd.f32 %v3098, %v3111
        %v3120 = vadd.f32 %v3099, %v3112
        %v3121 = vld [vmem:[%s4 + $0x8] sm:$0x1]
        %v3122 = vlaneseq
        %v3123 = vshrl.u32 %v3122, 7
        %v3124 = vsub.s32 0, %v3123
        %v3125 = vrot.slane %v3121, %v3124
        %v3126 = vmul.f32 %v2743, %v3125
        %v3127 = vmul.f32 %v2745, %v3125
        %v3128 = vmul.f32 %v2747, %v3125
        %v3129 = vmul.f32 %v2749, %v3125
        %v3130 = vmul.f32 %v2751, %v3125
        %v3131 = vmul.f32 %v2753, %v3125
        %v3132 = vmul.f32 %v2755, %v3125
        %v3133 = vmul.f32 %v2757, %v3125
        %v3134 = vmul.f32 %v2759, %v3125
        %v3135 = vmul.f32 %v2761, %v3125
        %v3136 = vmul.f32 %v2763, %v3125
        %v3137 = vmul.f32 %v2765, %v3125
        %v3138 = vmul.f32 %v2767, %v3125
        %v3139 = vmul.f32 %v2769, %v3125
        %v3140 = vmul.f32 %v2771, %v3125
        %v3141 = vmul.f32 %v2773, %v3125
        %v3158 = vrot.slane %v3126, 1
        %v3159 = vrot.slane %v3127, 1
        %v3160 = vsel %vm2919, %v3158, %v3159
        %v3161 = vrot.slane %v3128, 1
        %v3162 = vrot.slane %v3129, 1
        %v3163 = vsel %vm2919, %v3161, %v3162
        %v3164 = vrot.slane %v3130, 1
        %v3165 = vrot.slane %v3131, 1
        %v3166 = vsel %vm2919, %v3164, %v3165
        %v3167 = vrot.slane %v3132, 1
        %v3168 = vrot.slane %v3133, 1
        %v3169 = vsel %vm2919, %v3167, %v3168
        %v3170 = vrot.slane %v3134, 1
        %v3171 = vrot.slane %v3135, 1
        %v3172 = vsel %vm2919, %v3170, %v3171
        %v3173 = vrot.slane %v3136, 1
        %v3174 = vrot.slane %v3137, 1
        %v3175 = vsel %vm2919, %v3173, %v3174
        %v3176 = vrot.slane %v3138, 1
        %v3177 = vrot.slane %v3139, 1
        %v3178 = vsel %vm2919, %v3176, %v3177
        %v3179 = vrot.slane %v3140, 1
        %v3180 = vrot.slane %v3141, 1
        %v3181 = vsel %vm2919, %v3179, %v3180
        %v3190 = vadd.f32 %v3113, %v3160
        %v3191 = vadd.f32 %v3114, %v3163
        %v3192 = vadd.f32 %v3115, %v3166
        %v3193 = vadd.f32 %v3116, %v3169
        %v3194 = vadd.f32 %v3117, %v3172
        %v3195 = vadd.f32 %v3118, %v3175
        %v3196 = vadd.f32 %v3119, %v3178
        %v3197 = vadd.f32 %v3120, %v3181
        %v3198 = vld [vmem:[%s5] sm:$0x1]
        %v3200 = vlaneseq
        %v3201 = vshrl.u32 %v3200, 7
        %v3202 = vsub.s32 0, %v3201
        %v3203 = vrot.slane %v3198, %v3202
        %v3205 = vadd.f32 %v3190, %v3203
        %v3206 = vadd.f32 %v3191, %v3203
        %v3207 = vadd.f32 %v3192, %v3203
        %v3208 = vadd.f32 %v3193, %v3203
        %v3209 = vadd.f32 %v3194, %v3203
        %v3210 = vadd.f32 %v3195, %v3203
        %v3211 = vadd.f32 %v3196, %v3203
        %v3212 = vadd.f32 %v3197, %v3203
        %v3213 = vmul.f32 %v3205, 0.70710677
        %v3214 = vmul.f32 %v3206, 0.70710677
        %v3215 = vmul.f32 %v3207, 0.70710677
        %v3216 = vmul.f32 %v3208, 0.70710677
        %v3217 = vmul.f32 %v3209, 0.70710677
        %v3218 = vmul.f32 %v3210, 0.70710677
        %v3219 = vmul.f32 %v3211, 0.70710677
        %v3220 = vmul.f32 %v3212, 0.70710677
        %v3221 = vand.u32 2147483647, %v3213
        %v3222 = vand.u32 2147483647, %v3214
        %v3223 = vand.u32 2147483647, %v3215
        %v3224 = vand.u32 2147483647, %v3216
        %v3225 = vand.u32 2147483647, %v3217
        %v3226 = vand.u32 2147483647, %v3218
        %v3227 = vand.u32 2147483647, %v3219
        %v3228 = vand.u32 2147483647, %v3220
        %v3229 = vmul.f32 %v3221, 0.3275911
        %v3230 = vmul.f32 %v3222, 0.3275911
        %v3231 = vmul.f32 %v3223, 0.3275911
        %v3232 = vmul.f32 %v3224, 0.3275911
        %v3233 = vmul.f32 %v3225, 0.3275911
        %v3234 = vmul.f32 %v3226, 0.3275911
        %v3235 = vmul.f32 %v3227, 0.3275911
        %v3236 = vmul.f32 %v3228, 0.3275911
        %v3237 = vadd.f32 %v3229, 1.0
        %v3238 = vadd.f32 %v3230, 1.0
        %v3239 = vadd.f32 %v3231, 1.0
        %v3240 = vadd.f32 %v3232, 1.0
        %v3241 = vadd.f32 %v3233, 1.0
        %v3242 = vadd.f32 %v3234, 1.0
        %v3243 = vadd.f32 %v3235, 1.0
        %v3244 = vadd.f32 %v3236, 1.0
        %v3245 = vrcp.pop %v3237
        %v3246 = vmul.f32 1.0, %v3245
        %v3247 = vrcp.pop %v3238
        %v3248 = vmul.f32 1.0, %v3247
        %v3249 = vrcp.pop %v3239
        %v3250 = vmul.f32 1.0, %v3249
        %v3251 = vrcp.pop %v3240
        %v3252 = vmul.f32 1.0, %v3251
        %v3253 = vrcp.pop %v3241
        %v3254 = vmul.f32 1.0, %v3253
        %v3255 = vrcp.pop %v3242
        %v3256 = vmul.f32 1.0, %v3255
        %v3257 = vrcp.pop %v3243
        %v3258 = vmul.f32 1.0, %v3257
        %v3259 = vrcp.pop %v3244
        %v3260 = vmul.f32 1.0, %v3259
        %v3261 = vmul.f32 %v3246, 1.0614054
        %v3262 = vmul.f32 %v3248, 1.0614054
        %v3263 = vmul.f32 %v3250, 1.0614054
        %v3264 = vmul.f32 %v3252, 1.0614054
        %v3265 = vmul.f32 %v3254, 1.0614054
        %v3266 = vmul.f32 %v3256, 1.0614054
        %v3267 = vmul.f32 %v3258, 1.0614054
        %v3268 = vmul.f32 %v3260, 1.0614054
        %v3269 = vadd.f32 %v3261, -1.4531521
        %v3270 = vadd.f32 %v3262, -1.4531521
        %v3271 = vadd.f32 %v3263, -1.4531521
        %v3272 = vadd.f32 %v3264, -1.4531521
        %v3273 = vadd.f32 %v3265, -1.4531521
        %v3274 = vadd.f32 %v3266, -1.4531521
        %v3275 = vadd.f32 %v3267, -1.4531521
        %v3276 = vadd.f32 %v3268, -1.4531521
        %v3277 = vmul.f32 %v3269, %v3246
        %v3278 = vmul.f32 %v3270, %v3248
        %v3279 = vmul.f32 %v3271, %v3250
        %v3280 = vmul.f32 %v3272, %v3252
        %v3281 = vmul.f32 %v3273, %v3254
        %v3282 = vmul.f32 %v3274, %v3256
        %v3283 = vmul.f32 %v3275, %v3258
        %v3284 = vmul.f32 %v3276, %v3260
        %v3285 = vadd.f32 %v3277, 1.4214138
        %v3286 = vadd.f32 %v3278, 1.4214138
        %v3287 = vadd.f32 %v3279, 1.4214138
        %v3288 = vadd.f32 %v3280, 1.4214138
        %v3289 = vadd.f32 %v3281, 1.4214138
        %v3290 = vadd.f32 %v3282, 1.4214138
        %v3291 = vadd.f32 %v3283, 1.4214138
        %v3292 = vadd.f32 %v3284, 1.4214138
        %v3293 = vmul.f32 %v3285, %v3246
        %v3294 = vmul.f32 %v3286, %v3248
        %v3295 = vmul.f32 %v3287, %v3250
        %v3296 = vmul.f32 %v3288, %v3252
        %v3297 = vmul.f32 %v3289, %v3254
        %v3298 = vmul.f32 %v3290, %v3256
        %v3299 = vmul.f32 %v3291, %v3258
        %v3300 = vmul.f32 %v3292, %v3260
        %v3301 = vadd.f32 %v3293, -0.28449672
        %v3302 = vadd.f32 %v3294, -0.28449672
        %v3303 = vadd.f32 %v3295, -0.28449672
        %v3304 = vadd.f32 %v3296, -0.28449672
        %v3305 = vadd.f32 %v3297, -0.28449672
        %v3306 = vadd.f32 %v3298, -0.28449672
        %v3307 = vadd.f32 %v3299, -0.28449672
        %v3308 = vadd.f32 %v3300, -0.28449672
        %v3309 = vmul.f32 %v3301, %v3246
        %v3310 = vmul.f32 %v3302, %v3248
        %v3311 = vmul.f32 %v3303, %v3250
        %v3312 = vmul.f32 %v3304, %v3252
        %v3313 = vmul.f32 %v3305, %v3254
        %v3314 = vmul.f32 %v3306, %v3256
        %v3315 = vmul.f32 %v3307, %v3258
        %v3316 = vmul.f32 %v3308, %v3260
        %v3317 = vadd.f32 %v3309, 0.2548296
        %v3318 = vadd.f32 %v3310, 0.2548296
        %v3319 = vadd.f32 %v3311, 0.2548296
        %v3320 = vadd.f32 %v3312, 0.2548296
        %v3321 = vadd.f32 %v3313, 0.2548296
        %v3322 = vadd.f32 %v3314, 0.2548296
        %v3323 = vadd.f32 %v3315, 0.2548296
        %v3324 = vadd.f32 %v3316, 0.2548296
        %v3325 = vmul.f32 %v3317, %v3246
        %v3326 = vmul.f32 %v3318, %v3248
        %v3327 = vmul.f32 %v3319, %v3250
        %v3328 = vmul.f32 %v3320, %v3252
        %v3329 = vmul.f32 %v3321, %v3254
        %v3330 = vmul.f32 %v3322, %v3256
        %v3331 = vmul.f32 %v3323, %v3258
        %v3332 = vmul.f32 %v3324, %v3260
        %v3333 = vsub.f32 0.0, %v3221
        %v3334 = vsub.f32 0.0, %v3222
        %v3335 = vsub.f32 0.0, %v3223
        %v3336 = vsub.f32 0.0, %v3224
        %v3337 = vsub.f32 0.0, %v3225
        %v3338 = vsub.f32 0.0, %v3226
        %v3339 = vsub.f32 0.0, %v3227
        %v3340 = vsub.f32 0.0, %v3228
        %v3341 = vmul.f32 %v3333, %v3221
        %v3342 = vmul.f32 %v3334, %v3222
        %v3343 = vmul.f32 %v3335, %v3223
        %v3344 = vmul.f32 %v3336, %v3224
        %v3345 = vmul.f32 %v3337, %v3225
        %v3346 = vmul.f32 %v3338, %v3226
        %v3347 = vmul.f32 %v3339, %v3227
        %v3348 = vmul.f32 %v3340, %v3228
        %v3349 = vmul.f32 %v3341, 1.442695
        %v3350 = vpow.pop %v3349
        %v3351 = vmul.f32 %v3342, 1.442695
        %v3352 = vpow.pop %v3351
        %v3353 = vmul.f32 %v3343, 1.442695
        %v3354 = vpow.pop %v3353
        %v3355 = vmul.f32 %v3344, 1.442695
        %v3356 = vpow.pop %v3355
        %v3357 = vmul.f32 %v3345, 1.442695
        %v3358 = vpow.pop %v3357
        %v3359 = vmul.f32 %v3346, 1.442695
        %v3360 = vpow.pop %v3359
        %v3361 = vmul.f32 %v3347, 1.442695
        %v3362 = vpow.pop %v3361
        %v3363 = vmul.f32 %v3348, 1.442695
        %v3364 = vpow.pop %v3363
        %v3365 = vmul.f32 %v3325, %v3350
        %v3366 = vmul.f32 %v3326, %v3352
        %v3367 = vmul.f32 %v3327, %v3354
        %v3368 = vmul.f32 %v3328, %v3356
        %v3369 = vmul.f32 %v3329, %v3358
        %v3370 = vmul.f32 %v3330, %v3360
        %v3371 = vmul.f32 %v3331, %v3362
        %v3372 = vmul.f32 %v3332, %v3364
        %v3373 = vsub.f32 1.0, %v3365
        %v3374 = vsub.f32 1.0, %v3366
        %v3375 = vsub.f32 1.0, %v3367
        %v3376 = vsub.f32 1.0, %v3368
        %v3377 = vsub.f32 1.0, %v3369
        %v3378 = vsub.f32 1.0, %v3370
        %v3379 = vsub.f32 1.0, %v3371
        %v3380 = vsub.f32 1.0, %v3372
        %vm3381 = vcmp.lt.f32.partialorder %v3213, 0.0
        %vm3382 = vcmp.lt.f32.partialorder %v3214, 0.0
        %vm3383 = vcmp.lt.f32.partialorder %v3215, 0.0
        %vm3384 = vcmp.lt.f32.partialorder %v3216, 0.0
        %vm3385 = vcmp.lt.f32.partialorder %v3217, 0.0
        %vm3386 = vcmp.lt.f32.partialorder %v3218, 0.0
        %vm3387 = vcmp.lt.f32.partialorder %v3219, 0.0
        %vm3388 = vcmp.lt.f32.partialorder %v3220, 0.0
        %v3389 = vsub.f32 0.0, %v3373
        %v3390 = vsub.f32 0.0, %v3374
        %v3391 = vsub.f32 0.0, %v3375
        %v3392 = vsub.f32 0.0, %v3376
        %v3393 = vsub.f32 0.0, %v3377
        %v3394 = vsub.f32 0.0, %v3378
        %v3395 = vsub.f32 0.0, %v3379
        %v3396 = vsub.f32 0.0, %v3380
        %v3397 = vsel %vm3381, %v3389, %v3373
        %v3398 = vsel %vm3382, %v3390, %v3374
        %v3399 = vsel %vm3383, %v3391, %v3375
        %v3400 = vsel %vm3384, %v3392, %v3376
        %v3401 = vsel %vm3385, %v3393, %v3377
        %v3402 = vsel %vm3386, %v3394, %v3378
        %v3403 = vsel %vm3387, %v3395, %v3379
        %v3404 = vsel %vm3388, %v3396, %v3380
        %v3405 = vmul.f32 %v3205, 0.5
        %v3406 = vmul.f32 %v3206, 0.5
        %v3407 = vmul.f32 %v3207, 0.5
        %v3408 = vmul.f32 %v3208, 0.5
        %v3409 = vmul.f32 %v3209, 0.5
        %v3410 = vmul.f32 %v3210, 0.5
        %v3411 = vmul.f32 %v3211, 0.5
        %v3412 = vmul.f32 %v3212, 0.5
        %v3413 = vadd.f32 %v3397, 1.0
        %v3414 = vadd.f32 %v3398, 1.0
        %v3415 = vadd.f32 %v3399, 1.0
        %v3416 = vadd.f32 %v3400, 1.0
        %v3417 = vadd.f32 %v3401, 1.0
        %v3418 = vadd.f32 %v3402, 1.0
        %v3419 = vadd.f32 %v3403, 1.0
        %v3420 = vadd.f32 %v3404, 1.0
        %v3421 = vmul.f32 %v3405, %v3413
        %v3422 = vmul.f32 %v3406, %v3414
        %v3423 = vmul.f32 %v3407, %v3415
        %v3424 = vmul.f32 %v3408, %v3416
        %v3425 = vmul.f32 %v3409, %v3417
        %v3426 = vmul.f32 %v3410, %v3418
        %v3427 = vmul.f32 %v3411, %v3419
        %v3428 = vmul.f32 %v3412, %v3420
        %v3429 = vmax.f32 %v2825, %v2809
        %v3430 = vmax.f32 %v2827, %v2811
        %v3431 = vmax.f32 %v2829, %v2813
        %v3432 = vmax.f32 %v2831, %v2815
        %v3433 = vmax.f32 %v2833, %v2817
        %v3434 = vmax.f32 %v2835, %v2819
        %v3435 = vmax.f32 %v2837, %v2821
        %v3436 = vmax.f32 %v2839, %v2823
        %v3437 = vmax.f32 %v2775, %v2743
        %v3438 = vmax.f32 %v2777, %v2745
        %v3439 = vmax.f32 %v2779, %v2747
        %v3440 = vmax.f32 %v2781, %v2749
        %v3441 = vmax.f32 %v2783, %v2751
        %v3442 = vmax.f32 %v2785, %v2753
        %v3443 = vmax.f32 %v2787, %v2755
        %v3444 = vmax.f32 %v2789, %v2757
        %v3445 = vmax.f32 %v2791, %v2759
        %v3446 = vmax.f32 %v2793, %v2761
        %v3447 = vmax.f32 %v2795, %v2763
        %v3448 = vmax.f32 %v2797, %v2765
        %v3449 = vmax.f32 %v2799, %v2767
        %v3450 = vmax.f32 %v2801, %v2769
        %v3451 = vmax.f32 %v2803, %v2771
        %v3452 = vmax.f32 %v2805, %v2773
        %v3469 = vrot.slane %v3437, 1
        %v3470 = vrot.slane %v3438, 1
        %v3471 = vsel %vm2919, %v3469, %v3470
        %v3472 = vrot.slane %v3439, 1
        %v3473 = vrot.slane %v3440, 1
        %v3474 = vsel %vm2919, %v3472, %v3473
        %v3475 = vrot.slane %v3441, 1
        %v3476 = vrot.slane %v3442, 1
        %v3477 = vsel %vm2919, %v3475, %v3476
        %v3478 = vrot.slane %v3443, 1
        %v3479 = vrot.slane %v3444, 1
        %v3480 = vsel %vm2919, %v3478, %v3479
        %v3481 = vrot.slane %v3445, 1
        %v3482 = vrot.slane %v3446, 1
        %v3483 = vsel %vm2919, %v3481, %v3482
        %v3484 = vrot.slane %v3447, 1
        %v3485 = vrot.slane %v3448, 1
        %v3486 = vsel %vm2919, %v3484, %v3485
        %v3487 = vrot.slane %v3449, 1
        %v3488 = vrot.slane %v3450, 1
        %v3489 = vsel %vm2919, %v3487, %v3488
        %v3490 = vrot.slane %v3451, 1
        %v3491 = vrot.slane %v3452, 1
        %v3492 = vsel %vm2919, %v3490, %v3491
        %v3501 = vmax.f32 %v3429, %v3471
        %v3502 = vmax.f32 %v3430, %v3474
        %v3503 = vmax.f32 %v3431, %v3477
        %v3504 = vmax.f32 %v3432, %v3480
        %v3505 = vmax.f32 %v3433, %v3483
        %v3506 = vmax.f32 %v3434, %v3486
        %v3507 = vmax.f32 %v3435, %v3489
        %v3508 = vmax.f32 %v3436, %v3492
        %s3509 = scalar_lea.vmem %s357, 48
        %s3510 = scalar_lea.vmem %s3509, 2
        %v3511 = vld [vmem:[%s3510] ss:$2 sm:$0xff]
        %s3512 = scalar_lea.vmem %s3509, 50
        %v3513 = vld [vmem:[%s3512] ss:$2 sm:$0xff]
        %s3514 = scalar_lea.vmem %s3509, 98
        %v3515 = vld [vmem:[%s3514] ss:$2 sm:$0xff]
        %s3516 = scalar_lea.vmem %s3509, 146
        %v3517 = vld [vmem:[%s3516] ss:$2 sm:$0xff]
        %s3518 = scalar_lea.vmem %s3509, 194
        %v3519 = vld [vmem:[%s3518] ss:$2 sm:$0xff]
        %s3520 = scalar_lea.vmem %s3509, 242
        %v3521 = vld [vmem:[%s3520] ss:$2 sm:$0xff]
        %s3522 = scalar_lea.vmem %s3509, 290
        %v3523 = vld [vmem:[%s3522] ss:$2 sm:$0xff]
        %s3524 = scalar_lea.vmem %s3509, 338
        %v3525 = vld [vmem:[%s3524] ss:$2 sm:$0xff]
        %s3526 = scalar_lea.vmem %s357, 72
        %s3527 = scalar_lea.vmem %s3526, 2
        %v3528 = vld [vmem:[%s3527] ss:$2 sm:$0xff]
        %s3529 = scalar_lea.vmem %s3526, 50
        %v3530 = vld [vmem:[%s3529] ss:$2 sm:$0xff]
        %s3531 = scalar_lea.vmem %s3526, 98
        %v3532 = vld [vmem:[%s3531] ss:$2 sm:$0xff]
        %s3533 = scalar_lea.vmem %s3526, 146
        %v3534 = vld [vmem:[%s3533] ss:$2 sm:$0xff]
        %s3535 = scalar_lea.vmem %s3526, 194
        %v3536 = vld [vmem:[%s3535] ss:$2 sm:$0xff]
        %s3537 = scalar_lea.vmem %s3526, 242
        %v3538 = vld [vmem:[%s3537] ss:$2 sm:$0xff]
        %s3539 = scalar_lea.vmem %s3526, 290
        %v3540 = vld [vmem:[%s3539] ss:$2 sm:$0xff]
        %s3541 = scalar_lea.vmem %s3526, 338
        %v3542 = vld [vmem:[%s3541] ss:$2 sm:$0xff]
        %s3543 = scalar_lea.vmem %s3509, 3
        %v3544 = vld [vmem:[%s3543] ss:$2 sm:$0xff]
        %s3545 = scalar_lea.vmem %s3509, 51
        %v3546 = vld [vmem:[%s3545] ss:$2 sm:$0xff]
        %s3547 = scalar_lea.vmem %s3509, 99
        %v3548 = vld [vmem:[%s3547] ss:$2 sm:$0xff]
        %s3549 = scalar_lea.vmem %s3509, 147
        %v3550 = vld [vmem:[%s3549] ss:$2 sm:$0xff]
        %s3551 = scalar_lea.vmem %s3509, 195
        %v3552 = vld [vmem:[%s3551] ss:$2 sm:$0xff]
        %s3553 = scalar_lea.vmem %s3509, 243
        %v3554 = vld [vmem:[%s3553] ss:$2 sm:$0xff]
        %s3555 = scalar_lea.vmem %s3509, 291
        %v3556 = vld [vmem:[%s3555] ss:$2 sm:$0xff]
        %s3557 = scalar_lea.vmem %s3509, 339
        %v3558 = vld [vmem:[%s3557] ss:$2 sm:$0xff]
        %s3559 = scalar_lea.vmem %s3526, 3
        %v3560 = vld [vmem:[%s3559] ss:$2 sm:$0xff]
        %s3561 = scalar_lea.vmem %s3526, 51
        %v3562 = vld [vmem:[%s3561] ss:$2 sm:$0xff]
        %s3563 = scalar_lea.vmem %s3526, 99
        %v3564 = vld [vmem:[%s3563] ss:$2 sm:$0xff]
        %s3565 = scalar_lea.vmem %s3526, 147
        %v3566 = vld [vmem:[%s3565] ss:$2 sm:$0xff]
        %s3567 = scalar_lea.vmem %s3526, 195
        %v3568 = vld [vmem:[%s3567] ss:$2 sm:$0xff]
        %s3569 = scalar_lea.vmem %s3526, 243
        %v3570 = vld [vmem:[%s3569] ss:$2 sm:$0xff]
        %s3571 = scalar_lea.vmem %s3526, 291
        %v3572 = vld [vmem:[%s3571] ss:$2 sm:$0xff]
        %s3573 = scalar_lea.vmem %s3526, 339
        %v3574 = vld [vmem:[%s3573] ss:$2 sm:$0xff]
        %3583 = vrot.lane.b32.xlu0 %v3528, 4
        %v3584 = vpop.permute.xlu0 %3583
        %3585 = vrot.lane.b32.xlu0 %v3530, 4
        %v3586 = vpop.permute.xlu0 %3585
        %3587 = vrot.lane.b32.xlu0 %v3532, 4
        %v3588 = vpop.permute.xlu0 %3587
        %3589 = vrot.lane.b32.xlu0 %v3534, 4
        %v3590 = vpop.permute.xlu0 %3589
        %3591 = vrot.lane.b32.xlu0 %v3536, 4
        %v3592 = vpop.permute.xlu0 %3591
        %3593 = vrot.lane.b32.xlu0 %v3538, 4
        %v3594 = vpop.permute.xlu0 %3593
        %3595 = vrot.lane.b32.xlu0 %v3540, 4
        %v3596 = vpop.permute.xlu0 %3595
        %3597 = vrot.lane.b32.xlu0 %v3542, 4
        %v3598 = vpop.permute.xlu0 %3597
        %3615 = vrot.lane.b32.xlu0 %v3544, 8
        %v3616 = vpop.permute.xlu0 %3615
        %3617 = vrot.lane.b32.xlu0 %v3546, 8
        %v3618 = vpop.permute.xlu0 %3617
        %3619 = vrot.lane.b32.xlu0 %v3548, 8
        %v3620 = vpop.permute.xlu0 %3619
        %3621 = vrot.lane.b32.xlu0 %v3550, 8
        %v3622 = vpop.permute.xlu0 %3621
        %3623 = vrot.lane.b32.xlu0 %v3552, 8
        %v3624 = vpop.permute.xlu0 %3623
        %3625 = vrot.lane.b32.xlu0 %v3554, 8
        %v3626 = vpop.permute.xlu0 %3625
        %3627 = vrot.lane.b32.xlu0 %v3556, 8
        %v3628 = vpop.permute.xlu0 %3627
        %3629 = vrot.lane.b32.xlu0 %v3558, 8
        %v3630 = vpop.permute.xlu0 %3629
        %3647 = vrot.lane.b32.xlu0 %v3560, 12
        %v3648 = vpop.permute.xlu0 %3647
        %3649 = vrot.lane.b32.xlu0 %v3562, 12
        %v3650 = vpop.permute.xlu0 %3649
        %3651 = vrot.lane.b32.xlu0 %v3564, 12
        %v3652 = vpop.permute.xlu0 %3651
        %3653 = vrot.lane.b32.xlu0 %v3566, 12
        %v3654 = vpop.permute.xlu0 %3653
        %3655 = vrot.lane.b32.xlu0 %v3568, 12
        %v3656 = vpop.permute.xlu0 %3655
        %3657 = vrot.lane.b32.xlu0 %v3570, 12
        %v3658 = vpop.permute.xlu0 %3657
        %3659 = vrot.lane.b32.xlu0 %v3572, 12
        %v3660 = vpop.permute.xlu0 %3659
        %3661 = vrot.lane.b32.xlu0 %v3574, 12
        %v3662 = vpop.permute.xlu0 %3661
        %v3671 = vsel %vm419, %v3511, %v3584
        %v3672 = vsel %vm419, %v3513, %v3586
        %v3673 = vsel %vm419, %v3515, %v3588
        %v3674 = vsel %vm419, %v3517, %v3590
        %v3675 = vsel %vm419, %v3519, %v3592
        %v3676 = vsel %vm419, %v3521, %v3594
        %v3677 = vsel %vm419, %v3523, %v3596
        %v3678 = vsel %vm419, %v3525, %v3598
        %v3679 = vsel %vm969, %v3671, %v3616
        %v3680 = vsel %vm969, %v3672, %v3618
        %v3681 = vsel %vm969, %v3673, %v3620
        %v3682 = vsel %vm969, %v3674, %v3622
        %v3683 = vsel %vm969, %v3675, %v3624
        %v3684 = vsel %vm969, %v3676, %v3626
        %v3685 = vsel %vm969, %v3677, %v3628
        %v3686 = vsel %vm969, %v3678, %v3630
        %vm3687 = vcmask 97280
        %v3688 = vsel %vm3687, %v3679, %v3648
        %v3689 = vsel %vm3687, %v3680, %v3650
        %v3690 = vsel %vm3687, %v3681, %v3652
        %v3691 = vsel %vm3687, %v3682, %v3654
        %v3692 = vsel %vm3687, %v3683, %v3656
        %v3693 = vsel %vm3687, %v3684, %v3658
        %v3694 = vsel %vm3687, %v3685, %v3660
        %v3695 = vsel %vm3687, %v3686, %v3662
        %v3696 = vld [vmem:[%s6] sm:$0xff]
        %v3697 = vld [vmem:[%s6 + $0x8] sm:$0xff]
        %v3698 = vld [vmem:[%s7] sm:$0xff]
        %v3700 = vsel %vm969, %v3421, 0
        %v3703 = vsel %vm969, %v3422, 0
        %v3706 = vsel %vm969, %v3423, 0
        %v3709 = vsel %vm969, %v3424, 0
        %v3712 = vsel %vm969, %v3425, 0
        %v3715 = vsel %vm969, %v3426, 0
        %v3718 = vsel %vm969, %v3427, 0
        %v3721 = vsel %vm969, %v3428, 0
        %3723 = vmatprep.subr.mxu0 0.0
        %3724 = vmatpush1.msra.mxu0 0.0
        %3725 = vmatprep.subr.mxu0 0.0
        %3726 = vmatpush1.msra.mxu0 0.0
        %3727 = vmatprep.subr.mxu0 0.0
        %3728 = vmatpush1.msra.mxu0 0.0
        %3729 = vmatprep.subr.mxu0 0.0
        %3730 = vmatpush1.msra.mxu0 0.0
        %3731 = vmatprep.subr.mxu0 0.0
        %3732 = vmatpush1.msra.mxu0 0.0
        %3733 = vmatprep.subr.mxu0 0.0
        %3734 = vmatpush1.msra.mxu0 0.0
        %3735 = vmatprep.subr.mxu0 0.0
        %3736 = vmatpush1.msra.mxu0 0.0
        %3737 = vmatprep.subr.mxu0 0.0
        %3738 = vmatpush1.msra.mxu0 0.0
        %3739 = vmatprep.subr.mxu0 0.0
        %3740 = vmatpush1.msra.mxu0 0.0
        %3741 = vmatprep.subr.mxu0 0.0
        %3742 = vmatpush1.msra.mxu0 0.0
        %3743 = vmatprep.subr.mxu0 0.0
        %3744 = vmatpush1.msra.mxu0 0.0
        %3745 = vmatprep.subr.mxu0 0.0
        %3746 = vmatpush1.msra.mxu0 0.0
        %3747 = vmatprep.subr.mxu0 0.0
        %3748 = vmatpush1.msra.mxu0 0.0
        %3749 = vmatprep.subr.mxu0 0.0
        %3750 = vmatpush1.msra.mxu0 0.0
        %3751 = vmatprep.subr.mxu0 0.0
        %3752 = vmatpush1.msra.mxu0 0.0
        %3753 = vmatprep.subr.mxu0 0.0
        %3754 = vmatpush1.msra.mxu0 %v3698
        %3755 = vmatprep.subr.mxu0 0.0
        %3756 = vmatpush2.msra.mxu0 0.0
        %3757 = vmatprep.subr.mxu0 0.0
        %3758 = vmatpush2.msra.mxu0 0.0
        %3759 = vmatprep.subr.mxu0 0.0
        %3760 = vmatpush2.msra.mxu0 0.0
        %3761 = vmatprep.subr.mxu0 0.0
        %3762 = vmatpush2.msra.mxu0 0.0
        %3763 = vmatprep.subr.mxu0 0.0
        %3764 = vmatpush2.msra.mxu0 0.0
        %3765 = vmatprep.subr.mxu0 0.0
        %3766 = vmatpush2.msra.mxu0 0.0
        %3767 = vmatprep.subr.mxu0 0.0
        %3768 = vmatpush2.msra.mxu0 0.0
        %3769 = vmatprep.subr.mxu0 0.0
        %3770 = vmatpush2.msra.mxu0 0.0
        %3771 = vmatprep.subr.mxu0 0.0
        %3772 = vmatpush2.msra.mxu0 0.0
        %3773 = vmatprep.subr.mxu0 0.0
        %3774 = vmatpush2.msra.mxu0 0.0
        %3775 = vmatprep.subr.mxu0 0.0
        %3776 = vmatpush2.msra.mxu0 0.0
        %3777 = vmatprep.subr.mxu0 0.0
        %3778 = vmatpush2.msra.mxu0 0.0
        %3779 = vmatprep.subr.mxu0 0.0
        %3780 = vmatpush2.msra.mxu0 0.0
        %3781 = vmatprep.subr.mxu0 0.0
        %3782 = vmatpush2.msra.mxu0 0.0
        %3783 = vmatprep.subr.mxu0 0.0
        %3784 = vmatpush2.msra.mxu0 0.0
        %3785 = vmatprep.subr.mxu0 0.0
        %3786 = vmatpush2.msra.mxu0 0.0
        %3787 = vmatprep.mubr.f32.mxu0 0.0
        %3788 = vmatmul.mubr.f32.gmra.mxu0 %v3700
        %v3789 = vpop.f32.mrf.mxu0
        %v3790 = vadd.f32 0.0, %v3789
        %v3791 = vpop.f32.mrf.mxu0
        %3792 = vmatprep.mubr.f32.mxu0 0.0
        %3793 = vmatmul.mubr.f32.gmra.mxu0 %v3703
        %v3794 = vpop.f32.mrf.mxu0
        %v3795 = vadd.f32 0.0, %v3794
        %v3796 = vpop.f32.mrf.mxu0
        %3797 = vmatprep.mubr.f32.mxu0 0.0
        %3798 = vmatmul.mubr.f32.gmra.mxu0 %v3706
        %v3799 = vpop.f32.mrf.mxu0
        %v3800 = vadd.f32 0.0, %v3799
        %v3801 = vpop.f32.mrf.mxu0
        %3802 = vmatprep.mubr.f32.mxu0 0.0
        %3803 = vmatmul.mubr.f32.gmra.mxu0 %v3709
        %v3804 = vpop.f32.mrf.mxu0
        %v3805 = vadd.f32 0.0, %v3804
        %v3806 = vpop.f32.mrf.mxu0
        %3807 = vmatprep.mubr.f32.mxu0 0.0
        %3808 = vmatmul.mubr.f32.gmra.mxu0 %v3712
        %v3809 = vpop.f32.mrf.mxu0
        %v3810 = vadd.f32 0.0, %v3809
        %v3811 = vpop.f32.mrf.mxu0
        %3812 = vmatprep.mubr.f32.mxu0 0.0
        %3813 = vmatmul.mubr.f32.gmra.mxu0 %v3715
        %v3814 = vpop.f32.mrf.mxu0
        %v3815 = vadd.f32 0.0, %v3814
        %v3816 = vpop.f32.mrf.mxu0
        %3817 = vmatprep.mubr.f32.mxu0 0.0
        %3818 = vmatmul.mubr.f32.gmra.mxu0 %v3718
        %v3819 = vpop.f32.mrf.mxu0
        %v3820 = vadd.f32 0.0, %v3819
        %v3821 = vpop.f32.mrf.mxu0
        %3822 = vmatprep.mubr.f32.mxu0 0.0
        %3823 = vmatmul.mubr.f32.gmra.mxu0 %v3721
        %v3824 = vpop.f32.mrf.mxu0
        %v3825 = vadd.f32 0.0, %v3824
        %v3826 = vpop.f32.mrf.mxu0
        %3827 = vdwg.mxu0
        %vm3828 = vcmask 130048
        %v3830 = vsel %vm3828, %v3688, 0
        %v3833 = vsel %vm3828, %v3689, 0
        %v3836 = vsel %vm3828, %v3690, 0
        %v3839 = vsel %vm3828, %v3691, 0
        %v3842 = vsel %vm3828, %v3692, 0
        %v3845 = vsel %vm3828, %v3693, 0
        %v3848 = vsel %vm3828, %v3694, 0
        %v3851 = vsel %vm3828, %v3695, 0
        %3853 = vmatprep.subr.mxu0 0.0
        %3854 = vmatpush1.msra.mxu0 0.0
        %3855 = vmatprep.subr.mxu0 0.0
        %3856 = vmatpush1.msra.mxu0 0.0
        %3857 = vmatprep.subr.mxu0 0.0
        %3858 = vmatpush1.msra.mxu0 0.0
        %3859 = vmatprep.subr.mxu0 0.0
        %3860 = vmatpush1.msra.mxu0 0.0
        %3861 = vmatprep.subr.mxu0 0.0
        %3862 = vmatpush1.msra.mxu0 0.0
        %3863 = vmatprep.subr.mxu0 0.0
        %3864 = vmatpush1.msra.mxu0 0.0
        %3865 = vmatprep.subr.mxu0 0.0
        %3866 = vmatpush1.msra.mxu0 0.0
        %3867 = vmatprep.subr.mxu0 0.0
        %3868 = vmatpush1.msra.mxu0 0.0
        %3869 = vmatprep.subr.mxu0 0.0
        %3870 = vmatpush1.msra.mxu0 0.0
        %3871 = vmatprep.subr.mxu0 0.0
        %3872 = vmatpush1.msra.mxu0 0.0
        %3873 = vmatprep.subr.mxu0 0.0
        %3874 = vmatpush1.msra.mxu0 0.0
        %3875 = vmatprep.subr.mxu0 0.0
        %3876 = vmatpush1.msra.mxu0 0.0
        %3877 = vmatprep.subr.mxu0 0.0
        %3878 = vmatpush1.msra.mxu0 0.0
        %3879 = vmatprep.subr.mxu0 0.0
        %3880 = vmatpush1.msra.mxu0 0.0
        %3881 = vmatprep.subr.mxu0 0.0
        %3882 = vmatpush1.msra.mxu0 %v3697
        %3883 = vmatprep.subr.mxu0 0.0
        %3884 = vmatpush1.msra.mxu0 %v3696
        %3885 = vmatprep.subr.mxu0 0.0
        %3886 = vmatpush2.msra.mxu0 0.0
        %3887 = vmatprep.subr.mxu0 0.0
        %3888 = vmatpush2.msra.mxu0 0.0
        %3889 = vmatprep.subr.mxu0 0.0
        %3890 = vmatpush2.msra.mxu0 0.0
        %3891 = vmatprep.subr.mxu0 0.0
        %3892 = vmatpush2.msra.mxu0 0.0
        %3893 = vmatprep.subr.mxu0 0.0
        %3894 = vmatpush2.msra.mxu0 0.0
        %3895 = vmatprep.subr.mxu0 0.0
        %3896 = vmatpush2.msra.mxu0 0.0
        %3897 = vmatprep.subr.mxu0 0.0
        %3898 = vmatpush2.msra.mxu0 0.0
        %3899 = vmatprep.subr.mxu0 0.0
        %3900 = vmatpush2.msra.mxu0 0.0
        %3901 = vmatprep.subr.mxu0 0.0
        %3902 = vmatpush2.msra.mxu0 0.0
        %3903 = vmatprep.subr.mxu0 0.0
        %3904 = vmatpush2.msra.mxu0 0.0
        %3905 = vmatprep.subr.mxu0 0.0
        %3906 = vmatpush2.msra.mxu0 0.0
        %3907 = vmatprep.subr.mxu0 0.0
        %3908 = vmatpush2.msra.mxu0 0.0
        %3909 = vmatprep.subr.mxu0 0.0
        %3910 = vmatpush2.msra.mxu0 0.0
        %3911 = vmatprep.subr.mxu0 0.0
        %3912 = vmatpush2.msra.mxu0 0.0
        %3913 = vmatprep.subr.mxu0 0.0
        %3914 = vmatpush2.msra.mxu0 0.0
        %3915 = vmatprep.subr.mxu0 0.0
        %3916 = vmatpush2.msra.mxu0 0.0
        %3917 = vmatprep.mubr.f32.mxu0 0.0
        %3918 = vmatmul.mubr.f32.gmra.mxu0 %v3830
        %v3919 = vpop.f32.mrf.mxu0
        %v3920 = vadd.f32 %v3790, %v3919
        %v3921 = vpop.f32.mrf.mxu0
        %3922 = vmatprep.mubr.f32.mxu0 0.0
        %3923 = vmatmul.mubr.f32.gmra.mxu0 %v3833
        %v3924 = vpop.f32.mrf.mxu0
        %v3925 = vadd.f32 %v3795, %v3924
        %v3926 = vpop.f32.mrf.mxu0
        %3927 = vmatprep.mubr.f32.mxu0 0.0
        %3928 = vmatmul.mubr.f32.gmra.mxu0 %v3836
        %v3929 = vpop.f32.mrf.mxu0
        %v3930 = vadd.f32 %v3800, %v3929
        %v3931 = vpop.f32.mrf.mxu0
        %3932 = vmatprep.mubr.f32.mxu0 0.0
        %3933 = vmatmul.mubr.f32.gmra.mxu0 %v3839
        %v3934 = vpop.f32.mrf.mxu0
        %v3935 = vadd.f32 %v3805, %v3934
        %v3936 = vpop.f32.mrf.mxu0
        %3937 = vmatprep.mubr.f32.mxu0 0.0
        %3938 = vmatmul.mubr.f32.gmra.mxu0 %v3842
        %v3939 = vpop.f32.mrf.mxu0
        %v3940 = vadd.f32 %v3810, %v3939
        %v3941 = vpop.f32.mrf.mxu0
        %3942 = vmatprep.mubr.f32.mxu0 0.0
        %3943 = vmatmul.mubr.f32.gmra.mxu0 %v3845
        %v3944 = vpop.f32.mrf.mxu0
        %v3945 = vadd.f32 %v3815, %v3944
        %v3946 = vpop.f32.mrf.mxu0
        %3947 = vmatprep.mubr.f32.mxu0 0.0
        %3948 = vmatmul.mubr.f32.gmra.mxu0 %v3848
        %v3949 = vpop.f32.mrf.mxu0
        %v3950 = vadd.f32 %v3820, %v3949
        %v3951 = vpop.f32.mrf.mxu0
        %3952 = vmatprep.mubr.f32.mxu0 0.0
        %3953 = vmatmul.mubr.f32.gmra.mxu0 %v3851
        %v3954 = vpop.f32.mrf.mxu0
        %v3955 = vadd.f32 %v3825, %v3954
        %v3956 = vpop.f32.mrf.mxu0
        %3957 = vdwg.mxu0
        %v3958 = vld [vmem:[%s8] sm:$0xff]
        %v3960 = vsel %vm969, %v3501, 0
        %v3963 = vsel %vm969, %v3502, 0
        %v3966 = vsel %vm969, %v3503, 0
        %v3969 = vsel %vm969, %v3504, 0
        %v3972 = vsel %vm969, %v3505, 0
        %v3975 = vsel %vm969, %v3506, 0
        %v3978 = vsel %vm969, %v3507, 0
        %v3981 = vsel %vm969, %v3508, 0
        %3983 = vmatprep.subr.mxu0 0.0
        %3984 = vmatpush1.msra.mxu0 0.0
        %3985 = vmatprep.subr.mxu0 0.0
        %3986 = vmatpush1.msra.mxu0 0.0
        %3987 = vmatprep.subr.mxu0 0.0
        %3988 = vmatpush1.msra.mxu0 0.0
        %3989 = vmatprep.subr.mxu0 0.0
        %3990 = vmatpush1.msra.mxu0 0.0
        %3991 = vmatprep.subr.mxu0 0.0
        %3992 = vmatpush1.msra.mxu0 0.0
        %3993 = vmatprep.subr.mxu0 0.0
        %3994 = vmatpush1.msra.mxu0 0.0
        %3995 = vmatprep.subr.mxu0 0.0
        %3996 = vmatpush1.msra.mxu0 0.0
        %3997 = vmatprep.subr.mxu0 0.0
        %3998 = vmatpush1.msra.mxu0 0.0
        %3999 = vmatprep.subr.mxu0 0.0
        %4000 = vmatpush1.msra.mxu0 0.0
        %4001 = vmatprep.subr.mxu0 0.0
        %4002 = vmatpush1.msra.mxu0 0.0
        %4003 = vmatprep.subr.mxu0 0.0
        %4004 = vmatpush1.msra.mxu0 0.0
        %4005 = vmatprep.subr.mxu0 0.0
        %4006 = vmatpush1.msra.mxu0 0.0
        %4007 = vmatprep.subr.mxu0 0.0
        %4008 = vmatpush1.msra.mxu0 0.0
        %4009 = vmatprep.subr.mxu0 0.0
        %4010 = vmatpush1.msra.mxu0 0.0
        %4011 = vmatprep.subr.mxu0 0.0
        %4012 = vmatpush1.msra.mxu0 0.0
        %4013 = vmatprep.subr.mxu0 0.0
        %4014 = vmatpush1.msra.mxu0 %v3958
        %4015 = vmatprep.subr.mxu0 0.0
        %4016 = vmatpush2.msra.mxu0 0.0
        %4017 = vmatprep.subr.mxu0 0.0
        %4018 = vmatpush2.msra.mxu0 0.0
        %4019 = vmatprep.subr.mxu0 0.0
        %4020 = vmatpush2.msra.mxu0 0.0
        %4021 = vmatprep.subr.mxu0 0.0
        %4022 = vmatpush2.msra.mxu0 0.0
        %4023 = vmatprep.subr.mxu0 0.0
        %4024 = vmatpush2.msra.mxu0 0.0
        %4025 = vmatprep.subr.mxu0 0.0
        %4026 = vmatpush2.msra.mxu0 0.0
        %4027 = vmatprep.subr.mxu0 0.0
        %4028 = vmatpush2.msra.mxu0 0.0
        %4029 = vmatprep.subr.mxu0 0.0
        %4030 = vmatpush2.msra.mxu0 0.0
        %4031 = vmatprep.subr.mxu0 0.0
        %4032 = vmatpush2.msra.mxu0 0.0
        %4033 = vmatprep.subr.mxu0 0.0
        %4034 = vmatpush2.msra.mxu0 0.0
        %4035 = vmatprep.subr.mxu0 0.0
        %4036 = vmatpush2.msra.mxu0 0.0
        %4037 = vmatprep.subr.mxu0 0.0
        %4038 = vmatpush2.msra.mxu0 0.0
        %4039 = vmatprep.subr.mxu0 0.0
        %4040 = vmatpush2.msra.mxu0 0.0
        %4041 = vmatprep.subr.mxu0 0.0
        %4042 = vmatpush2.msra.mxu0 0.0
        %4043 = vmatprep.subr.mxu0 0.0
        %4044 = vmatpush2.msra.mxu0 0.0
        %4045 = vmatprep.subr.mxu0 0.0
        %4046 = vmatpush2.msra.mxu0 0.0
        %4047 = vmatprep.mubr.f32.mxu0 0.0
        %4048 = vmatmul.mubr.f32.gmra.mxu0 %v3960
        %v4049 = vpop.f32.mrf.mxu0
        %v4050 = vadd.f32 0.0, %v4049
        %v4051 = vpop.f32.mrf.mxu0
        %4052 = vmatprep.mubr.f32.mxu0 0.0
        %4053 = vmatmul.mubr.f32.gmra.mxu0 %v3963
        %v4054 = vpop.f32.mrf.mxu0
        %v4055 = vadd.f32 0.0, %v4054
        %v4056 = vpop.f32.mrf.mxu0
        %4057 = vmatprep.mubr.f32.mxu0 0.0
        %4058 = vmatmul.mubr.f32.gmra.mxu0 %v3966
        %v4059 = vpop.f32.mrf.mxu0
        %v4060 = vadd.f32 0.0, %v4059
        %v4061 = vpop.f32.mrf.mxu0
        %4062 = vmatprep.mubr.f32.mxu0 0.0
        %4063 = vmatmul.mubr.f32.gmra.mxu0 %v3969
        %v4064 = vpop.f32.mrf.mxu0
        %v4065 = vadd.f32 0.0, %v4064
        %v4066 = vpop.f32.mrf.mxu0
        %4067 = vmatprep.mubr.f32.mxu0 0.0
        %4068 = vmatmul.mubr.f32.gmra.mxu0 %v3972
        %v4069 = vpop.f32.mrf.mxu0
        %v4070 = vadd.f32 0.0, %v4069
        %v4071 = vpop.f32.mrf.mxu0
        %4072 = vmatprep.mubr.f32.mxu0 0.0
        %4073 = vmatmul.mubr.f32.gmra.mxu0 %v3975
        %v4074 = vpop.f32.mrf.mxu0
        %v4075 = vadd.f32 0.0, %v4074
        %v4076 = vpop.f32.mrf.mxu0
        %4077 = vmatprep.mubr.f32.mxu0 0.0
        %4078 = vmatmul.mubr.f32.gmra.mxu0 %v3978
        %v4079 = vpop.f32.mrf.mxu0
        %v4080 = vadd.f32 0.0, %v4079
        %v4081 = vpop.f32.mrf.mxu0
        %4082 = vmatprep.mubr.f32.mxu0 0.0
        %4083 = vmatmul.mubr.f32.gmra.mxu0 %v3981
        %v4084 = vpop.f32.mrf.mxu0
        %v4085 = vadd.f32 0.0, %v4084
        %v4086 = vpop.f32.mrf.mxu0
        %4087 = vdwg.mxu0
        %v4088 = vadd.f32 %v3920, %v4050
        %v4089 = vadd.f32 %v3925, %v4055
        %v4090 = vadd.f32 %v3930, %v4060
        %v4091 = vadd.f32 %v3935, %v4065
        %v4092 = vadd.f32 %v3940, %v4070
        %v4093 = vadd.f32 %v3945, %v4075
        %v4094 = vadd.f32 %v3950, %v4080
        %v4095 = vadd.f32 %v3955, %v4085
        %v4096 = vld [vmem:[%s9] sm:$0x1]
        %v4098 = vlaneseq
        %v4099 = vshrl.u32 %v4098, 7
        %v4100 = vsub.s32 0, %v4099
        %v4101 = vrot.slane %v4096, %v4100
        %v4103 = vadd.f32 %v4088, %v4101
        %v4104 = vadd.f32 %v4089, %v4101
        %v4105 = vadd.f32 %v4090, %v4101
        %v4106 = vadd.f32 %v4091, %v4101
        %v4107 = vadd.f32 %v4092, %v4101
        %v4108 = vadd.f32 %v4093, %v4101
        %v4109 = vadd.f32 %v4094, %v4101
        %v4110 = vadd.f32 %v4095, %v4101
        %4111 = vst [vmem:[%s352] sm:$0xff] %v4103
        %4112 = vst [vmem:[%s352 + $0x8] sm:$0xff] %v4104
        %4113 = vst [vmem:[%s352 + $0x10] sm:$0xff] %v4105
        %4114 = vst [vmem:[%s352 + $0x18] sm:$0xff] %v4106
        %4115 = vst [vmem:[%s352 + $0x20] sm:$0xff] %v4107
        %4116 = vst [vmem:[%s352 + $0x28] sm:$0xff] %v4108
        %4117 = vst [vmem:[%s352 + $0x30] sm:$0xff] %v4109
        %4118 = vst [vmem:[%s352 + $0x38] sm:$0xff] %v4110
        %s4119 = sand.u32 %s247, 1
        %s4120 = scalar_lea.sflag [#allocation5], %s4119
        %s4121 = sand.u32 %s247, 1
        %s4122 = smul.addr %s4121, 64
        %s4123 = scalar_lea.vmem [#allocation4], %s4122
        // Predicated region
        $region61: #{tpu_custom_call.1} parent=59 // pred_check
          %p4124 = pneg %p257
        $region62: #{tpu_custom_call.1} parent=59 // pred_check_branch
          %4126 = sbr.rel (%p4124) target = $region64
        $region63: #{tpu_custom_call.1} parent=59 // pred_region
          %s4128 = ssub.s32 1024, 1024
          %4129 = vsyncadd %s4120, %s4128
          %s4130 = smul.addr %s24, 8
          %s4131 = smul.addr %s4130, 128
          %s4132 = scalar_lea.hbm %s10, %s4131
          %s4133 = sshll.u32 %s4123, 4
          %s4134 = int_to_ptr.vmem [resolvable:$true] %s4133
          %4139 = dma.vmem_to_hbm [thread:$0]  %s4134, 1024, %s4132, %s4120, 128, 128, 8
        $region64: #{tpu_custom_call.1} parent=59 // pred_fallthru
          _
      $region60: #{tpu_custom_call.1} parent=5 // pred_fallthru
        _
      %p4140 = scmp.le.s32.totalorder 2, %s19
      // Predicated region
      $region65: #{tpu_custom_call.1} parent=5 // pred_check
        %p4141 = pneg %p4140
      $region66: #{tpu_custom_call.1} parent=5 // pred_check_branch
        %4143 = sbr.rel (%p4141) target = $region68
      $region67: #{tpu_custom_call.1} parent=5 // pred_region
        %s4144 = ssub.s32 %s19, 2
        // Predicated region
        $region69: #{tpu_custom_call.1} parent=67 // pred_check
          %p4145 = pneg %p263
        $region70: #{tpu_custom_call.1} parent=67 // pred_check_branch
          %4147 = sbr.rel (%p4145) target = $region72
        $region71: #{tpu_custom_call.1} parent=67 // pred_region
          %s4148 = sand.u32 %s248, 1
          %s4149 = scalar_lea.sflag [#allocation5], %s4148
          %s4150 = sand.u32 %s248, 1
          %s4151 = smul.addr %s4150, 64
          %s4152 = scalar_lea.vmem [#allocation4], %s4151
          %4153 = dma.done %s4149, 1024
        $region72: #{tpu_custom_call.1} parent=67 // pred_fallthru
          _
      $region68: #{tpu_custom_call.1} parent=5 // pred_fallthru
        _
    $region6: #{tpu_custom_call.1} parent=1 // loop_footer
      %s23 = sadd.s32 1, %s19
    $region7: #{tpu_custom_call.1} parent=1 // loop_footer_branch
      %18 = sbr.rel target = $region3
    $region8: #{tpu_custom_call.1} parent=1 // loop_exit
      _
    %4154 = vsyncpa [#allocation5], 1
    %s4155 = scalar_lea.sflag [#allocation5], 1
    %4156 = vsyncpa %s4155, 1

</llo_original>
